<compile_context>
chip_gen: v6e
topology: v6e:2x2x1
jax: 0.10.0
libtpu: 0.0.40
codegen_flags: <defaults>
</compile_context>

<pallas_src>
import functools

import jax
import jax.numpy as jnp
from jax.experimental import pallas as pl
from jax.experimental.pallas import tpu as pltpu

EPS = 1e-5                       # nn.BatchNorm2d default eps
VMEM_LIMIT = 32 * 1024 * 1024    # safe scoped-VMEM budget on v5e/v6e/v7x


def _round_up(n, m):
    return ((n + m - 1) // m) * m


def _row_pad(M):
    """Row (M) padding rule shared by matmul outputs and residual slabs."""
    TM = 256 if M >= 256 else _round_up(M, 16)
    return _round_up(M, TM), TM


def _col_pad(N):
    """Channel padding rule (lane-dense, multiple of 128)."""
    TN = 256 if N >= 256 else _round_up(N, 128)
    return _round_up(N, TN), TN


def _row_tile(Mp, cap=256):
    if Mp <= cap:
        return Mp
    t = cap
    while Mp % t:
        t -= 8
    return t


# --------------------------- Pallas: tiled matmul ---------------------------

def _mm_kernel(a_ref, w_ref, b_ref, o_ref, acc_ref, *, activation):
    @pl.when(pl.program_id(2) == 0)
    def _():
        acc_ref[...] = jnp.zeros_like(acc_ref)

    acc_ref[...] += jnp.dot(a_ref[...], w_ref[...],
                            preferred_element_type=jnp.float32)

    @pl.when(pl.program_id(2) == pl.num_programs(2) - 1)
    def _():
        y = acc_ref[...] + b_ref[...]
        if activation == "tanh":
            y = jnp.tanh(y)
        o_ref[...] = y


def matmul_bias(a, w, bias, activation="none"):
    """(M,K)@(K,N)+bias on the MXU, tiled & pipelined, bf16 in / f32 accum.

    Returns the zero-padded lane-dense [Mp, Np] f32 slab; caller slices.
    """
    M, K = a.shape
    _, N = w.shape
    Mp, TM = _row_pad(M)
    TK = 512 if K >= 512 else _round_up(K, 128)
    Kp = _round_up(K, TK)
    Np, TN = _col_pad(N)

    a_p = jnp.pad(a, ((0, Mp - M), (0, Kp - K))).astype(jnp.bfloat16)
    w_p = jnp.pad(w, ((0, Kp - K), (0, Np - N))).astype(jnp.bfloat16)
    b_p = jnp.pad(bias.reshape(1, N).astype(jnp.float32), ((0, 0), (0, Np - N)))

    grid = (Mp // TM, Np // TN, Kp // TK)
    return pl.pallas_call(
        functools.partial(_mm_kernel, activation=activation),
        out_shape=jax.ShapeDtypeStruct((Mp, Np), jnp.float32),
        grid=grid,
        in_specs=[pl.BlockSpec((TM, TK), lambda i, j, k: (i, k)),
                  pl.BlockSpec((TK, TN), lambda i, j, k: (k, j)),
                  pl.BlockSpec((1, TN), lambda i, j, k: (0, j))],
        out_specs=pl.BlockSpec((TM, TN), lambda i, j, k: (i, j)),
        scratch_shapes=[pltpu.VMEM((TM, TN), jnp.float32)],
        compiler_params=pltpu.CompilerParams(
            dimension_semantics=("parallel", "parallel", "arbitrary"),
            vmem_limit_bytes=VMEM_LIMIT),
    )(a_p, w_p, b_p)


# ------------------- Pallas: two-pass tiled BatchNorm (+fusions) -------------

def _bn_stats_kernel(x_ref, sum_ref, sq_ref):
    @pl.when(pl.program_id(0) == 0)
    def _():
        sum_ref[...] = jnp.zeros_like(sum_ref)
        sq_ref[...] = jnp.zeros_like(sq_ref)
    x = x_ref[...]
    sum_ref[...] += jnp.sum(x, axis=0, keepdims=True)
    sq_ref[...] += jnp.sum(x * x, axis=0, keepdims=True)


def _bn_apply_kernel(*refs, m_valid, mode):
    if mode == "add":
        x_ref, res_ref, sum_ref, sq_ref, g_ref, b_ref, o_ref = refs
    else:
        x_ref, sum_ref, sq_ref, g_ref, b_ref, o_ref = refs
        res_ref = None
    inv_m = 1.0 / m_valid
    mean = sum_ref[...] * inv_m
    var = sq_ref[...] * inv_m - mean * mean
    scale = g_ref[...] * jax.lax.rsqrt(var + EPS)
    shift = b_ref[...] - mean * scale
    y = x_ref[...] * scale + shift
    if mode == "relu":
        y = jnp.maximum(y, 0.0)
    elif mode == "add":
        y = y + res_ref[...]          # fused residual add of the ResnetBlock
    o_ref[...] = y


def batchnorm_apply(x_slab, gamma, beta, *, m_valid, c_valid, mode="relu",
                    res_slab=None):
    """Training-mode BatchNorm on a padded [Mp, Cp] slab, fused ReLU/residual.

    Padded rows are exactly zero (bias-free convs), so only `m_valid` is used
    as the statistics count; padded channels stay zero end to end.
    """
    Mp, Cp = x_slab.shape
    g = jnp.pad(gamma.reshape(1, -1).astype(jnp.float32),
                ((0, 0), (0, Cp - c_valid)), constant_values=1.0)
    b = jnp.pad(beta.reshape(1, -1).astype(jnp.float32),
                ((0, 0), (0, Cp - c_valid)))
    TM = _row_tile(Mp)
    nM = Mp // TM

    vec_spec = pl.BlockSpec((1, Cp), lambda i: (0, 0))
    row_spec = pl.BlockSpec((TM, Cp), lambda i: (i, 0))

    # pass 1: global per-channel sum / sum-of-squares (accumulator outputs)
    s, q = pl.pallas_call(
        _bn_stats_kernel,
        out_shape=(jax.ShapeDtypeStruct((1, Cp), jnp.float32),
                   jax.ShapeDtypeStruct((1, Cp), jnp.float32)),
        grid=(nM,),
        in_specs=[row_spec],
        out_specs=(vec_spec, vec_spec),
        compiler_params=pltpu.CompilerParams(
            dimension_semantics=("arbitrary",),
            vmem_limit_bytes=VMEM_LIMIT),
    )(x_slab)

    # pass 2: normalize + fused ReLU / residual add, tiled over M
    if mode == "add":
        args = (x_slab, res_slab, s, q, g, b)
        in_specs = [row_spec, row_spec, vec_spec, vec_spec, vec_spec, vec_spec]
    else:
        args = (x_slab, s, q, g, b)
        in_specs = [row_spec, vec_spec, vec_spec, vec_spec, vec_spec]

    return pl.pallas_call(
        functools.partial(_bn_apply_kernel, m_valid=float(m_valid), mode=mode),
        out_shape=jax.ShapeDtypeStruct((Mp, Cp), jnp.float32),
        grid=(nM,),
        in_specs=in_specs,
        out_specs=row_spec,
        compiler_params=pltpu.CompilerParams(
            dimension_semantics=("parallel",),
            vmem_limit_bytes=VMEM_LIMIT),
    )(*args)


# ------------------------------ JAX glue ------------------------------------

def _extract_patches(x, kh, kw, stride):
    """x: NHWC (already padded) -> im2col patches [N*Ho*Wo, kh*kw*C]."""
    N, H, W, C = x.shape
    Ho = (H - kh) // stride + 1
    Wo = (W - kw) // stride + 1
    cols = []
    for i in range(kh):
        for j in range(kw):
            cols.append(x[:, i:i + stride * Ho:stride, j:j + stride * Wo:stride, :])
    patches = jnp.concatenate(cols, axis=-1)            # order (ki, kj, cin)
    return patches.reshape(N * Ho * Wo, kh * kw * C), (N, Ho, Wo)


def conv2d(x, w, bias, stride=1, pad=0, pad_mode="constant", activation="none"):
    """x NHWC (real channels), w (cout,cin,kh,kw) PyTorch layout.  Returns the
    padded lane-dense [Mp, Cp] slab plus (N,Ho,Wo,Cout)."""
    cout, cin, kh, kw = w.shape
    if pad > 0:
        x = jnp.pad(x, ((0, 0), (pad, pad), (pad, pad), (0, 0)), mode=pad_mode)
    patches, (N, Ho, Wo) = _extract_patches(x, kh, kw, stride)
    wm = jnp.transpose(w, (2, 3, 1, 0)).reshape(kh * kw * cin, cout)
    y = matmul_bias(patches, wm, bias, activation=activation)
    return y, (N, Ho, Wo, cout)


def conv_transpose2d(x, w_t, bias, stride=2, pad=1, out_pad=1):
    """Sub-pixel / col2im formulation: dense matmul over input pixels (no
    zero-dilation), then overlap-add of the kh*kw tap planes (JAX glue)."""
    cin, cout, kh, kw = w_t.shape
    N, H, W, _ = x.shape
    Ho = (H - 1) * stride - 2 * pad + kh + out_pad
    Wo = (W - 1) * stride - 2 * pad + kw + out_pad

    a = x.reshape(N * H * W, cin).astype(jnp.float32)
    wm = jnp.transpose(w_t, (0, 2, 3, 1)).reshape(cin, kh * kw * cout)
    y = matmul_bias(a, wm, jnp.zeros((kh * kw * cout,), jnp.float32))
    y = y[:N * H * W, :kh * kw * cout].reshape(N, H, W, kh, kw, cout)

    CH = (H - 1) * stride + kh
    CW = (W - 1) * stride + kw
    canvas = jnp.zeros((N, CH, CW, cout), jnp.float32)
    for ky in range(kh):
        for kx in range(kw):
            canvas = canvas.at[:, ky:ky + stride * H:stride,
                               kx:kx + stride * W:stride, :].add(y[:, :, :, ky, kx, :])
    out = canvas[:, pad:pad + Ho, pad:pad + Wo, :] + bias.reshape(1, 1, 1, cout)
    return out, (N, Ho, Wo, cout)


def _slab_to_nhwc(y_slab, meta):
    N, H, W, C = meta
    return y_slab[:N * H * W, :C].reshape(N, H, W, C)


def _nhwc_to_slab(x):
    N, H, W, C = x.shape
    M = N * H * W
    Mp, _ = _row_pad(M)
    Cp, _ = _col_pad(C)
    x2 = x.reshape(M, C).astype(jnp.float32)
    return jnp.pad(x2, ((0, Mp - M), (0, Cp - C)))


# ------------------------------ parameters ----------------------------------

def init_params(key, input_nc, output_nc, ngf, n_blocks):
    keys = iter(jax.random.split(key, 16 + 2 * n_blocks))

    def conv_w(cout, cin, k):
        return 0.02 * jax.random.normal(next(keys), (cout, cin, k, k), jnp.float32)

    def convT_w(cin, cout, k):  # ConvTranspose2d weight layout
        return 0.02 * jax.random.normal(next(keys), (cin, cout, k, k), jnp.float32)

    def bn_p(c):
        return (jnp.ones((c,), jnp.float32), jnp.zeros((c,), jnp.float32))

    # norm_layer == BatchNorm2d  =>  use_bias=False for all inner convs
    p = {}
    p["c1_w"] = conv_w(ngf, input_nc, 7);       p["c1_bn"] = bn_p(ngf)
    p["d1_w"] = conv_w(ngf * 2, ngf, 3);        p["d1_bn"] = bn_p(ngf * 2)
    p["d2_w"] = conv_w(ngf * 4, ngf * 2, 3);    p["d2_bn"] = bn_p(ngf * 4)
    p["blocks"] = []
    for _ in range(n_blocks):
        p["blocks"].append({
            "w1": conv_w(ngf * 4, ngf * 4, 3), "bn1": bn_p(ngf * 4),
            "w2": conv_w(ngf * 4, ngf * 4, 3), "bn2": bn_p(ngf * 4),
        })
    p["u1_w"] = convT_w(ngf * 4, ngf * 2, 3);   p["u1_bn"] = bn_p(ngf * 2)
    p["u2_w"] = convT_w(ngf * 2, ngf, 3);       p["u2_bn"] = bn_p(ngf)
    p["out_w"] = conv_w(output_nc, ngf, 7)      # final conv has bias=True
    p["out_b"] = 0.02 * jax.random.normal(next(keys), (output_nc,), jnp.float32)
    return p


# ------------------------------ forward -------------------------------------

def resnet_generator_forward(params, x_nchw, ngf, n_blocks):
    x = jnp.transpose(x_nchw, (0, 2, 3, 1)).astype(jnp.float32)   # NCHW -> NHWC
    zero = lambda c: jnp.zeros((c,), jnp.float32)

    # stem: ReflectionPad2d(3) + Conv7 (no bias) + BN + ReLU
    y, meta = conv2d(x, params["c1_w"], zero(ngf), 1, 3, "reflect")
    N, H, W, C = meta
    y = batchnorm_apply(y, *params["c1_bn"], m_valid=N * H * W, c_valid=C, mode="relu")
    x = _slab_to_nhwc(y, meta)

    # 2x downsampling: Conv3 s2 p1 (zero pad) + BN + ReLU
    for name, c in (("d1", ngf * 2), ("d2", ngf * 4)):
        y, meta = conv2d(x, params[name + "_w"], zero(c), 2, 1, "constant")
        N, H, W, C = meta
        y = batchnorm_apply(y, *params[name + "_bn"], m_valid=N * H * W,
                            c_valid=C, mode="relu")
        x = _slab_to_nhwc(y, meta)

    # Resnet blocks (padding_type='reflect', use_dropout=False)
    for blk in params["blocks"]:
        res_slab = _nhwc_to_slab(x)          # same (Mp, Cp) padding as the conv slab
        y, meta = conv2d(x, blk["w1"], zero(C), 1, 1, "reflect")
        y = batchnorm_apply(y, *blk["bn1"], m_valid=N * H * W, c_valid=C, mode="relu")
        x1 = _slab_to_nhwc(y, meta)
        y, meta = conv2d(x1, blk["w2"], zero(C), 1, 1, "reflect")
        y = batchnorm_apply(y, *blk["bn2"], m_valid=N * H * W, c_valid=C,
                            mode="add", res_slab=res_slab)
        x = _slab_to_nhwc(y, meta)

    # 2x upsampling: ConvTranspose3 s2 p1 op1 (no bias) + BN + ReLU
    for name, c in (("u1", ngf * 2), ("u2", ngf)):
        xt, meta = conv_transpose2d(x, params[name + "_w"], zero(c))
        N, H, W, C = meta
        y = batchnorm_apply(_nhwc_to_slab(xt), *params[name + "_bn"],
                            m_valid=N * H * W, c_valid=C, mode="relu")
        x = _slab_to_nhwc(y, meta)

    # head: ReflectionPad2d(3) + Conv7 (with bias) + Tanh (fused in epilogue)
    y, meta = conv2d(x, params["out_w"], params["out_b"], 1, 3, "reflect",
                     activation="tanh")
    out = _slab_to_nhwc(y, meta)
    return jnp.transpose(out, (0, 3, 1, 2))                       # NHWC -> NCHW


# TODO(synk): BatchNorm models training-mode batch statistics (fresh
# nn.BatchNorm2d in .train()); running-stat eval mode is not modeled.

if __name__ == "__main__":
    input_nc, output_nc, ngf, n_blocks = 3, 3, 8, 2
    key = jax.random.PRNGKey(0)
    pkey, xkey = jax.random.split(key)
    params = init_params(pkey, input_nc, output_nc, ngf, n_blocks)
    x = jax.random.normal(xkey, (2, input_nc, 16, 16), jnp.float32)

    fwd = jax.jit(lambda p, inp: resnet_generator_forward(p, inp, ngf, n_blocks))
    out = fwd(params, x)
    jax.block_until_ready(out)
    assert out.shape == (2, output_nc, 16, 16), out.shape
    assert bool(jnp.all(jnp.isfinite(out)))
    assert bool(jnp.all(jnp.abs(out) <= 1.0 + 1e-6))   # tanh range
    print("KERNEL_OK")
</pallas_src>

<mosaic_0001>
module attributes {stable_mosaic.version = 11 : i64} {
  func.func @_mm_kernel(%arg0: i32, %arg1: i32, %arg2: i32, %arg3: memref<256x256xbf16, #tpu.memory_space<vmem>>, %arg4: memref<256x128xbf16, #tpu.memory_space<vmem>>, %arg5: memref<1x128xf32, #tpu.memory_space<vmem>>, %arg6: memref<256x128xf32, #tpu.memory_space<vmem>>, %arg7: memref<256x128xf32, #tpu.memory_space<vmem>>) attributes {dimension_semantics = [#tpu.dimension_semantics<parallel>, #tpu.dimension_semantics<parallel>, #tpu.dimension_semantics<arbitrary>], iteration_bounds = array<i64: 2, 1, 1>, scalar_prefetch = 0 : i64, scratch_operands = 1 : i64, tpu.core_type = #tpu.core_type<tc>, window_params = [{transform_indices = @transform_0, window_bounds = array<i64: 256, 256>}, {transform_indices = @transform_1, window_bounds = array<i64: 256, 128>}, {transform_indices = @transform_2, window_bounds = array<i64: 1, 128>}, {transform_indices = @transform_3, window_bounds = array<i64: 256, 128>}]} {
    %c0_i32 = arith.constant 0 : i32
    %0 = arith.cmpi eq, %arg2, %c0_i32 : i32
    %1 = arith.extui %0 : i1 to i32
    %c0_i32_0 = arith.constant 0 : i32
    %2 = arith.cmpi ne, %1, %c0_i32_0 : i32
    scf.if %2 {
      %cst_10 = arith.constant 0.000000e+00 : f32
      %12 = vector.broadcast %cst_10 : f32 to vector<256x128xf32>
      %c0_11 = arith.constant 0 : index
      %c0_12 = arith.constant 0 : index
      %13 = vector.load %arg7[%c0_11, %c0_12] : memref<256x128xf32, #tpu.memory_space<vmem>>, vector<256x128xf32>
      tpu.vector_store %arg7[%c0_11, %c0_12], %12 {strides = array<i32>} : memref<256x128xf32, #tpu.memory_space<vmem>>, vector<256x128xf32>,
    } else {
    }
    %c0 = arith.constant 0 : index
    %c0_1 = arith.constant 0 : index
    %3 = vector.load %arg7[%c0, %c0_1] : memref<256x128xf32, #tpu.memory_space<vmem>>, vector<256x128xf32>
    %c0_2 = arith.constant 0 : index
    %c0_3 = arith.constant 0 : index
    %4 = vector.load %arg3[%c0_2, %c0_3] : memref<256x256xbf16, #tpu.memory_space<vmem>>, vector<256x256xbf16>
    %c0_4 = arith.constant 0 : index
    %c0_5 = arith.constant 0 : index
    %5 = vector.load %arg4[%c0_4, %c0_5] : memref<256x128xbf16, #tpu.memory_space<vmem>>, vector<256x128xbf16>
    %cst = arith.constant dense<0.000000e+00> : vector<256x128xf32>
    %6 = tpu.matmul %4, %5, %cst {dimension_numbers = #tpu.dot_dimension_numbers<[1], [0], [0], [1], [0, 0, 1, 1], [], []>} : vector<256x256xbf16>, vector<256x128xbf16>, vector<256x128xf32> -> vector<256x128xf32>
    %7 = arith.addf %3, %6 : vector<256x128xf32>
    %c0_6 = arith.constant 0 : index
    %c0_7 = arith.constant 0 : index
    %8 = vector.load %arg7[%c0_6, %c0_7] : memref<256x128xf32, #tpu.memory_space<vmem>>, vector<256x128xf32>
    tpu.vector_store %arg7[%c0_6, %c0_7], %7 {strides = array<i32>} : memref<256x128xf32, #tpu.memory_space<vmem>>, vector<256x128xf32>,
    %c0_i32_8 = arith.constant 0 : i32
    %9 = arith.cmpi eq, %arg2, %c0_i32_8 : i32
    %10 = arith.extui %9 : i1 to i32
    %c0_i32_9 = arith.constant 0 : i32
    %11 = arith.cmpi ne, %10, %c0_i32_9 : i32
    scf.if %11 {
      %c0_10 = arith.constant 0 : index
      %c0_11 = arith.constant 0 : index
      %12 = vector.load %arg7[%c0_10, %c0_11] : memref<256x128xf32, #tpu.memory_space<vmem>>, vector<256x128xf32>
      %c0_12 = arith.constant 0 : index
      %c0_13 = arith.constant 0 : index
      %13 = vector.load %arg5[%c0_12, %c0_13] : memref<1x128xf32, #tpu.memory_space<vmem>>, vector<1x128xf32>
      %14 = vector.broadcast %13 : vector<1x128xf32> to vector<256x128xf32>
      %15 = arith.addf %12, %14 : vector<256x128xf32>
      %c0_14 = arith.constant 0 : index
      %c0_15 = arith.constant 0 : index
      %16 = vector.load %arg6[%c0_14, %c0_15] : memref<256x128xf32, #tpu.memory_space<vmem>>, vector<256x128xf32>
      tpu.vector_store %arg6[%c0_14, %c0_15], %15 {strides = array<i32>} : memref<256x128xf32, #tpu.memory_space<vmem>>, vector<256x128xf32>,
    } else {
    }
    return
  }
  func.func @transform_0(%arg0: i32, %arg1: i32, %arg2: i32) -> (i32, i32) {
    %c0_i32 = arith.constant 0 : i32
    return %arg0, %arg2 : i32, i32
  }
  func.func @transform_1(%arg0: i32, %arg1: i32, %arg2: i32) -> (i32, i32) {
    %c0_i32 = arith.constant 0 : i32
    return %arg2, %arg1 : i32, i32
  }
  func.func @transform_2(%arg0: i32, %arg1: i32, %arg2: i32) -> (i32, i32) {
    %c0_i32 = arith.constant 0 : i32
    %c0_i32_0 = arith.constant 0 : i32
    return %c0_i32, %arg1 : i32, i32
  }
  func.func @transform_3(%arg0: i32, %arg1: i32, %arg2: i32) -> (i32, i32) {
    %c0_i32 = arith.constant 0 : i32
    return %arg0, %arg1 : i32, i32
  }
}

module attributes {stable_mosaic.version = 11 : i64} {
  func.func @_bn_stats_kernel(%arg0: i32, %arg1: memref<256x128xf32, #tpu.memory_space<vmem>>, %arg2: memref<1x128xf32, #tpu.memory_space<vmem>>, %arg3: memref<1x128xf32, #tpu.memory_space<vmem>>) attributes {dimension_semantics = [#tpu.dimension_semantics<arbitrary>], iteration_bounds = array<i64: 2>, scalar_prefetch = 0 : i64, scratch_operands = 0 : i64, tpu.core_type = #tpu.core_type<tc>, window_params = [{transform_indices = @transform_0, window_bounds = array<i64: 256, 128>}, {pipeline_mode = #tpu.pipeline_mode<synchronous>, transform_indices = @transform_1, window_bounds = array<i64: 1, 128>}, {pipeline_mode = #tpu.pipeline_mode<synchronous>, transform_indices = @transform_2, window_bounds = array<i64: 1, 128>}]} {
    %c0_i32 = arith.constant 0 : i32
    %0 = arith.cmpi eq, %arg0, %c0_i32 : i32
    %1 = arith.extui %0 : i1 to i32
    %c0_i32_0 = arith.constant 0 : i32
    %2 = arith.cmpi ne, %1, %c0_i32_0 : i32
    scf.if %2 {
      %cst_11 = arith.constant 0.000000e+00 : f32
      %15 = vector.broadcast %cst_11 : f32 to vector<1x128xf32>
      %c0_12 = arith.constant 0 : index
      %c0_13 = arith.constant 0 : index
      %16 = vector.load %arg2[%c0_12, %c0_13] : memref<1x128xf32, #tpu.memory_space<vmem>>, vector<1x128xf32>
      tpu.vector_store %arg2[%c0_12, %c0_13], %15 {strides = array<i32>} : memref<1x128xf32, #tpu.memory_space<vmem>>, vector<1x128xf32>,
      %cst_14 = arith.constant 0.000000e+00 : f32
      %17 = vector.broadcast %cst_14 : f32 to vector<1x128xf32>
      %c0_15 = arith.constant 0 : index
      %c0_16 = arith.constant 0 : index
      %18 = vector.load %arg3[%c0_15, %c0_16] : memref<1x128xf32, #tpu.memory_space<vmem>>, vector<1x128xf32>
      tpu.vector_store %arg3[%c0_15, %c0_16], %17 {strides = array<i32>} : memref<1x128xf32, #tpu.memory_space<vmem>>, vector<1x128xf32>,
    } else {
    }
    %c0 = arith.constant 0 : index
    %c0_1 = arith.constant 0 : index
    %3 = vector.load %arg1[%c0, %c0_1] : memref<256x128xf32, #tpu.memory_space<vmem>>, vector<256x128xf32>
    %c0_2 = arith.constant 0 : index
    %c0_3 = arith.constant 0 : index
    %4 = vector.load %arg2[%c0_2, %c0_3] : memref<1x128xf32, #tpu.memory_space<vmem>>, vector<1x128xf32>
    %cst = arith.constant dense<0.000000e+00> : vector<128xf32>
    %5 = vector.multi_reduction <add>, %3, %cst [0] : vector<256x128xf32> to vector<128xf32>
    %6 = vector.shape_cast %5 : vector<128xf32> to vector<1x128xf32>
    %7 = arith.addf %4, %6 : vector<1x128xf32>
    %c0_4 = arith.constant 0 : index
    %c0_5 = arith.constant 0 : index
    %8 = vector.load %arg2[%c0_4, %c0_5] : memref<1x128xf32, #tpu.memory_space<vmem>>, vector<1x128xf32>
    tpu.vector_store %arg2[%c0_4, %c0_5], %7 {strides = array<i32>} : memref<1x128xf32, #tpu.memory_space<vmem>>, vector<1x128xf32>,
    %c0_6 = arith.constant 0 : index
    %c0_7 = arith.constant 0 : index
    %9 = vector.load %arg3[%c0_6, %c0_7] : memref<1x128xf32, #tpu.memory_space<vmem>>, vector<1x128xf32>
    %10 = arith.mulf %3, %3 : vector<256x128xf32>
    %cst_8 = arith.constant dense<0.000000e+00> : vector<128xf32>
    %11 = vector.multi_reduction <add>, %10, %cst_8 [0] : vector<256x128xf32> to vector<128xf32>
    %12 = vector.shape_cast %11 : vector<128xf32> to vector<1x128xf32>
    %13 = arith.addf %9, %12 : vector<1x128xf32>
    %c0_9 = arith.constant 0 : index
    %c0_10 = arith.constant 0 : index
    %14 = vector.load %arg3[%c0_9, %c0_10] : memref<1x128xf32, #tpu.memory_space<vmem>>, vector<1x128xf32>
    tpu.vector_store %arg3[%c0_9, %c0_10], %13 {strides = array<i32>} : memref<1x128xf32, #tpu.memory_space<vmem>>, vector<1x128xf32>,
    return
  }
  func.func @transform_0(%arg0: i32) -> (i32, i32) {
    %c0_i32 = arith.constant 0 : i32
    %c0_i32_0 = arith.constant 0 : i32
    return %arg0, %c0_i32 : i32, i32
  }
  func.func @transform_1(%arg0: i32) -> (i32, i32) {
    %c0_i32 = arith.constant 0 : i32
    %c0_i32_0 = arith.constant 0 : i32
    %c0_i32_1 = arith.constant 0 : i32
    return %c0_i32, %c0_i32_0 : i32, i32
  }
  func.func @transform_2(%arg0: i32) -> (i32, i32) {
    %c0_i32 = arith.constant 0 : i32
    %c0_i32_0 = arith.constant 0 : i32
    %c0_i32_1 = arith.constant 0 : i32
    return %c0_i32, %c0_i32_0 : i32, i32
  }
}

module attributes {stable_mosaic.version = 11 : i64} {
  func.func @_bn_apply_kernel(%arg0: i32, %arg1: memref<256x128xf32, #tpu.memory_space<vmem>>, %arg2: memref<1x128xf32, #tpu.memory_space<vmem>>, %arg3: memref<1x128xf32, #tpu.memory_space<vmem>>, %arg4: memref<1x128xf32, #tpu.memory_space<vmem>>, %arg5: memref<1x128xf32, #tpu.memory_space<vmem>>, %arg6: memref<256x128xf32, #tpu.memory_space<vmem>>) attributes {dimension_semantics = [#tpu.dimension_semantics<parallel>], iteration_bounds = array<i64: 2>, scalar_prefetch = 0 : i64, scratch_operands = 0 : i64, tpu.core_type = #tpu.core_type<tc>, window_params = [{transform_indices = @transform_0, window_bounds = array<i64: 256, 128>}, {pipeline_mode = #tpu.pipeline_mode<synchronous>, transform_indices = @transform_1, window_bounds = array<i64: 1, 128>}, {pipeline_mode = #tpu.pipeline_mode<synchronous>, transform_indices = @transform_2, window_bounds = array<i64: 1, 128>}, {pipeline_mode = #tpu.pipeline_mode<synchronous>, transform_indices = @transform_3, window_bounds = array<i64: 1, 128>}, {pipeline_mode = #tpu.pipeline_mode<synchronous>, transform_indices = @transform_4, window_bounds = array<i64: 1, 128>}, {transform_indices = @transform_5, window_bounds = array<i64: 256, 128>}]} {
    %c0 = arith.constant 0 : index
    %c0_0 = arith.constant 0 : index
    %0 = vector.load %arg2[%c0, %c0_0] : memref<1x128xf32, #tpu.memory_space<vmem>>, vector<1x128xf32>
    %cst = arith.constant 0.001953125 : f32
    %1 = vector.broadcast %cst : f32 to vector<1x128xf32>
    %2 = arith.mulf %0, %1 : vector<1x128xf32>
    %c0_1 = arith.constant 0 : index
    %c0_2 = arith.constant 0 : index
    %3 = vector.load %arg3[%c0_1, %c0_2] : memref<1x128xf32, #tpu.memory_space<vmem>>, vector<1x128xf32>
    %cst_3 = arith.constant 0.001953125 : f32
    %4 = vector.broadcast %cst_3 : f32 to vector<1x128xf32>
    %5 = arith.mulf %3, %4 : vector<1x128xf32>
    %6 = arith.mulf %2, %2 : vector<1x128xf32>
    %7 = arith.subf %5, %6 : vector<1x128xf32>
    %c0_4 = arith.constant 0 : index
    %c0_5 = arith.constant 0 : index
    %8 = vector.load %arg4[%c0_4, %c0_5] : memref<1x128xf32, #tpu.memory_space<vmem>>, vector<1x128xf32>
    %cst_6 = arith.constant 9.99999974E-6 : f32
    %9 = vector.broadcast %cst_6 : f32 to vector<1x128xf32>
    %10 = arith.addf %7, %9 : vector<1x128xf32>
    %11 = math.rsqrt %10 : vector<1x128xf32>
    %12 = arith.mulf %8, %11 : vector<1x128xf32>
    %c0_7 = arith.constant 0 : index
    %c0_8 = arith.constant 0 : index
    %13 = vector.load %arg5[%c0_7, %c0_8] : memref<1x128xf32, #tpu.memory_space<vmem>>, vector<1x128xf32>
    %14 = arith.mulf %2, %12 : vector<1x128xf32>
    %15 = arith.subf %13, %14 : vector<1x128xf32>
    %c0_9 = arith.constant 0 : index
    %c0_10 = arith.constant 0 : index
    %16 = vector.load %arg1[%c0_9, %c0_10] : memref<256x128xf32, #tpu.memory_space<vmem>>, vector<256x128xf32>
    %17 = vector.broadcast %12 : vector<1x128xf32> to vector<256x128xf32>
    %18 = arith.mulf %16, %17 : vector<256x128xf32>
    %19 = vector.broadcast %15 : vector<1x128xf32> to vector<256x128xf32>
    %20 = arith.addf %18, %19 : vector<256x128xf32>
    %cst_11 = arith.constant 0.000000e+00 : f32
    %21 = vector.broadcast %cst_11 : f32 to vector<256x128xf32>
    %22 = arith.maximumf %20, %21 : vector<256x128xf32>
    %c0_12 = arith.constant 0 : index
    %c0_13 = arith.constant 0 : index
    %23 = vector.load %arg6[%c0_12, %c0_13] : memref<256x128xf32, #tpu.memory_space<vmem>>, vector<256x128xf32>
    tpu.vector_store %arg6[%c0_12, %c0_13], %22 {strides = array<i32>} : memref<256x128xf32, #tpu.memory_space<vmem>>, vector<256x128xf32>,
    return
  }
  func.func @transform_0(%arg0: i32) -> (i32, i32) {
    %c0_i32 = arith.constant 0 : i32
    %c0_i32_0 = arith.constant 0 : i32
    return %arg0, %c0_i32 : i32, i32
  }
  func.func @transform_1(%arg0: i32) -> (i32, i32) {
    %c0_i32 = arith.constant 0 : i32
    %c0_i32_0 = arith.constant 0 : i32
    %c0_i32_1 = arith.constant 0 : i32
    return %c0_i32, %c0_i32_0 : i32, i32
  }
  func.func @transform_2(%arg0: i32) -> (i32, i32) {
    %c0_i32 = arith.constant 0 : i32
    %c0_i32_0 = arith.constant 0 : i32
    %c0_i32_1 = arith.constant 0 : i32
    return %c0_i32, %c0_i32_0 : i32, i32
  }
  func.func @transform_3(%arg0: i32) -> (i32, i32) {
    %c0_i32 = arith.constant 0 : i32
    %c0_i32_0 = arith.constant 0 : i32
    %c0_i32_1 = arith.constant 0 : i32
    return %c0_i32, %c0_i32_0 : i32, i32
  }
  func.func @transform_4(%arg0: i32) -> (i32, i32) {
    %c0_i32 = arith.constant 0 : i32
    %c0_i32_0 = arith.constant 0 : i32
    %c0_i32_1 = arith.constant 0 : i32
    return %c0_i32, %c0_i32_0 : i32, i32
  }
  func.func @transform_5(%arg0: i32) -> (i32, i32) {
    %c0_i32 = arith.constant 0 : i32
    %c0_i32_0 = arith.constant 0 : i32
    return %arg0, %c0_i32 : i32, i32
  }
}

module attributes {stable_mosaic.version = 11 : i64} {
  func.func @_mm_kernel(%arg0: i32, %arg1: i32, %arg2: i32, %arg3: memref<128x128xbf16, #tpu.memory_space<vmem>>, %arg4: memref<128x128xbf16, #tpu.memory_space<vmem>>, %arg5: memref<1x128xf32, #tpu.memory_space<vmem>>, %arg6: memref<128x128xf32, #tpu.memory_space<vmem>>, %arg7: memref<128x128xf32, #tpu.memory_space<vmem>>) attributes {dimension_semantics = [#tpu.dimension_semantics<parallel>, #tpu.dimension_semantics<parallel>, #tpu.dimension_semantics<arbitrary>], iteration_bounds = array<i64: 1, 1, 1>, scalar_prefetch = 0 : i64, scratch_operands = 1 : i64, tpu.core_type = #tpu.core_type<tc>, window_params = [{transform_indices = @transform_0, window_bounds = array<i64: 128, 128>}, {transform_indices = @transform_1, window_bounds = array<i64: 128, 128>}, {transform_indices = @transform_2, window_bounds = array<i64: 1, 128>}, {transform_indices = @transform_3, window_bounds = array<i64: 128, 128>}]} {
    %c0_i32 = arith.constant 0 : i32
    %0 = arith.cmpi eq, %arg2, %c0_i32 : i32
    %1 = arith.extui %0 : i1 to i32
    %c0_i32_0 = arith.constant 0 : i32
    %2 = arith.cmpi ne, %1, %c0_i32_0 : i32
    scf.if %2 {
      %cst_10 = arith.constant 0.000000e+00 : f32
      %12 = vector.broadcast %cst_10 : f32 to vector<128x128xf32>
      %c0_11 = arith.constant 0 : index
      %c0_12 = arith.constant 0 : index
      %13 = vector.load %arg7[%c0_11, %c0_12] : memref<128x128xf32, #tpu.memory_space<vmem>>, vector<128x128xf32>
      tpu.vector_store %arg7[%c0_11, %c0_12], %12 {strides = array<i32>} : memref<128x128xf32, #tpu.memory_space<vmem>>, vector<128x128xf32>,
    } else {
    }
    %c0 = arith.constant 0 : index
    %c0_1 = arith.constant 0 : index
    %3 = vector.load %arg7[%c0, %c0_1] : memref<128x128xf32, #tpu.memory_space<vmem>>, vector<128x128xf32>
    %c0_2 = arith.constant 0 : index
    %c0_3 = arith.constant 0 : index
    %4 = vector.load %arg3[%c0_2, %c0_3] : memref<128x128xbf16, #tpu.memory_space<vmem>>, vector<128x128xbf16>
    %c0_4 = arith.constant 0 : index
    %c0_5 = arith.constant 0 : index
    %5 = vector.load %arg4[%c0_4, %c0_5] : memref<128x128xbf16, #tpu.memory_space<vmem>>, vector<128x128xbf16>
    %cst = arith.constant dense<0.000000e+00> : vector<128x128xf32>
    %6 = tpu.matmul %4, %5, %cst {dimension_numbers = #tpu.dot_dimension_numbers<[1], [0], [0], [1], [0, 0, 1, 1], [], []>} : vector<128x128xbf16>, vector<128x128xbf16>, vector<128x128xf32> -> vector<128x128xf32>
    %7 = arith.addf %3, %6 : vector<128x128xf32>
    %c0_6 = arith.constant 0 : index
    %c0_7 = arith.constant 0 : index
    %8 = vector.load %arg7[%c0_6, %c0_7] : memref<128x128xf32, #tpu.memory_space<vmem>>, vector<128x128xf32>
    tpu.vector_store %arg7[%c0_6, %c0_7], %7 {strides = array<i32>} : memref<128x128xf32, #tpu.memory_space<vmem>>, vector<128x128xf32>,
    %c0_i32_8 = arith.constant 0 : i32
    %9 = arith.cmpi eq, %arg2, %c0_i32_8 : i32
    %10 = arith.extui %9 : i1 to i32
    %c0_i32_9 = arith.constant 0 : i32
    %11 = arith.cmpi ne, %10, %c0_i32_9 : i32
    scf.if %11 {
      %c0_10 = arith.constant 0 : index
      %c0_11 = arith.constant 0 : index
      %12 = vector.load %arg7[%c0_10, %c0_11] : memref<128x128xf32, #tpu.memory_space<vmem>>, vector<128x128xf32>
      %c0_12 = arith.constant 0 : index
      %c0_13 = arith.constant 0 : index
      %13 = vector.load %arg5[%c0_12, %c0_13] : memref<1x128xf32, #tpu.memory_space<vmem>>, vector<1x128xf32>
      %14 = vector.broadcast %13 : vector<1x128xf32> to vector<128x128xf32>
      %15 = arith.addf %12, %14 : vector<128x128xf32>
      %c0_14 = arith.constant 0 : index
      %c0_15 = arith.constant 0 : index
      %16 = vector.load %arg6[%c0_14, %c0_15] : memref<128x128xf32, #tpu.memory_space<vmem>>, vector<128x128xf32>
      tpu.vector_store %arg6[%c0_14, %c0_15], %15 {strides = array<i32>} : memref<128x128xf32, #tpu.memory_space<vmem>>, vector<128x128xf32>,
    } else {
    }
    return
  }
  func.func @transform_0(%arg0: i32, %arg1: i32, %arg2: i32) -> (i32, i32) {
    %c0_i32 = arith.constant 0 : i32
    return %arg0, %arg2 : i32, i32
  }
  func.func @transform_1(%arg0: i32, %arg1: i32, %arg2: i32) -> (i32, i32) {
    %c0_i32 = arith.constant 0 : i32
    return %arg2, %arg1 : i32, i32
  }
  func.func @transform_2(%arg0: i32, %arg1: i32, %arg2: i32) -> (i32, i32) {
    %c0_i32 = arith.constant 0 : i32
    %c0_i32_0 = arith.constant 0 : i32
    return %c0_i32, %arg1 : i32, i32
  }
  func.func @transform_3(%arg0: i32, %arg1: i32, %arg2: i32) -> (i32, i32) {
    %c0_i32 = arith.constant 0 : i32
    return %arg0, %arg1 : i32, i32
  }
}

module attributes {stable_mosaic.version = 11 : i64} {
  func.func @_bn_stats_kernel(%arg0: i32, %arg1: memref<128x128xf32, #tpu.memory_space<vmem>>, %arg2: memref<1x128xf32, #tpu.memory_space<vmem>>, %arg3: memref<1x128xf32, #tpu.memory_space<vmem>>) attributes {dimension_semantics = [#tpu.dimension_semantics<arbitrary>], iteration_bounds = array<i64: 1>, scalar_prefetch = 0 : i64, scratch_operands = 0 : i64, tpu.core_type = #tpu.core_type<tc>, window_params = [{transform_indices = @transform_0, window_bounds = array<i64: 128, 128>}, {pipeline_mode = #tpu.pipeline_mode<synchronous>, transform_indices = @transform_1, window_bounds = array<i64: 1, 128>}, {pipeline_mode = #tpu.pipeline_mode<synchronous>, transform_indices = @transform_2, window_bounds = array<i64: 1, 128>}]} {
    %c0_i32 = arith.constant 0 : i32
    %0 = arith.cmpi eq, %arg0, %c0_i32 : i32
    %1 = arith.extui %0 : i1 to i32
    %c0_i32_0 = arith.constant 0 : i32
    %2 = arith.cmpi ne, %1, %c0_i32_0 : i32
    scf.if %2 {
      %cst_11 = arith.constant 0.000000e+00 : f32
      %15 = vector.broadcast %cst_11 : f32 to vector<1x128xf32>
      %c0_12 = arith.constant 0 : index
      %c0_13 = arith.constant 0 : index
      %16 = vector.load %arg2[%c0_12, %c0_13] : memref<1x128xf32, #tpu.memory_space<vmem>>, vector<1x128xf32>
      tpu.vector_store %arg2[%c0_12, %c0_13], %15 {strides = array<i32>} : memref<1x128xf32, #tpu.memory_space<vmem>>, vector<1x128xf32>,
      %cst_14 = arith.constant 0.000000e+00 : f32
      %17 = vector.broadcast %cst_14 : f32 to vector<1x128xf32>
      %c0_15 = arith.constant 0 : index
      %c0_16 = arith.constant 0 : index
      %18 = vector.load %arg3[%c0_15, %c0_16] : memref<1x128xf32, #tpu.memory_space<vmem>>, vector<1x128xf32>
      tpu.vector_store %arg3[%c0_15, %c0_16], %17 {strides = array<i32>} : memref<1x128xf32, #tpu.memory_space<vmem>>, vector<1x128xf32>,
    } else {
    }
    %c0 = arith.constant 0 : index
    %c0_1 = arith.constant 0 : index
    %3 = vector.load %arg1[%c0, %c0_1] : memref<128x128xf32, #tpu.memory_space<vmem>>, vector<128x128xf32>
    %c0_2 = arith.constant 0 : index
    %c0_3 = arith.constant 0 : index
    %4 = vector.load %arg2[%c0_2, %c0_3] : memref<1x128xf32, #tpu.memory_space<vmem>>, vector<1x128xf32>
    %cst = arith.constant dense<0.000000e+00> : vector<128xf32>
    %5 = vector.multi_reduction <add>, %3, %cst [0] : vector<128x128xf32> to vector<128xf32>
    %6 = vector.shape_cast %5 : vector<128xf32> to vector<1x128xf32>
    %7 = arith.addf %4, %6 : vector<1x128xf32>
    %c0_4 = arith.constant 0 : index
    %c0_5 = arith.constant 0 : index
    %8 = vector.load %arg2[%c0_4, %c0_5] : memref<1x128xf32, #tpu.memory_space<vmem>>, vector<1x128xf32>
    tpu.vector_store %arg2[%c0_4, %c0_5], %7 {strides = array<i32>} : memref<1x128xf32, #tpu.memory_space<vmem>>, vector<1x128xf32>,
    %c0_6 = arith.constant 0 : index
    %c0_7 = arith.constant 0 : index
    %9 = vector.load %arg3[%c0_6, %c0_7] : memref<1x128xf32, #tpu.memory_space<vmem>>, vector<1x128xf32>
    %10 = arith.mulf %3, %3 : vector<128x128xf32>
    %cst_8 = arith.constant dense<0.000000e+00> : vector<128xf32>
    %11 = vector.multi_reduction <add>, %10, %cst_8 [0] : vector<128x128xf32> to vector<128xf32>
    %12 = vector.shape_cast %11 : vector<128xf32> to vector<1x128xf32>
    %13 = arith.addf %9, %12 : vector<1x128xf32>
    %c0_9 = arith.constant 0 : index
    %c0_10 = arith.constant 0 : index
    %14 = vector.load %arg3[%c0_9, %c0_10] : memref<1x128xf32, #tpu.memory_space<vmem>>, vector<1x128xf32>
    tpu.vector_store %arg3[%c0_9, %c0_10], %13 {strides = array<i32>} : memref<1x128xf32, #tpu.memory_space<vmem>>, vector<1x128xf32>,
    return
  }
  func.func @transform_0(%arg0: i32) -> (i32, i32) {
    %c0_i32 = arith.constant 0 : i32
    %c0_i32_0 = arith.constant 0 : i32
    return %arg0, %c0_i32 : i32, i32
  }
  func.func @transform_1(%arg0: i32) -> (i32, i32) {
    %c0_i32 = arith.constant 0 : i32
    %c0_i32_0 = arith.constant 0 : i32
    %c0_i32_1 = arith.constant 0 : i32
    return %c0_i32, %c0_i32_0 : i32, i32
  }
  func.func @transform_2(%arg0: i32) -> (i32, i32) {
    %c0_i32 = arith.constant 0 : i32
    %c0_i32_0 = arith.constant 0 : i32
    %c0_i32_1 = arith.constant 0 : i32
    return %c0_i32, %c0_i32_0 : i32, i32
  }
}

module attributes {stable_mosaic.version = 11 : i64} {
  func.func @_bn_apply_kernel(%arg0: i32, %arg1: memref<128x128xf32, #tpu.memory_space<vmem>>, %arg2: memref<1x128xf32, #tpu.memory_space<vmem>>, %arg3: memref<1x128xf32, #tpu.memory_space<vmem>>, %arg4: memref<1x128xf32, #tpu.memory_space<vmem>>, %arg5: memref<1x128xf32, #tpu.memory_space<vmem>>, %arg6: memref<128x128xf32, #tpu.memory_space<vmem>>) attributes {dimension_semantics = [#tpu.dimension_semantics<parallel>], iteration_bounds = array<i64: 1>, scalar_prefetch = 0 : i64, scratch_operands = 0 : i64, tpu.core_type = #tpu.core_type<tc>, window_params = [{transform_indices = @transform_0, window_bounds = array<i64: 128, 128>}, {pipeline_mode = #tpu.pipeline_mode<synchronous>, transform_indices = @transform_1, window_bounds = array<i64: 1, 128>}, {pipeline_mode = #tpu.pipeline_mode<synchronous>, transform_indices = @transform_2, window_bounds = array<i64: 1, 128>}, {pipeline_mode = #tpu.pipeline_mode<synchronous>, transform_indices = @transform_3, window_bounds = array<i64: 1, 128>}, {pipeline_mode = #tpu.pipeline_mode<synchronous>, transform_indices = @transform_4, window_bounds = array<i64: 1, 128>}, {transform_indices = @transform_5, window_bounds = array<i64: 128, 128>}]} {
    %c0 = arith.constant 0 : index
    %c0_0 = arith.constant 0 : index
    %0 = vector.load %arg2[%c0, %c0_0] : memref<1x128xf32, #tpu.memory_space<vmem>>, vector<1x128xf32>
    %cst = arith.constant 7.812500e-03 : f32
    %1 = vector.broadcast %cst : f32 to vector<1x128xf32>
    %2 = arith.mulf %0, %1 : vector<1x128xf32>
    %c0_1 = arith.constant 0 : index
    %c0_2 = arith.constant 0 : index
    %3 = vector.load %arg3[%c0_1, %c0_2] : memref<1x128xf32, #tpu.memory_space<vmem>>, vector<1x128xf32>
    %cst_3 = arith.constant 7.812500e-03 : f32
    %4 = vector.broadcast %cst_3 : f32 to vector<1x128xf32>
    %5 = arith.mulf %3, %4 : vector<1x128xf32>
    %6 = arith.mulf %2, %2 : vector<1x128xf32>
    %7 = arith.subf %5, %6 : vector<1x128xf32>
    %c0_4 = arith.constant 0 : index
    %c0_5 = arith.constant 0 : index
    %8 = vector.load %arg4[%c0_4, %c0_5] : memref<1x128xf32, #tpu.memory_space<vmem>>, vector<1x128xf32>
    %cst_6 = arith.constant 9.99999974E-6 : f32
    %9 = vector.broadcast %cst_6 : f32 to vector<1x128xf32>
    %10 = arith.addf %7, %9 : vector<1x128xf32>
    %11 = math.rsqrt %10 : vector<1x128xf32>
    %12 = arith.mulf %8, %11 : vector<1x128xf32>
    %c0_7 = arith.constant 0 : index
    %c0_8 = arith.constant 0 : index
    %13 = vector.load %arg5[%c0_7, %c0_8] : memref<1x128xf32, #tpu.memory_space<vmem>>, vector<1x128xf32>
    %14 = arith.mulf %2, %12 : vector<1x128xf32>
    %15 = arith.subf %13, %14 : vector<1x128xf32>
    %c0_9 = arith.constant 0 : index
    %c0_10 = arith.constant 0 : index
    %16 = vector.load %arg1[%c0_9, %c0_10] : memref<128x128xf32, #tpu.memory_space<vmem>>, vector<128x128xf32>
    %17 = vector.broadcast %12 : vector<1x128xf32> to vector<128x128xf32>
    %18 = arith.mulf %16, %17 : vector<128x128xf32>
    %19 = vector.broadcast %15 : vector<1x128xf32> to vector<128x128xf32>
    %20 = arith.addf %18, %19 : vector<128x128xf32>
    %cst_11 = arith.constant 0.000000e+00 : f32
    %21 = vector.broadcast %cst_11 : f32 to vector<128x128xf32>
    %22 = arith.maximumf %20, %21 : vector<128x128xf32>
    %c0_12 = arith.constant 0 : index
    %c0_13 = arith.constant 0 : index
    %23 = vector.load %arg6[%c0_12, %c0_13] : memref<128x128xf32, #tpu.memory_space<vmem>>, vector<128x128xf32>
    tpu.vector_store %arg6[%c0_12, %c0_13], %22 {strides = array<i32>} : memref<128x128xf32, #tpu.memory_space<vmem>>, vector<128x128xf32>,
    return
  }
  func.func @transform_0(%arg0: i32) -> (i32, i32) {
    %c0_i32 = arith.constant 0 : i32
    %c0_i32_0 = arith.constant 0 : i32
    return %arg0, %c0_i32 : i32, i32
  }
  func.func @transform_1(%arg0: i32) -> (i32, i32) {
    %c0_i32 = arith.constant 0 : i32
    %c0_i32_0 = arith.constant 0 : i32
    %c0_i32_1 = arith.constant 0 : i32
    return %c0_i32, %c0_i32_0 : i32, i32
  }
  func.func @transform_2(%arg0: i32) -> (i32, i32) {
    %c0_i32 = arith.constant 0 : i32
    %c0_i32_0 = arith.constant 0 : i32
    %c0_i32_1 = arith.constant 0 : i32
    return %c0_i32, %c0_i32_0 : i32, i32
  }
  func.func @transform_3(%arg0: i32) -> (i32, i32) {
    %c0_i32 = arith.constant 0 : i32
    %c0_i32_0 = arith.constant 0 : i32
    %c0_i32_1 = arith.constant 0 : i32
    return %c0_i32, %c0_i32_0 : i32, i32
  }
  func.func @transform_4(%arg0: i32) -> (i32, i32) {
    %c0_i32 = arith.constant 0 : i32
    %c0_i32_0 = arith.constant 0 : i32
    %c0_i32_1 = arith.constant 0 : i32
    return %c0_i32, %c0_i32_0 : i32, i32
  }
  func.func @transform_5(%arg0: i32) -> (i32, i32) {
    %c0_i32 = arith.constant 0 : i32
    %c0_i32_0 = arith.constant 0 : i32
    return %arg0, %c0_i32 : i32, i32
  }
}

module attributes {stable_mosaic.version = 11 : i64} {
  func.func @_mm_kernel(%arg0: i32, %arg1: i32, %arg2: i32, %arg3: memref<32x256xbf16, #tpu.memory_space<vmem>>, %arg4: memref<256x128xbf16, #tpu.memory_space<vmem>>, %arg5: memref<1x128xf32, #tpu.memory_space<vmem>>, %arg6: memref<32x128xf32, #tpu.memory_space<vmem>>, %arg7: memref<32x128xf32, #tpu.memory_space<vmem>>) attributes {dimension_semantics = [#tpu.dimension_semantics<parallel>, #tpu.dimension_semantics<parallel>, #tpu.dimension_semantics<arbitrary>], iteration_bounds = array<i64: 1, 1, 1>, scalar_prefetch = 0 : i64, scratch_operands = 1 : i64, tpu.core_type = #tpu.core_type<tc>, window_params = [{transform_indices = @transform_0, window_bounds = array<i64: 32, 256>}, {transform_indices = @transform_1, window_bounds = array<i64: 256, 128>}, {transform_indices = @transform_2, window_bounds = array<i64: 1, 128>}, {transform_indices = @transform_3, window_bounds = array<i64: 32, 128>}]} {
    %c0_i32 = arith.constant 0 : i32
    %0 = arith.cmpi eq, %arg2, %c0_i32 : i32
    %1 = arith.extui %0 : i1 to i32
    %c0_i32_0 = arith.constant 0 : i32
    %2 = arith.cmpi ne, %1, %c0_i32_0 : i32
    scf.if %2 {
      %cst_10 = arith.constant 0.000000e+00 : f32
      %12 = vector.broadcast %cst_10 : f32 to vector<32x128xf32>
      %c0_11 = arith.constant 0 : index
      %c0_12 = arith.constant 0 : index
      %13 = vector.load %arg7[%c0_11, %c0_12] : memref<32x128xf32, #tpu.memory_space<vmem>>, vector<32x128xf32>
      tpu.vector_store %arg7[%c0_11, %c0_12], %12 {strides = array<i32>} : memref<32x128xf32, #tpu.memory_space<vmem>>, vector<32x128xf32>,
    } else {
    }
    %c0 = arith.constant 0 : index
    %c0_1 = arith.constant 0 : index
    %3 = vector.load %arg7[%c0, %c0_1] : memref<32x128xf32, #tpu.memory_space<vmem>>, vector<32x128xf32>
    %c0_2 = arith.constant 0 : index
    %c0_3 = arith.constant 0 : index
    %4 = vector.load %arg3[%c0_2, %c0_3] : memref<32x256xbf16, #tpu.memory_space<vmem>>, vector<32x256xbf16>
    %c0_4 = arith.constant 0 : index
    %c0_5 = arith.constant 0 : index
    %5 = vector.load %arg4[%c0_4, %c0_5] : memref<256x128xbf16, #tpu.memory_space<vmem>>, vector<256x128xbf16>
    %cst = arith.constant dense<0.000000e+00> : vector<32x128xf32>
    %6 = tpu.matmul %4, %5, %cst {dimension_numbers = #tpu.dot_dimension_numbers<[1], [0], [0], [1], [0, 0, 1, 1], [], []>} : vector<32x256xbf16>, vector<256x128xbf16>, vector<32x128xf32> -> vector<32x128xf32>
    %7 = arith.addf %3, %6 : vector<32x128xf32>
    %c0_6 = arith.constant 0 : index
    %c0_7 = arith.constant 0 : index
    %8 = vector.load %arg7[%c0_6, %c0_7] : memref<32x128xf32, #tpu.memory_space<vmem>>, vector<32x128xf32>
    tpu.vector_store %arg7[%c0_6, %c0_7], %7 {strides = array<i32>} : memref<32x128xf32, #tpu.memory_space<vmem>>, vector<32x128xf32>,
    %c0_i32_8 = arith.constant 0 : i32
    %9 = arith.cmpi eq, %arg2, %c0_i32_8 : i32
    %10 = arith.extui %9 : i1 to i32
    %c0_i32_9 = arith.constant 0 : i32
    %11 = arith.cmpi ne, %10, %c0_i32_9 : i32
    scf.if %11 {
      %c0_10 = arith.constant 0 : index
      %c0_11 = arith.constant 0 : index
      %12 = vector.load %arg7[%c0_10, %c0_11] : memref<32x128xf32, #tpu.memory_space<vmem>>, vector<32x128xf32>
      %c0_12 = arith.constant 0 : index
      %c0_13 = arith.constant 0 : index
      %13 = vector.load %arg5[%c0_12, %c0_13] : memref<1x128xf32, #tpu.memory_space<vmem>>, vector<1x128xf32>
      %14 = vector.broadcast %13 : vector<1x128xf32> to vector<32x128xf32>
      %15 = arith.addf %12, %14 : vector<32x128xf32>
      %c0_14 = arith.constant 0 : index
      %c0_15 = arith.constant 0 : index
      %16 = vector.load %arg6[%c0_14, %c0_15] : memref<32x128xf32, #tpu.memory_space<vmem>>, vector<32x128xf32>
      tpu.vector_store %arg6[%c0_14, %c0_15], %15 {strides = array<i32>} : memref<32x128xf32, #tpu.memory_space<vmem>>, vector<32x128xf32>,
    } else {
    }
    return
  }
  func.func @transform_0(%arg0: i32, %arg1: i32, %arg2: i32) -> (i32, i32) {
    %c0_i32 = arith.constant 0 : i32
    return %arg0, %arg2 : i32, i32
  }
  func.func @transform_1(%arg0: i32, %arg1: i32, %arg2: i32) -> (i32, i32) {
    %c0_i32 = arith.constant 0 : i32
    return %arg2, %arg1 : i32, i32
  }
  func.func @transform_2(%arg0: i32, %arg1: i32, %arg2: i32) -> (i32, i32) {
    %c0_i32 = arith.constant 0 : i32
    %c0_i32_0 = arith.constant 0 : i32
    return %c0_i32, %arg1 : i32, i32
  }
  func.func @transform_3(%arg0: i32, %arg1: i32, %arg2: i32) -> (i32, i32) {
    %c0_i32 = arith.constant 0 : i32
    return %arg0, %arg1 : i32, i32
  }
}

module attributes {stable_mosaic.version = 11 : i64} {
  func.func @_bn_stats_kernel(%arg0: i32, %arg1: memref<32x128xf32, #tpu.memory_space<vmem>>, %arg2: memref<1x128xf32, #tpu.memory_space<vmem>>, %arg3: memref<1x128xf32, #tpu.memory_space<vmem>>) attributes {dimension_semantics = [#tpu.dimension_semantics<arbitrary>], iteration_bounds = array<i64: 1>, scalar_prefetch = 0 : i64, scratch_operands = 0 : i64, tpu.core_type = #tpu.core_type<tc>, window_params = [{transform_indices = @transform_0, window_bounds = array<i64: 32, 128>}, {pipeline_mode = #tpu.pipeline_mode<synchronous>, transform_indices = @transform_1, window_bounds = array<i64: 1, 128>}, {pipeline_mode = #tpu.pipeline_mode<synchronous>, transform_indices = @transform_2, window_bounds = array<i64: 1, 128>}]} {
    %c0_i32 = arith.constant 0 : i32
    %0 = arith.cmpi eq, %arg0, %c0_i32 : i32
    %1 = arith.extui %0 : i1 to i32
    %c0_i32_0 = arith.constant 0 : i32
    %2 = arith.cmpi ne, %1, %c0_i32_0 : i32
    scf.if %2 {
      %cst_11 = arith.constant 0.000000e+00 : f32
      %15 = vector.broadcast %cst_11 : f32 to vector<1x128xf32>
      %c0_12 = arith.constant 0 : index
      %c0_13 = arith.constant 0 : index
      %16 = vector.load %arg2[%c0_12, %c0_13] : memref<1x128xf32, #tpu.memory_space<vmem>>, vector<1x128xf32>
      tpu.vector_store %arg2[%c0_12, %c0_13], %15 {strides = array<i32>} : memref<1x128xf32, #tpu.memory_space<vmem>>, vector<1x128xf32>,
      %cst_14 = arith.constant 0.000000e+00 : f32
      %17 = vector.broadcast %cst_14 : f32 to vector<1x128xf32>
      %c0_15 = arith.constant 0 : index
      %c0_16 = arith.constant 0 : index
      %18 = vector.load %arg3[%c0_15, %c0_16] : memref<1x128xf32, #tpu.memory_space<vmem>>, vector<1x128xf32>
      tpu.vector_store %arg3[%c0_15, %c0_16], %17 {strides = array<i32>} : memref<1x128xf32, #tpu.memory_space<vmem>>, vector<1x128xf32>,
    } else {
    }
    %c0 = arith.constant 0 : index
    %c0_1 = arith.constant 0 : index
    %3 = vector.load %arg1[%c0, %c0_1] : memref<32x128xf32, #tpu.memory_space<vmem>>, vector<32x128xf32>
    %c0_2 = arith.constant 0 : index
    %c0_3 = arith.constant 0 : index
    %4 = vector.load %arg2[%c0_2, %c0_3] : memref<1x128xf32, #tpu.memory_space<vmem>>, vector<1x128xf32>
    %cst = arith.constant dense<0.000000e+00> : vector<128xf32>
    %5 = vector.multi_reduction <add>, %3, %cst [0] : vector<32x128xf32> to vector<128xf32>
    %6 = vector.shape_cast %5 : vector<128xf32> to vector<1x128xf32>
    %7 = arith.addf %4, %6 : vector<1x128xf32>
    %c0_4 = arith.constant 0 : index
    %c0_5 = arith.constant 0 : index
    %8 = vector.load %arg2[%c0_4, %c0_5] : memref<1x128xf32, #tpu.memory_space<vmem>>, vector<1x128xf32>
    tpu.vector_store %arg2[%c0_4, %c0_5], %7 {strides = array<i32>} : memref<1x128xf32, #tpu.memory_space<vmem>>, vector<1x128xf32>,
    %c0_6 = arith.constant 0 : index
    %c0_7 = arith.constant 0 : index
    %9 = vector.load %arg3[%c0_6, %c0_7] : memref<1x128xf32, #tpu.memory_space<vmem>>, vector<1x128xf32>
    %10 = arith.mulf %3, %3 : vector<32x128xf32>
    %cst_8 = arith.constant dense<0.000000e+00> : vector<128xf32>
    %11 = vector.multi_reduction <add>, %10, %cst_8 [0] : vector<32x128xf32> to vector<128xf32>
    %12 = vector.shape_cast %11 : vector<128xf32> to vector<1x128xf32>
    %13 = arith.addf %9, %12 : vector<1x128xf32>
    %c0_9 = arith.constant 0 : index
    %c0_10 = arith.constant 0 : index
    %14 = vector.load %arg3[%c0_9, %c0_10] : memref<1x128xf32, #tpu.memory_space<vmem>>, vector<1x128xf32>
    tpu.vector_store %arg3[%c0_9, %c0_10], %13 {strides = array<i32>} : memref<1x128xf32, #tpu.memory_space<vmem>>, vector<1x128xf32>,
    return
  }
  func.func @transform_0(%arg0: i32) -> (i32, i32) {
    %c0_i32 = arith.constant 0 : i32
    %c0_i32_0 = arith.constant 0 : i32
    return %arg0, %c0_i32 : i32, i32
  }
  func.func @transform_1(%arg0: i32) -> (i32, i32) {
    %c0_i32 = arith.constant 0 : i32
    %c0_i32_0 = arith.constant 0 : i32
    %c0_i32_1 = arith.constant 0 : i32
    return %c0_i32, %c0_i32_0 : i32, i32
  }
  func.func @transform_2(%arg0: i32) -> (i32, i32) {
    %c0_i32 = arith.constant 0 : i32
    %c0_i32_0 = arith.constant 0 : i32
    %c0_i32_1 = arith.constant 0 : i32
    return %c0_i32, %c0_i32_0 : i32, i32
  }
}

module attributes {stable_mosaic.version = 11 : i64} {
  func.func @_bn_apply_kernel(%arg0: i32, %arg1: memref<32x128xf32, #tpu.memory_space<vmem>>, %arg2: memref<1x128xf32, #tpu.memory_space<vmem>>, %arg3: memref<1x128xf32, #tpu.memory_space<vmem>>, %arg4: memref<1x128xf32, #tpu.memory_space<vmem>>, %arg5: memref<1x128xf32, #tpu.memory_space<vmem>>, %arg6: memref<32x128xf32, #tpu.memory_space<vmem>>) attributes {dimension_semantics = [#tpu.dimension_semantics<parallel>], iteration_bounds = array<i64: 1>, scalar_prefetch = 0 : i64, scratch_operands = 0 : i64, tpu.core_type = #tpu.core_type<tc>, window_params = [{transform_indices = @transform_0, window_bounds = array<i64: 32, 128>}, {pipeline_mode = #tpu.pipeline_mode<synchronous>, transform_indices = @transform_1, window_bounds = array<i64: 1, 128>}, {pipeline_mode = #tpu.pipeline_mode<synchronous>, transform_indices = @transform_2, window_bounds = array<i64: 1, 128>}, {pipeline_mode = #tpu.pipeline_mode<synchronous>, transform_indices = @transform_3, window_bounds = array<i64: 1, 128>}, {pipeline_mode = #tpu.pipeline_mode<synchronous>, transform_indices = @transform_4, window_bounds = array<i64: 1, 128>}, {transform_indices = @transform_5, window_bounds = array<i64: 32, 128>}]} {
    %c0 = arith.constant 0 : index
    %c0_0 = arith.constant 0 : index
    %0 = vector.load %arg2[%c0, %c0_0] : memref<1x128xf32, #tpu.memory_space<vmem>>, vector<1x128xf32>
    %cst = arith.constant 3.125000e-02 : f32
    %1 = vector.broadcast %cst : f32 to vector<1x128xf32>
    %2 = arith.mulf %0, %1 : vector<1x128xf32>
    %c0_1 = arith.constant 0 : index
    %c0_2 = arith.constant 0 : index
    %3 = vector.load %arg3[%c0_1, %c0_2] : memref<1x128xf32, #tpu.memory_space<vmem>>, vector<1x128xf32>
    %cst_3 = arith.constant 3.125000e-02 : f32
    %4 = vector.broadcast %cst_3 : f32 to vector<1x128xf32>
    %5 = arith.mulf %3, %4 : vector<1x128xf32>
    %6 = arith.mulf %2, %2 : vector<1x128xf32>
    %7 = arith.subf %5, %6 : vector<1x128xf32>
    %c0_4 = arith.constant 0 : index
    %c0_5 = arith.constant 0 : index
    %8 = vector.load %arg4[%c0_4, %c0_5] : memref<1x128xf32, #tpu.memory_space<vmem>>, vector<1x128xf32>
    %cst_6 = arith.constant 9.99999974E-6 : f32
    %9 = vector.broadcast %cst_6 : f32 to vector<1x128xf32>
    %10 = arith.addf %7, %9 : vector<1x128xf32>
    %11 = math.rsqrt %10 : vector<1x128xf32>
    %12 = arith.mulf %8, %11 : vector<1x128xf32>
    %c0_7 = arith.constant 0 : index
    %c0_8 = arith.constant 0 : index
    %13 = vector.load %arg5[%c0_7, %c0_8] : memref<1x128xf32, #tpu.memory_space<vmem>>, vector<1x128xf32>
    %14 = arith.mulf %2, %12 : vector<1x128xf32>
    %15 = arith.subf %13, %14 : vector<1x128xf32>
    %c0_9 = arith.constant 0 : index
    %c0_10 = arith.constant 0 : index
    %16 = vector.load %arg1[%c0_9, %c0_10] : memref<32x128xf32, #tpu.memory_space<vmem>>, vector<32x128xf32>
    %17 = vector.broadcast %12 : vector<1x128xf32> to vector<32x128xf32>
    %18 = arith.mulf %16, %17 : vector<32x128xf32>
    %19 = vector.broadcast %15 : vector<1x128xf32> to vector<32x128xf32>
    %20 = arith.addf %18, %19 : vector<32x128xf32>
    %cst_11 = arith.constant 0.000000e+00 : f32
    %21 = vector.broadcast %cst_11 : f32 to vector<32x128xf32>
    %22 = arith.maximumf %20, %21 : vector<32x128xf32>
    %c0_12 = arith.constant 0 : index
    %c0_13 = arith.constant 0 : index
    %23 = vector.load %arg6[%c0_12, %c0_13] : memref<32x128xf32, #tpu.memory_space<vmem>>, vector<32x128xf32>
    tpu.vector_store %arg6[%c0_12, %c0_13], %22 {strides = array<i32>} : memref<32x128xf32, #tpu.memory_space<vmem>>, vector<32x128xf32>,
    return
  }
  func.func @transform_0(%arg0: i32) -> (i32, i32) {
    %c0_i32 = arith.constant 0 : i32
    %c0_i32_0 = arith.constant 0 : i32
    return %arg0, %c0_i32 : i32, i32
  }
  func.func @transform_1(%arg0: i32) -> (i32, i32) {
    %c0_i32 = arith.constant 0 : i32
    %c0_i32_0 = arith.constant 0 : i32
    %c0_i32_1 = arith.constant 0 : i32
    return %c0_i32, %c0_i32_0 : i32, i32
  }
  func.func @transform_2(%arg0: i32) -> (i32, i32) {
    %c0_i32 = arith.constant 0 : i32
    %c0_i32_0 = arith.constant 0 : i32
    %c0_i32_1 = arith.constant 0 : i32
    return %c0_i32, %c0_i32_0 : i32, i32
  }
  func.func @transform_3(%arg0: i32) -> (i32, i32) {
    %c0_i32 = arith.constant 0 : i32
    %c0_i32_0 = arith.constant 0 : i32
    %c0_i32_1 = arith.constant 0 : i32
    return %c0_i32, %c0_i32_0 : i32, i32
  }
  func.func @transform_4(%arg0: i32) -> (i32, i32) {
    %c0_i32 = arith.constant 0 : i32
    %c0_i32_0 = arith.constant 0 : i32
    %c0_i32_1 = arith.constant 0 : i32
    return %c0_i32, %c0_i32_0 : i32, i32
  }
  func.func @transform_5(%arg0: i32) -> (i32, i32) {
    %c0_i32 = arith.constant 0 : i32
    %c0_i32_0 = arith.constant 0 : i32
    return %arg0, %c0_i32 : i32, i32
  }
}

module attributes {stable_mosaic.version = 11 : i64} {
  func.func @_mm_kernel(%arg0: i32, %arg1: i32, %arg2: i32, %arg3: memref<32x384xbf16, #tpu.memory_space<vmem>>, %arg4: memref<384x128xbf16, #tpu.memory_space<vmem>>, %arg5: memref<1x128xf32, #tpu.memory_space<vmem>>, %arg6: memref<32x128xf32, #tpu.memory_space<vmem>>, %arg7: memref<32x128xf32, #tpu.memory_space<vmem>>) attributes {dimension_semantics = [#tpu.dimension_semantics<parallel>, #tpu.dimension_semantics<parallel>, #tpu.dimension_semantics<arbitrary>], iteration_bounds = array<i64: 1, 1, 1>, scalar_prefetch = 0 : i64, scratch_operands = 1 : i64, tpu.core_type = #tpu.core_type<tc>, window_params = [{transform_indices = @transform_0, window_bounds = array<i64: 32, 384>}, {transform_indices = @transform_1, window_bounds = array<i64: 384, 128>}, {transform_indices = @transform_2, window_bounds = array<i64: 1, 128>}, {transform_indices = @transform_3, window_bounds = array<i64: 32, 128>}]} {
    %c0_i32 = arith.constant 0 : i32
    %0 = arith.cmpi eq, %arg2, %c0_i32 : i32
    %1 = arith.extui %0 : i1 to i32
    %c0_i32_0 = arith.constant 0 : i32
    %2 = arith.cmpi ne, %1, %c0_i32_0 : i32
    scf.if %2 {
      %cst_10 = arith.constant 0.000000e+00 : f32
      %12 = vector.broadcast %cst_10 : f32 to vector<32x128xf32>
      %c0_11 = arith.constant 0 : index
      %c0_12 = arith.constant 0 : index
      %13 = vector.load %arg7[%c0_11, %c0_12] : memref<32x128xf32, #tpu.memory_space<vmem>>, vector<32x128xf32>
      tpu.vector_store %arg7[%c0_11, %c0_12], %12 {strides = array<i32>} : memref<32x128xf32, #tpu.memory_space<vmem>>, vector<32x128xf32>,
    } else {
    }
    %c0 = arith.constant 0 : index
    %c0_1 = arith.constant 0 : index
    %3 = vector.load %arg7[%c0, %c0_1] : memref<32x128xf32, #tpu.memory_space<vmem>>, vector<32x128xf32>
    %c0_2 = arith.constant 0 : index
    %c0_3 = arith.constant 0 : index
    %4 = vector.load %arg3[%c0_2, %c0_3] : memref<32x384xbf16, #tpu.memory_space<vmem>>, vector<32x384xbf16>
    %c0_4 = arith.constant 0 : index
    %c0_5 = arith.constant 0 : index
    %5 = vector.load %arg4[%c0_4, %c0_5] : memref<384x128xbf16, #tpu.memory_space<vmem>>, vector<384x128xbf16>
    %cst = arith.constant dense<0.000000e+00> : vector<32x128xf32>
    %6 = tpu.matmul %4, %5, %cst {dimension_numbers = #tpu.dot_dimension_numbers<[1], [0], [0], [1], [0, 0, 1, 1], [], []>} : vector<32x384xbf16>, vector<384x128xbf16>, vector<32x128xf32> -> vector<32x128xf32>
    %7 = arith.addf %3, %6 : vector<32x128xf32>
    %c0_6 = arith.constant 0 : index
    %c0_7 = arith.constant 0 : index
    %8 = vector.load %arg7[%c0_6, %c0_7] : memref<32x128xf32, #tpu.memory_space<vmem>>, vector<32x128xf32>
    tpu.vector_store %arg7[%c0_6, %c0_7], %7 {strides = array<i32>} : memref<32x128xf32, #tpu.memory_space<vmem>>, vector<32x128xf32>,
    %c0_i32_8 = arith.constant 0 : i32
    %9 = arith.cmpi eq, %arg2, %c0_i32_8 : i32
    %10 = arith.extui %9 : i1 to i32
    %c0_i32_9 = arith.constant 0 : i32
    %11 = arith.cmpi ne, %10, %c0_i32_9 : i32
    scf.if %11 {
      %c0_10 = arith.constant 0 : index
      %c0_11 = arith.constant 0 : index
      %12 = vector.load %arg7[%c0_10, %c0_11] : memref<32x128xf32, #tpu.memory_space<vmem>>, vector<32x128xf32>
      %c0_12 = arith.constant 0 : index
      %c0_13 = arith.constant 0 : index
      %13 = vector.load %arg5[%c0_12, %c0_13] : memref<1x128xf32, #tpu.memory_space<vmem>>, vector<1x128xf32>
      %14 = vector.broadcast %13 : vector<1x128xf32> to vector<32x128xf32>
      %15 = arith.addf %12, %14 : vector<32x128xf32>
      %c0_14 = arith.constant 0 : index
      %c0_15 = arith.constant 0 : index
      %16 = vector.load %arg6[%c0_14, %c0_15] : memref<32x128xf32, #tpu.memory_space<vmem>>, vector<32x128xf32>
      tpu.vector_store %arg6[%c0_14, %c0_15], %15 {strides = array<i32>} : memref<32x128xf32, #tpu.memory_space<vmem>>, vector<32x128xf32>,
    } else {
    }
    return
  }
  func.func @transform_0(%arg0: i32, %arg1: i32, %arg2: i32) -> (i32, i32) {
    %c0_i32 = arith.constant 0 : i32
    return %arg0, %arg2 : i32, i32
  }
  func.func @transform_1(%arg0: i32, %arg1: i32, %arg2: i32) -> (i32, i32) {
    %c0_i32 = arith.constant 0 : i32
    return %arg2, %arg1 : i32, i32
  }
  func.func @transform_2(%arg0: i32, %arg1: i32, %arg2: i32) -> (i32, i32) {
    %c0_i32 = arith.constant 0 : i32
    %c0_i32_0 = arith.constant 0 : i32
    return %c0_i32, %arg1 : i32, i32
  }
  func.func @transform_3(%arg0: i32, %arg1: i32, %arg2: i32) -> (i32, i32) {
    %c0_i32 = arith.constant 0 : i32
    return %arg0, %arg1 : i32, i32
  }
}

module attributes {stable_mosaic.version = 11 : i64} {
  func.func @_mm_kernel(%arg0: i32, %arg1: i32, %arg2: i32, %arg3: memref<32x128xbf16, #tpu.memory_space<vmem>>, %arg4: memref<128x256xbf16, #tpu.memory_space<vmem>>, %arg5: memref<1x256xf32, #tpu.memory_space<vmem>>, %arg6: memref<32x256xf32, #tpu.memory_space<vmem>>, %arg7: memref<32x256xf32, #tpu.memory_space<vmem>>) attributes {dimension_semantics = [#tpu.dimension_semantics<parallel>, #tpu.dimension_semantics<parallel>, #tpu.dimension_semantics<arbitrary>], iteration_bounds = array<i64: 1, 1, 1>, scalar_prefetch = 0 : i64, scratch_operands = 1 : i64, tpu.core_type = #tpu.core_type<tc>, window_params = [{transform_indices = @transform_0, window_bounds = array<i64: 32, 128>}, {transform_indices = @transform_1, window_bounds = array<i64: 128, 256>}, {transform_indices = @transform_2, window_bounds = array<i64: 1, 256>}, {transform_indices = @transform_3, window_bounds = array<i64: 32, 256>}]} {
    %c0_i32 = arith.constant 0 : i32
    %0 = arith.cmpi eq, %arg2, %c0_i32 : i32
    %1 = arith.extui %0 : i1 to i32
    %c0_i32_0 = arith.constant 0 : i32
    %2 = arith.cmpi ne, %1, %c0_i32_0 : i32
    scf.if %2 {
      %cst_10 = arith.constant 0.000000e+00 : f32
      %12 = vector.broadcast %cst_10 : f32 to vector<32x256xf32>
      %c0_11 = arith.constant 0 : index
      %c0_12 = arith.constant 0 : index
      %13 = vector.load %arg7[%c0_11, %c0_12] : memref<32x256xf32, #tpu.memory_space<vmem>>, vector<32x256xf32>
      tpu.vector_store %arg7[%c0_11, %c0_12], %12 {strides = array<i32>} : memref<32x256xf32, #tpu.memory_space<vmem>>, vector<32x256xf32>,
    } else {
    }
    %c0 = arith.constant 0 : index
    %c0_1 = arith.constant 0 : index
    %3 = vector.load %arg7[%c0, %c0_1] : memref<32x256xf32, #tpu.memory_space<vmem>>, vector<32x256xf32>
    %c0_2 = arith.constant 0 : index
    %c0_3 = arith.constant 0 : index
    %4 = vector.load %arg3[%c0_2, %c0_3] : memref<32x128xbf16, #tpu.memory_space<vmem>>, vector<32x128xbf16>
    %c0_4 = arith.constant 0 : index
    %c0_5 = arith.constant 0 : index
    %5 = vector.load %arg4[%c0_4, %c0_5] : memref<128x256xbf16, #tpu.memory_space<vmem>>, vector<128x256xbf16>
    %cst = arith.constant dense<0.000000e+00> : vector<32x256xf32>
    %6 = tpu.matmul %4, %5, %cst {dimension_numbers = #tpu.dot_dimension_numbers<[1], [0], [0], [1], [0, 0, 1, 1], [], []>} : vector<32x128xbf16>, vector<128x256xbf16>, vector<32x256xf32> -> vector<32x256xf32>
    %7 = arith.addf %3, %6 : vector<32x256xf32>
    %c0_6 = arith.constant 0 : index
    %c0_7 = arith.constant 0 : index
    %8 = vector.load %arg7[%c0_6, %c0_7] : memref<32x256xf32, #tpu.memory_space<vmem>>, vector<32x256xf32>
    tpu.vector_store %arg7[%c0_6, %c0_7], %7 {strides = array<i32>} : memref<32x256xf32, #tpu.memory_space<vmem>>, vector<32x256xf32>,
    %c0_i32_8 = arith.constant 0 : i32
    %9 = arith.cmpi eq, %arg2, %c0_i32_8 : i32
    %10 = arith.extui %9 : i1 to i32
    %c0_i32_9 = arith.constant 0 : i32
    %11 = arith.cmpi ne, %10, %c0_i32_9 : i32
    scf.if %11 {
      %c0_10 = arith.constant 0 : index
      %c0_11 = arith.constant 0 : index
      %12 = vector.load %arg7[%c0_10, %c0_11] : memref<32x256xf32, #tpu.memory_space<vmem>>, vector<32x256xf32>
      %c0_12 = arith.constant 0 : index
      %c0_13 = arith.constant 0 : index
      %13 = vector.load %arg5[%c0_12, %c0_13] : memref<1x256xf32, #tpu.memory_space<vmem>>, vector<1x256xf32>
      %14 = vector.broadcast %13 : vector<1x256xf32> to vector<32x256xf32>
      %15 = arith.addf %12, %14 : vector<32x256xf32>
      %c0_14 = arith.constant 0 : index
      %c0_15 = arith.constant 0 : index
      %16 = vector.load %arg6[%c0_14, %c0_15] : memref<32x256xf32, #tpu.memory_space<vmem>>, vector<32x256xf32>
      tpu.vector_store %arg6[%c0_14, %c0_15], %15 {strides = array<i32>} : memref<32x256xf32, #tpu.memory_space<vmem>>, vector<32x256xf32>,
    } else {
    }
    return
  }
  func.func @transform_0(%arg0: i32, %arg1: i32, %arg2: i32) -> (i32, i32) {
    %c0_i32 = arith.constant 0 : i32
    return %arg0, %arg2 : i32, i32
  }
  func.func @transform_1(%arg0: i32, %arg1: i32, %arg2: i32) -> (i32, i32) {
    %c0_i32 = arith.constant 0 : i32
    return %arg2, %arg1 : i32, i32
  }
  func.func @transform_2(%arg0: i32, %arg1: i32, %arg2: i32) -> (i32, i32) {
    %c0_i32 = arith.constant 0 : i32
    %c0_i32_0 = arith.constant 0 : i32
    return %c0_i32, %arg1 : i32, i32
  }
  func.func @transform_3(%arg0: i32, %arg1: i32, %arg2: i32) -> (i32, i32) {
    %c0_i32 = arith.constant 0 : i32
    return %arg0, %arg1 : i32, i32
  }
}

module attributes {stable_mosaic.version = 11 : i64} {
  func.func @_bn_apply_kernel(%arg0: i32, %arg1: memref<32x128xf32, #tpu.memory_space<vmem>>, %arg2: memref<32x128xf32, #tpu.memory_space<vmem>>, %arg3: memref<1x128xf32, #tpu.memory_space<vmem>>, %arg4: memref<1x128xf32, #tpu.memory_space<vmem>>, %arg5: memref<1x128xf32, #tpu.memory_space<vmem>>, %arg6: memref<1x128xf32, #tpu.memory_space<vmem>>, %arg7: memref<32x128xf32, #tpu.memory_space<vmem>>) attributes {dimension_semantics = [#tpu.dimension_semantics<parallel>], iteration_bounds = array<i64: 1>, scalar_prefetch = 0 : i64, scratch_operands = 0 : i64, tpu.core_type = #tpu.core_type<tc>, window_params = [{transform_indices = @transform_0, window_bounds = array<i64: 32, 128>}, {transform_indices = @transform_1, window_bounds = array<i64: 32, 128>}, {pipeline_mode = #tpu.pipeline_mode<synchronous>, transform_indices = @transform_2, window_bounds = array<i64: 1, 128>}, {pipeline_mode = #tpu.pipeline_mode<synchronous>, transform_indices = @transform_3, window_bounds = array<i64: 1, 128>}, {pipeline_mode = #tpu.pipeline_mode<synchronous>, transform_indices = @transform_4, window_bounds = array<i64: 1, 128>}, {pipeline_mode = #tpu.pipeline_mode<synchronous>, transform_indices = @transform_5, window_bounds = array<i64: 1, 128>}, {transform_indices = @transform_6, window_bounds = array<i64: 32, 128>}]} {
    %c0 = arith.constant 0 : index
    %c0_0 = arith.constant 0 : index
    %0 = vector.load %arg3[%c0, %c0_0] : memref<1x128xf32, #tpu.memory_space<vmem>>, vector<1x128xf32>
    %cst = arith.constant 3.125000e-02 : f32
    %1 = vector.broadcast %cst : f32 to vector<1x128xf32>
    %2 = arith.mulf %0, %1 : vector<1x128xf32>
    %c0_1 = arith.constant 0 : index
    %c0_2 = arith.constant 0 : index
    %3 = vector.load %arg4[%c0_1, %c0_2] : memref<1x128xf32, #tpu.memory_space<vmem>>, vector<1x128xf32>
    %cst_3 = arith.constant 3.125000e-02 : f32
    %4 = vector.broadcast %cst_3 : f32 to vector<1x128xf32>
    %5 = arith.mulf %3, %4 : vector<1x128xf32>
    %6 = arith.mulf %2, %2 : vector<1x128xf32>
    %7 = arith.subf %5, %6 : vector<1x128xf32>
    %c0_4 = arith.constant 0 : index
    %c0_5 = arith.constant 0 : index
    %8 = vector.load %arg5[%c0_4, %c0_5] : memref<1x128xf32, #tpu.memory_space<vmem>>, vector<1x128xf32>
    %cst_6 = arith.constant 9.99999974E-6 : f32
    %9 = vector.broadcast %cst_6 : f32 to vector<1x128xf32>
    %10 = arith.addf %7, %9 : vector<1x128xf32>
    %11 = math.rsqrt %10 : vector<1x128xf32>
    %12 = arith.mulf %8, %11 : vector<1x128xf32>
    %c0_7 = arith.constant 0 : index
    %c0_8 = arith.constant 0 : index
    %13 = vector.load %arg6[%c0_7, %c0_8] : memref<1x128xf32, #tpu.memory_space<vmem>>, vector<1x128xf32>
    %14 = arith.mulf %2, %12 : vector<1x128xf32>
    %15 = arith.subf %13, %14 : vector<1x128xf32>
    %c0_9 = arith.constant 0 : index
    %c0_10 = arith.constant 0 : index
    %16 = vector.load %arg1[%c0_9, %c0_10] : memref<32x128xf32, #tpu.memory_space<vmem>>, vector<32x128xf32>
    %17 = vector.broadcast %12 : vector<1x128xf32> to vector<32x128xf32>
    %18 = arith.mulf %16, %17 : vector<32x128xf32>
    %19 = vector.broadcast %15 : vector<1x128xf32> to vector<32x128xf32>
    %20 = arith.addf %18, %19 : vector<32x128xf32>
    %c0_11 = arith.constant 0 : index
    %c0_12 = arith.constant 0 : index
    %21 = vector.load %arg2[%c0_11, %c0_12] : memref<32x128xf32, #tpu.memory_space<vmem>>, vector<32x128xf32>
    %22 = arith.addf %20, %21 : vector<32x128xf32>
    %c0_13 = arith.constant 0 : index
    %c0_14 = arith.constant 0 : index
    %23 = vector.load %arg7[%c0_13, %c0_14] : memref<32x128xf32, #tpu.memory_space<vmem>>, vector<32x128xf32>
    tpu.vector_store %arg7[%c0_13, %c0_14], %22 {strides = array<i32>} : memref<32x128xf32, #tpu.memory_space<vmem>>, vector<32x128xf32>,
    return
  }
  func.func @transform_0(%arg0: i32) -> (i32, i32) {
    %c0_i32 = arith.constant 0 : i32
    %c0_i32_0 = arith.constant 0 : i32
    return %arg0, %c0_i32 : i32, i32
  }
  func.func @transform_1(%arg0: i32) -> (i32, i32) {
    %c0_i32 = arith.constant 0 : i32
    %c0_i32_0 = arith.constant 0 : i32
    return %arg0, %c0_i32 : i32, i32
  }
  func.func @transform_2(%arg0: i32) -> (i32, i32) {
    %c0_i32 = arith.constant 0 : i32
    %c0_i32_0 = arith.constant 0 : i32
    %c0_i32_1 = arith.constant 0 : i32
    return %c0_i32, %c0_i32_0 : i32, i32
  }
  func.func @transform_3(%arg0: i32) -> (i32, i32) {
    %c0_i32 = arith.constant 0 : i32
    %c0_i32_0 = arith.constant 0 : i32
    %c0_i32_1 = arith.constant 0 : i32
    return %c0_i32, %c0_i32_0 : i32, i32
  }
  func.func @transform_4(%arg0: i32) -> (i32, i32) {
    %c0_i32 = arith.constant 0 : i32
    %c0_i32_0 = arith.constant 0 : i32
    %c0_i32_1 = arith.constant 0 : i32
    return %c0_i32, %c0_i32_0 : i32, i32
  }
  func.func @transform_5(%arg0: i32) -> (i32, i32) {
    %c0_i32 = arith.constant 0 : i32
    %c0_i32_0 = arith.constant 0 : i32
    %c0_i32_1 = arith.constant 0 : i32
    return %c0_i32, %c0_i32_0 : i32, i32
  }
  func.func @transform_6(%arg0: i32) -> (i32, i32) {
    %c0_i32 = arith.constant 0 : i32
    %c0_i32_0 = arith.constant 0 : i32
    return %arg0, %c0_i32 : i32, i32
  }
}

module attributes {stable_mosaic.version = 11 : i64} {
  func.func @_mm_kernel(%arg0: i32, %arg1: i32, %arg2: i32, %arg3: memref<256x512xbf16, #tpu.memory_space<vmem>>, %arg4: memref<512x128xbf16, #tpu.memory_space<vmem>>, %arg5: memref<1x128xf32, #tpu.memory_space<vmem>>, %arg6: memref<256x128xf32, #tpu.memory_space<vmem>>, %arg7: memref<256x128xf32, #tpu.memory_space<vmem>>) attributes {dimension_semantics = [#tpu.dimension_semantics<parallel>, #tpu.dimension_semantics<parallel>, #tpu.dimension_semantics<arbitrary>], iteration_bounds = array<i64: 2, 1, 1>, scalar_prefetch = 0 : i64, scratch_operands = 1 : i64, tpu.core_type = #tpu.core_type<tc>, window_params = [{transform_indices = @transform_0, window_bounds = array<i64: 256, 512>}, {transform_indices = @transform_1, window_bounds = array<i64: 512, 128>}, {transform_indices = @transform_2, window_bounds = array<i64: 1, 128>}, {transform_indices = @transform_3, window_bounds = array<i64: 256, 128>}]} {
    %c0_i32 = arith.constant 0 : i32
    %0 = arith.cmpi eq, %arg2, %c0_i32 : i32
    %1 = arith.extui %0 : i1 to i32
    %c0_i32_0 = arith.constant 0 : i32
    %2 = arith.cmpi ne, %1, %c0_i32_0 : i32
    scf.if %2 {
      %cst_10 = arith.constant 0.000000e+00 : f32
      %12 = vector.broadcast %cst_10 : f32 to vector<256x128xf32>
      %c0_11 = arith.constant 0 : index
      %c0_12 = arith.constant 0 : index
      %13 = vector.load %arg7[%c0_11, %c0_12] : memref<256x128xf32, #tpu.memory_space<vmem>>, vector<256x128xf32>
      tpu.vector_store %arg7[%c0_11, %c0_12], %12 {strides = array<i32>} : memref<256x128xf32, #tpu.memory_space<vmem>>, vector<256x128xf32>,
    } else {
    }
    %c0 = arith.constant 0 : index
    %c0_1 = arith.constant 0 : index
    %3 = vector.load %arg7[%c0, %c0_1] : memref<256x128xf32, #tpu.memory_space<vmem>>, vector<256x128xf32>
    %c0_2 = arith.constant 0 : index
    %c0_3 = arith.constant 0 : index
    %4 = vector.load %arg3[%c0_2, %c0_3] : memref<256x512xbf16, #tpu.memory_space<vmem>>, vector<256x512xbf16>
    %c0_4 = arith.constant 0 : index
    %c0_5 = arith.constant 0 : index
    %5 = vector.load %arg4[%c0_4, %c0_5] : memref<512x128xbf16, #tpu.memory_space<vmem>>, vector<512x128xbf16>
    %cst = arith.constant dense<0.000000e+00> : vector<256x128xf32>
    %6 = tpu.matmul %4, %5, %cst {dimension_numbers = #tpu.dot_dimension_numbers<[1], [0], [0], [1], [0, 0, 1, 1], [], []>} : vector<256x512xbf16>, vector<512x128xbf16>, vector<256x128xf32> -> vector<256x128xf32>
    %7 = arith.addf %3, %6 : vector<256x128xf32>
    %c0_6 = arith.constant 0 : index
    %c0_7 = arith.constant 0 : index
    %8 = vector.load %arg7[%c0_6, %c0_7] : memref<256x128xf32, #tpu.memory_space<vmem>>, vector<256x128xf32>
    tpu.vector_store %arg7[%c0_6, %c0_7], %7 {strides = array<i32>} : memref<256x128xf32, #tpu.memory_space<vmem>>, vector<256x128xf32>,
    %c0_i32_8 = arith.constant 0 : i32
    %9 = arith.cmpi eq, %arg2, %c0_i32_8 : i32
    %10 = arith.extui %9 : i1 to i32
    %c0_i32_9 = arith.constant 0 : i32
    %11 = arith.cmpi ne, %10, %c0_i32_9 : i32
    scf.if %11 {
      %c0_10 = arith.constant 0 : index
      %c0_11 = arith.constant 0 : index
      %12 = vector.load %arg7[%c0_10, %c0_11] : memref<256x128xf32, #tpu.memory_space<vmem>>, vector<256x128xf32>
      %c0_12 = arith.constant 0 : index
      %c0_13 = arith.constant 0 : index
      %13 = vector.load %arg5[%c0_12, %c0_13] : memref<1x128xf32, #tpu.memory_space<vmem>>, vector<1x128xf32>
      %14 = vector.broadcast %13 : vector<1x128xf32> to vector<256x128xf32>
      %15 = arith.addf %12, %14 : vector<256x128xf32>
      %16 = math.tanh %15 : vector<256x128xf32>
      %c0_14 = arith.constant 0 : index
      %c0_15 = arith.constant 0 : index
      %17 = vector.load %arg6[%c0_14, %c0_15] : memref<256x128xf32, #tpu.memory_space<vmem>>, vector<256x128xf32>
      tpu.vector_store %arg6[%c0_14, %c0_15], %16 {strides = array<i32>} : memref<256x128xf32, #tpu.memory_space<vmem>>, vector<256x128xf32>,
    } else {
    }
    return
  }
  func.func @transform_0(%arg0: i32, %arg1: i32, %arg2: i32) -> (i32, i32) {
    %c0_i32 = arith.constant 0 : i32
    return %arg0, %arg2 : i32, i32
  }
  func.func @transform_1(%arg0: i32, %arg1: i32, %arg2: i32) -> (i32, i32) {
    %c0_i32 = arith.constant 0 : i32
    return %arg2, %arg1 : i32, i32
  }
  func.func @transform_2(%arg0: i32, %arg1: i32, %arg2: i32) -> (i32, i32) {
    %c0_i32 = arith.constant 0 : i32
    %c0_i32_0 = arith.constant 0 : i32
    return %c0_i32, %arg1 : i32, i32
  }
  func.func @transform_3(%arg0: i32, %arg1: i32, %arg2: i32) -> (i32, i32) {
    %c0_i32 = arith.constant 0 : i32
    return %arg0, %arg1 : i32, i32
  }
}

</mosaic_0001>

<llo_original>
// kernel: _lambda_.29
$region0: #{_lambda_.29}
  #allocation0 [shape = 'u32[]', space=smem, size = 0x4, offset = 0x4, fixed_abs, tag = 'smem constant byte address 0x4 - core index']
  #allocation1 [shape = 'u32[144,128]{1,0:T(1,128)}', space=vmem, size = 0x12000, scoped, tag = 'internal scratch']
  %s0 = inlined_call_operand.vmem [shape: f32[512,128], index: 0, kind: input, shape index: {}]
  %s1 = inlined_call_operand.vmem [shape: f32[1,128], index: 1, kind: output, shape index: {0}]
  %s2 = inlined_call_operand.vmem [shape: f32[1,128], index: 2, kind: output, shape index: {1}]
  %3 = xla_tuple %s1, %s2
  %s4 = sld [smem:[#allocation0]]
  $region49: #{_lambda_.29} parent=0
    _
  %s6 = ssub.s32 1, %s4
  %s7 = scalar_select 0, %s6, %s4
  loop: start=0, step=1, limit=4
  $region2: #{_lambda_.29} parent=0 // loop_pre_header
    _
  $region3: #{_lambda_.29} parent=0 // loop_header
    %s9 = sphi 0, %s13
    %p10 = scmp.ge.s32.totalorder %s9, 4
    %s19 = sphi 0, %s21
    %s22 = sphi 0, %s19
    %s23 = sphi 0, %s22
    %s39 = sphi 0, %s23
    %s43 = sphi 0, %s43
    %s45 = sphi 0, %s43
    %s46 = sphi 0, %s45
    %s60 = sphi 0, %s46
    %s64 = sphi 0, %s64
    %s66 = sphi 0, %s64
    %s67 = sphi 0, %s66
    %s81 = sphi 0, %s67
  $region4: #{_lambda_.29} parent=0 // loop_header_branch
    %12 = sbr.rel (%p10) target = $region8
  $region5: #{_lambda_.29} parent=0 // loop_body
    %s14 = ssub.s32 %s9, 1
    %s15 = ssub.s32 %s9, 2
    %s16 = sadd.s32 %s9, 1
    %s17 = ssub.s32 %s9, %s16
    %p18 = scmp.eq.s32.totalorder %s17, 0
    %s20 = sadd.s32 %s19, 1
    %s21 = scalar_select %p18, %s19, %s20
    %p24 = pneg %p18
    %p25 = scmp.eq.s32.totalorder %s9, 1
    %p26 = por %p24, %p25
    %p27 = scmp.ne.s32.totalorder %s19, %s22
    %p28 = scmp.eq.s32.totalorder %s9, 0
    %p29 = por %p27, %p28
    %p30 = scmp.ne.s32.totalorder %s19, %s22
    %p31 = scmp.eq.s32.totalorder %s14, 1
    %p32 = por %p30, %p31
    %p33 = scmp.ne.s32.totalorder %s22, %s23
    %p34 = scmp.eq.s32.totalorder %s14, 0
    %p35 = por %p33, %p34
    %p36 = scmp.ne.s32.totalorder %s22, %s23
    %p37 = scmp.eq.s32.totalorder %s15, 1
    %p38 = por %p36, %p37
    %p40 = scmp.ne.s32.totalorder %s23, %s39
    %p41 = scmp.eq.s32.totalorder %s15, 0
    %p42 = por %p40, %p41
    %s44 = sadd.s32 %s43, 1
    %p47 = scmp.eq.s32.totalorder %s9, 1
    %p48 = scmp.ne.s32.totalorder %s43, %s45
    %p49 = scmp.eq.s32.totalorder %s9, 0
    %p50 = por %p48, %p49
    %p51 = scmp.ne.s32.totalorder %s43, %s45
    %p52 = scmp.eq.s32.totalorder %s14, 1
    %p53 = por %p51, %p52
    %p54 = scmp.ne.s32.totalorder %s45, %s46
    %p55 = scmp.eq.s32.totalorder %s14, 0
    %p56 = por %p54, %p55
    %p57 = scmp.ne.s32.totalorder %s45, %s46
    %p58 = scmp.eq.s32.totalorder %s15, 1
    %p59 = por %p57, %p58
    %p61 = scmp.ne.s32.totalorder %s46, %s60
    %p62 = scmp.eq.s32.totalorder %s15, 0
    %p63 = por %p61, %p62
    %s65 = sadd.s32 %s64, 1
    %p68 = scmp.eq.s32.totalorder %s9, 1
    %p69 = scmp.ne.s32.totalorder %s64, %s66
    %p70 = scmp.eq.s32.totalorder %s9, 0
    %p71 = por %p69, %p70
    %p72 = scmp.ne.s32.totalorder %s64, %s66
    %p73 = scmp.eq.s32.totalorder %s14, 1
    %p74 = por %p72, %p73
    %p75 = scmp.ne.s32.totalorder %s66, %s67
    %p76 = scmp.eq.s32.totalorder %s14, 0
    %p77 = por %p75, %p76
    %p78 = scmp.ne.s32.totalorder %s66, %s67
    %p79 = scmp.eq.s32.totalorder %s15, 1
    %p80 = por %p78, %p79
    %p82 = scmp.ne.s32.totalorder %s67, %s81
    %p83 = scmp.eq.s32.totalorder %s15, 0
    %p84 = por %p82, %p83
    %p85 = scmp.le.s32.totalorder 1, %s9
    %p86 = scmp.lt.s32.totalorder %s9, 3
    %p87 = pnand %p85, %p86
    %p88 = pneg %p87
    // Predicated region
    $region9: #{_lambda_.29} parent=5 // pred_check
      _
    $region10: #{_lambda_.29} parent=5 // pred_check_branch
      %90 = sbr.rel (%p87) target = $region12
    $region11: #{_lambda_.29} parent=5 // pred_region
      %s91 = ssub.s32 %s9, 1
    $region12: #{_lambda_.29} parent=5 // pred_fallthru
      _
    %p92 = scmp.lt.s32.totalorder %s9, 2
    // Predicated region
    $region13: #{_lambda_.29} parent=5 // pred_check
      %p93 = pneg %p92
    $region14: #{_lambda_.29} parent=5 // pred_check_branch
      %95 = sbr.rel (%p93) target = $region16
    $region15: #{_lambda_.29} parent=5 // pred_region
      // Predicated region
      $region17: #{_lambda_.29} parent=15 // pred_check
        %p96 = pneg %p29
      $region18: #{_lambda_.29} parent=15 // pred_check_branch
        %98 = sbr.rel (%p96) target = $region20
      $region19: #{_lambda_.29} parent=15 // pred_region
        %s99 = smul.u32 32, %s9
        %p100 = scmp.lt.s32.totalorder %s99, 63
        %s101 = scalar_select %p100, %s99, 63
        %s102 = smul.addr %s101, 8
        %s103 = scalar_lea.vmem %s0, %s102
        %s104 = smul.u32 32, %s9
      $region20: #{_lambda_.29} parent=15 // pred_fallthru
        _
    $region16: #{_lambda_.29} parent=5 // pred_fallthru
      _
    %p105 = scmp.le.s32.totalorder 1, %s9
    %p106 = scmp.lt.s32.totalorder %s9, 3
    %p107 = pnand %p105, %p106
    %p108 = pneg %p107
    // Predicated region
    $region21: #{_lambda_.29} parent=5 // pred_check
      _
    $region22: #{_lambda_.29} parent=5 // pred_check_branch
      %110 = sbr.rel (%p107) target = $region24
    $region23: #{_lambda_.29} parent=5 // pred_region
      %s111 = ssub.s32 %s9, 1
      %s112 = smul.u32 32, %s14
      %p113 = scmp.lt.s32.totalorder %s112, 63
      %s114 = scalar_select %p113, %s112, 63
      %s115 = smul.addr %s114, 8
      %s116 = scalar_lea.vmem %s0, %s115
      %p117 = pneg %p35
      %p118 = pneg %p32
      %p119 = pneg %p56
      %p120 = pneg %p53
      %p121 = pneg %p77
      %p122 = pneg %p74
      %s123 = smul.u32 32, %s14
      %p124 = scmp.lt.s32.totalorder %s123, 63
      %s125 = scalar_select %p124, %s123, 63
      %s126 = smul.addr %s125, 8
      %s127 = scalar_lea.vmem %s0, %s126
      %s128 = smul.u32 32, %s14
      %p129 = scmp.eq.s32.totalorder %s14, 0
      // Predicated region
      $region25: #{_lambda_.29} parent=23 // pred_check
        %p130 = pneg %p129
      $region26: #{_lambda_.29} parent=23 // pred_check_branch
        %132 = sbr.rel (%p130) target = $region28
      $region27: #{_lambda_.29} parent=23 // pred_region
        %133 = vst [vmem:[%s1] sm:$0x1] 0.0
        %134 = vst [vmem:[%s2] sm:$0x1] 0.0
      $region28: #{_lambda_.29} parent=23 // pred_fallthru
        _
      %v135 = vld [vmem:[%s127] sm:$0xff]
      %v136 = vld [vmem:[%s127 + $0x8] sm:$0xff]
      %v137 = vld [vmem:[%s127 + $0x10] sm:$0xff]
      %v138 = vld [vmem:[%s127 + $0x18] sm:$0xff]
      %v139 = vld [vmem:[%s127 + $0x20] sm:$0xff]
      %v140 = vld [vmem:[%s127 + $0x28] sm:$0xff]
      %v141 = vld [vmem:[%s127 + $0x30] sm:$0xff]
      %v142 = vld [vmem:[%s127 + $0x38] sm:$0xff]
      %v143 = vld [vmem:[%s127 + $0x40] sm:$0xff]
      %v144 = vld [vmem:[%s127 + $0x48] sm:$0xff]
      %v145 = vld [vmem:[%s127 + $0x50] sm:$0xff]
      %v146 = vld [vmem:[%s127 + $0x58] sm:$0xff]
      %v147 = vld [vmem:[%s127 + $0x60] sm:$0xff]
      %v148 = vld [vmem:[%s127 + $0x68] sm:$0xff]
      %v149 = vld [vmem:[%s127 + $0x70] sm:$0xff]
      %v150 = vld [vmem:[%s127 + $0x78] sm:$0xff]
      %v151 = vld [vmem:[%s127 + $0x80] sm:$0xff]
      %v152 = vld [vmem:[%s127 + $0x88] sm:$0xff]
      %v153 = vld [vmem:[%s127 + $0x90] sm:$0xff]
      %v154 = vld [vmem:[%s127 + $0x98] sm:$0xff]
      %v155 = vld [vmem:[%s127 + $0xa0] sm:$0xff]
      %v156 = vld [vmem:[%s127 + $0xa8] sm:$0xff]
      %v157 = vld [vmem:[%s127 + $0xb0] sm:$0xff]
      %v158 = vld [vmem:[%s127 + $0xb8] sm:$0xff]
      %v159 = vld [vmem:[%s127 + $0xc0] sm:$0xff]
      %v160 = vld [vmem:[%s127 + $0xc8] sm:$0xff]
      %v161 = vld [vmem:[%s127 + $0xd0] sm:$0xff]
      %v162 = vld [vmem:[%s127 + $0xd8] sm:$0xff]
      %v163 = vld [vmem:[%s127 + $0xe0] sm:$0xff]
      %v164 = vld [vmem:[%s127 + $0xe8] sm:$0xff]
      %v165 = vld [vmem:[%s127 + $0xf0] sm:$0xff]
      %v166 = vld [vmem:[%s127 + $0xf8] sm:$0xff]
      %v167 = vld [vmem:[%s1] sm:$0x1]
      %v168 = vadd.f32 %v135, %v136
      %v169 = vadd.f32 %v168, %v137
      %v170 = vadd.f32 %v169, %v138
      %v171 = vadd.f32 %v170, %v139
      %v172 = vadd.f32 %v171, %v140
      %v173 = vadd.f32 %v172, %v141
      %v174 = vadd.f32 %v173, %v142
      %v175 = vadd.f32 %v174, %v143
      %v176 = vadd.f32 %v175, %v144
      %v177 = vadd.f32 %v176, %v145
      %v178 = vadd.f32 %v177, %v146
      %v179 = vadd.f32 %v178, %v147
      %v180 = vadd.f32 %v179, %v148
      %v181 = vadd.f32 %v180, %v149
      %v182 = vadd.f32 %v181, %v150
      %v183 = vadd.f32 %v182, %v151
      %v184 = vadd.f32 %v183, %v152
      %v185 = vadd.f32 %v184, %v153
      %v186 = vadd.f32 %v185, %v154
      %v187 = vadd.f32 %v186, %v155
      %v188 = vadd.f32 %v187, %v156
      %v189 = vadd.f32 %v188, %v157
      %v190 = vadd.f32 %v189, %v158
      %v191 = vadd.f32 %v190, %v159
      %v192 = vadd.f32 %v191, %v160
      %v193 = vadd.f32 %v192, %v161
      %v194 = vadd.f32 %v193, %v162
      %v195 = vadd.f32 %v194, %v163
      %v196 = vadd.f32 %v195, %v164
      %v197 = vadd.f32 %v196, %v165
      %v198 = vadd.f32 %v197, %v166
      %v199 = vrot.slane %v198, 4
      %v200 = vadd.f32 %v198, %v199
      %v201 = vrot.slane %v200, 2
      %v202 = vadd.f32 %v200, %v201
      %v203 = vrot.slane %v202, 1
      %v204 = vadd.f32 %v202, %v203
      %v205 = vadd.f32 %v167, %v204
      %206 = vst [vmem:[%s1] sm:$0x1] %v205
      %v207 = vld [vmem:[%s2] sm:$0x1]
      %v208 = vmul.f32 %v135, %v135
      %v209 = vmul.f32 %v136, %v136
      %v210 = vmul.f32 %v137, %v137
      %v211 = vmul.f32 %v138, %v138
      %v212 = vmul.f32 %v139, %v139
      %v213 = vmul.f32 %v140, %v140
      %v214 = vmul.f32 %v141, %v141
      %v215 = vmul.f32 %v142, %v142
      %v216 = vmul.f32 %v143, %v143
      %v217 = vmul.f32 %v144, %v144
      %v218 = vmul.f32 %v145, %v145
      %v219 = vmul.f32 %v146, %v146
      %v220 = vmul.f32 %v147, %v147
      %v221 = vmul.f32 %v148, %v148
      %v222 = vmul.f32 %v149, %v149
      %v223 = vmul.f32 %v150, %v150
      %v224 = vmul.f32 %v151, %v151
      %v225 = vmul.f32 %v152, %v152
      %v226 = vmul.f32 %v153, %v153
      %v227 = vmul.f32 %v154, %v154
      %v228 = vmul.f32 %v155, %v155
      %v229 = vmul.f32 %v156, %v156
      %v230 = vmul.f32 %v157, %v157
      %v231 = vmul.f32 %v158, %v158
      %v232 = vmul.f32 %v159, %v159
      %v233 = vmul.f32 %v160, %v160
      %v234 = vmul.f32 %v161, %v161
      %v235 = vmul.f32 %v162, %v162
      %v236 = vmul.f32 %v163, %v163
      %v237 = vmul.f32 %v164, %v164
      %v238 = vmul.f32 %v165, %v165
      %v239 = vmul.f32 %v166, %v166
      %v240 = vadd.f32 %v208, %v209
      %v241 = vadd.f32 %v240, %v210
      %v242 = vadd.f32 %v241, %v211
      %v243 = vadd.f32 %v242, %v212
      %v244 = vadd.f32 %v243, %v213
      %v245 = vadd.f32 %v244, %v214
      %v246 = vadd.f32 %v245, %v215
      %v247 = vadd.f32 %v246, %v216
      %v248 = vadd.f32 %v247, %v217
      %v249 = vadd.f32 %v248, %v218
      %v250 = vadd.f32 %v249, %v219
      %v251 = vadd.f32 %v250, %v220
      %v252 = vadd.f32 %v251, %v221
      %v253 = vadd.f32 %v252, %v222
      %v254 = vadd.f32 %v253, %v223
      %v255 = vadd.f32 %v254, %v224
      %v256 = vadd.f32 %v255, %v225
      %v257 = vadd.f32 %v256, %v226
      %v258 = vadd.f32 %v257, %v227
      %v259 = vadd.f32 %v258, %v228
      %v260 = vadd.f32 %v259, %v229
      %v261 = vadd.f32 %v260, %v230
      %v262 = vadd.f32 %v261, %v231
      %v263 = vadd.f32 %v262, %v232
      %v264 = vadd.f32 %v263, %v233
      %v265 = vadd.f32 %v264, %v234
      %v266 = vadd.f32 %v265, %v235
      %v267 = vadd.f32 %v266, %v236
      %v268 = vadd.f32 %v267, %v237
      %v269 = vadd.f32 %v268, %v238
      %v270 = vadd.f32 %v269, %v239
      %v271 = vrot.slane %v270, 4
      %v272 = vadd.f32 %v270, %v271
      %v273 = vrot.slane %v272, 2
      %v274 = vadd.f32 %v272, %v273
      %v275 = vrot.slane %v274, 1
      %v276 = vadd.f32 %v274, %v275
      %v277 = vadd.f32 %v207, %v276
      %278 = vst [vmem:[%s2] sm:$0x1] %v277
      // Predicated region
      $region29: #{_lambda_.29} parent=23 // pred_check
        %p279 = pneg %p53
      $region30: #{_lambda_.29} parent=23 // pred_check_branch
        %281 = sbr.rel (%p279) target = $region32
      $region31: #{_lambda_.29} parent=23 // pred_region
        _
      $region32: #{_lambda_.29} parent=23 // pred_fallthru
        _
      // Predicated region
      $region33: #{_lambda_.29} parent=23 // pred_check
        %p282 = pneg %p74
      $region34: #{_lambda_.29} parent=23 // pred_check_branch
        %284 = sbr.rel (%p282) target = $region36
      $region35: #{_lambda_.29} parent=23 // pred_region
        _
      $region36: #{_lambda_.29} parent=23 // pred_fallthru
        _
      // Predicated region
      $region37: #{_lambda_.29} parent=23 // pred_check
        %p285 = pneg %p53
      $region38: #{_lambda_.29} parent=23 // pred_check_branch
        %287 = sbr.rel (%p285) target = $region40
      $region39: #{_lambda_.29} parent=23 // pred_region
        _
      $region40: #{_lambda_.29} parent=23 // pred_fallthru
        _
      // Predicated region
      $region41: #{_lambda_.29} parent=23 // pred_check
        %p288 = pneg %p74
      $region42: #{_lambda_.29} parent=23 // pred_check_branch
        %290 = sbr.rel (%p288) target = $region44
      $region43: #{_lambda_.29} parent=23 // pred_region
        _
      $region44: #{_lambda_.29} parent=23 // pred_fallthru
        _
    $region24: #{_lambda_.29} parent=5 // pred_fallthru
      _
    %p291 = scmp.le.s32.totalorder 2, %s9
    // Predicated region
    $region45: #{_lambda_.29} parent=5 // pred_check
      %p292 = pneg %p291
    $region46: #{_lambda_.29} parent=5 // pred_check_branch
      %294 = sbr.rel (%p292) target = $region48
    $region47: #{_lambda_.29} parent=5 // pred_region
      %s295 = ssub.s32 %s9, 2
    $region48: #{_lambda_.29} parent=5 // pred_fallthru
      _
  $region6: #{_lambda_.29} parent=0 // loop_footer
    %s13 = sadd.s32 1, %s9
  $region7: #{_lambda_.29} parent=0 // loop_footer_branch
    %8 = sbr.rel target = $region3
  $region8: #{_lambda_.29} parent=0 // loop_exit
    _

// kernel: _lambda_.28
$region0: #{_lambda_.28}
  #allocation0 [shape = 'u32[]', space=smem, size = 0x4, offset = 0x4, fixed_abs, tag = 'smem constant byte address 0x4 - core index']
  #allocation1 [shape = 'u32[144,128]{1,0:T(1,128)}', space=vmem, size = 0x12000, scoped, tag = 'internal scratch']
  #allocation2 [shape = 'f32[256,128]{1,0:T(8,128)}', space=vmem, size = 0x20000, scoped, tag = 'scratch operand']
  %s0 = inlined_call_operand.vmem [shape: bf16[512,256], index: 0, kind: input, shape index: {}]
  %s1 = inlined_call_operand.vmem [shape: bf16[256,128], index: 1, kind: input, shape index: {}]
  %s2 = inlined_call_operand.vmem [shape: f32[1,128], index: 2, kind: input, shape index: {}]
  %s3 = inlined_call_operand.vmem [shape: f32[512,128], index: 3, kind: output, shape index: {}]
  %s4 = sld [smem:[#allocation0]]
  $region53: #{_lambda_.28} parent=0
    _
  %s6 = ssub.s32 1, %s4
  %s7 = scalar_select 0, %s6, %s4
  loop: start=0, step=1, limit=4
  $region2: #{_lambda_.28} parent=0 // loop_pre_header
    _
  $region3: #{_lambda_.28} parent=0 // loop_header
    %s9 = sphi 0, %s13
    %p10 = scmp.ge.s32.totalorder %s9, 4
    %s16 = sphi 0, %s35
    %s17 = sphi 0, %s31
    %s18 = sphi 0, %s27
    %s19 = sphi 0, %s16
    %s20 = sphi 0, %s17
    %s21 = sphi 0, %s18
    %s22 = sphi 0, %s19
    %s23 = sphi 0, %s20
    %s24 = sphi 0, %s21
    %s40 = sphi 0, %s42
    %s43 = sphi 0, %s40
    %s44 = sphi 0, %s43
    %s60 = sphi 0, %s44
    %s68 = sphi 0, %s70
    %s71 = sphi 0, %s68
    %s72 = sphi 0, %s71
    %s88 = sphi 0, %s72
    %s94 = sphi 0, %s96
    %s97 = sphi 0, %s94
    %s98 = sphi 0, %s97
    %s114 = sphi 0, %s98
    %s122 = sphi 0, %s124
    %s125 = sphi 0, %s122
    %s126 = sphi 0, %s125
    %s142 = sphi 0, %s126
  $region4: #{_lambda_.28} parent=0 // loop_header_branch
    %12 = sbr.rel (%p10) target = $region8
  $region5: #{_lambda_.28} parent=0 // loop_body
    %s14 = ssub.s32 %s9, 1
    %s15 = ssub.s32 %s9, 2
    %s25 = sadd.s32 1, %s18
    %p26 = scmp.ge.s32.totalorder %s25, 1
    %s27 = scalar_select %p26, 0, %s25
    %s28 = sadd.s32 1, %s17
    %s29 = scalar_select %p26, %s28, %s17
    %p30 = scmp.ge.s32.totalorder %s29, 1
    %s31 = scalar_select %p30, 0, %s29
    %s32 = sadd.s32 1, %s16
    %s33 = scalar_select %p30, %s32, %s16
    %p34 = scmp.ge.s32.totalorder %s33, 2
    %s35 = scalar_select %p34, 0, %s33
    %s36 = ssub.s32 %s16, %s35
    %s37 = ssub.s32 %s18, %s27
    %s38 = sor.u32 %s36, %s37
    %p39 = scmp.eq.s32.totalorder %s38, 0
    %s41 = sadd.s32 %s40, 1
    %s42 = scalar_select %p39, %s40, %s41
    %p45 = pneg %p39
    %p46 = scmp.eq.s32.totalorder %s9, 1
    %p47 = por %p45, %p46
    %p48 = scmp.ne.s32.totalorder %s40, %s43
    %p49 = scmp.eq.s32.totalorder %s9, 0
    %p50 = por %p48, %p49
    %p51 = scmp.ne.s32.totalorder %s40, %s43
    %p52 = scmp.eq.s32.totalorder %s14, 1
    %p53 = por %p51, %p52
    %p54 = scmp.ne.s32.totalorder %s43, %s44
    %p55 = scmp.eq.s32.totalorder %s14, 0
    %p56 = por %p54, %p55
    %p57 = scmp.ne.s32.totalorder %s43, %s44
    %p58 = scmp.eq.s32.totalorder %s15, 1
    %p59 = por %p57, %p58
    %p61 = scmp.ne.s32.totalorder %s44, %s60
    %p62 = scmp.eq.s32.totalorder %s15, 0
    %p63 = por %p61, %p62
    %s64 = ssub.s32 %s18, %s27
    %s65 = ssub.s32 %s17, %s31
    %s66 = sor.u32 %s64, %s65
    %p67 = scmp.eq.s32.totalorder %s66, 0
    %s69 = sadd.s32 %s68, 1
    %s70 = scalar_select %p67, %s68, %s69
    %p73 = pneg %p67
    %p74 = scmp.eq.s32.totalorder %s9, 1
    %p75 = por %p73, %p74
    %p76 = scmp.ne.s32.totalorder %s68, %s71
    %p77 = scmp.eq.s32.totalorder %s9, 0
    %p78 = por %p76, %p77
    %p79 = scmp.ne.s32.totalorder %s68, %s71
    %p80 = scmp.eq.s32.totalorder %s14, 1
    %p81 = por %p79, %p80
    %p82 = scmp.ne.s32.totalorder %s71, %s72
    %p83 = scmp.eq.s32.totalorder %s14, 0
    %p84 = por %p82, %p83
    %p85 = scmp.ne.s32.totalorder %s71, %s72
    %p86 = scmp.eq.s32.totalorder %s15, 1
    %p87 = por %p85, %p86
    %p89 = scmp.ne.s32.totalorder %s72, %s88
    %p90 = scmp.eq.s32.totalorder %s15, 0
    %p91 = por %p89, %p90
    %s92 = ssub.s32 %s17, %s31
    %p93 = scmp.eq.s32.totalorder %s92, 0
    %s95 = sadd.s32 %s94, 1
    %s96 = scalar_select %p93, %s94, %s95
    %p99 = pneg %p93
    %p100 = scmp.eq.s32.totalorder %s9, 1
    %p101 = por %p99, %p100
    %p102 = scmp.ne.s32.totalorder %s94, %s97
    %p103 = scmp.eq.s32.totalorder %s9, 0
    %p104 = por %p102, %p103
    %p105 = scmp.ne.s32.totalorder %s94, %s97
    %p106 = scmp.eq.s32.totalorder %s14, 1
    %p107 = por %p105, %p106
    %p108 = scmp.ne.s32.totalorder %s97, %s98
    %p109 = scmp.eq.s32.totalorder %s14, 0
    %p110 = por %p108, %p109
    %p111 = scmp.ne.s32.totalorder %s97, %s98
    %p112 = scmp.eq.s32.totalorder %s15, 1
    %p113 = por %p111, %p112
    %p115 = scmp.ne.s32.totalorder %s98, %s114
    %p116 = scmp.eq.s32.totalorder %s15, 0
    %p117 = por %p115, %p116
    %s118 = ssub.s32 %s16, %s35
    %s119 = ssub.s32 %s17, %s31
    %s120 = sor.u32 %s118, %s119
    %p121 = scmp.eq.s32.totalorder %s120, 0
    %s123 = sadd.s32 %s122, 1
    %s124 = scalar_select %p121, %s122, %s123
    %p127 = pneg %p121
    %p128 = scmp.eq.s32.totalorder %s9, 1
    %p129 = por %p127, %p128
    %p130 = scmp.ne.s32.totalorder %s122, %s125
    %p131 = scmp.eq.s32.totalorder %s9, 0
    %p132 = por %p130, %p131
    %p133 = scmp.ne.s32.totalorder %s122, %s125
    %p134 = scmp.eq.s32.totalorder %s14, 1
    %p135 = por %p133, %p134
    %p136 = scmp.ne.s32.totalorder %s125, %s126
    %p137 = scmp.eq.s32.totalorder %s14, 0
    %p138 = por %p136, %p137
    %p139 = scmp.ne.s32.totalorder %s125, %s126
    %p140 = scmp.eq.s32.totalorder %s15, 1
    %p141 = por %p139, %p140
    %p143 = scmp.ne.s32.totalorder %s126, %s142
    %p144 = scmp.eq.s32.totalorder %s15, 0
    %p145 = por %p143, %p144
    %p146 = scmp.le.s32.totalorder 1, %s9
    %p147 = scmp.lt.s32.totalorder %s9, 3
    %p148 = pnand %p146, %p147
    %p149 = pneg %p148
    // Predicated region
    $region9: #{_lambda_.28} parent=5 // pred_check
      _
    $region10: #{_lambda_.28} parent=5 // pred_check_branch
      %151 = sbr.rel (%p148) target = $region12
    $region11: #{_lambda_.28} parent=5 // pred_region
      %s152 = ssub.s32 %s9, 1
      // Predicated region
      $region13: #{_lambda_.28} parent=11 // pred_check
        %p153 = pneg %p84
      $region14: #{_lambda_.28} parent=11 // pred_check_branch
        %155 = sbr.rel (%p153) target = $region16
      $region15: #{_lambda_.28} parent=11 // pred_region
        %s156 = smul.u32 32, %s21
        %p157 = scmp.lt.s32.totalorder %s156, 31
        %s158 = scalar_select %p157, %s156, 31
        %p159 = scmp.lt.s32.totalorder %s20, 0
        %s160 = scalar_select %p159, %s20, 0
        %s161 = sadd.s32 %s160, %s158
        %s162 = smul.addr %s161, 4
        %s163 = scalar_lea.vmem %s1, %s162
        %s164 = smul.u32 32, %s21
      $region16: #{_lambda_.28} parent=11 // pred_fallthru
        _
      // Predicated region
      $region17: #{_lambda_.28} parent=11 // pred_check
        %p165 = pneg %p110
      $region18: #{_lambda_.28} parent=11 // pred_check_branch
        %167 = sbr.rel (%p165) target = $region20
      $region19: #{_lambda_.28} parent=11 // pred_region
        %p168 = scmp.lt.s32.totalorder %s20, 0
        %s169 = scalar_select %p168, %s20, 0
        %s170 = scalar_lea.vmem %s2, %s169
      $region20: #{_lambda_.28} parent=11 // pred_fallthru
        _
    $region12: #{_lambda_.28} parent=5 // pred_fallthru
      _
    %p171 = scmp.lt.s32.totalorder %s9, 2
    // Predicated region
    $region21: #{_lambda_.28} parent=5 // pred_check
      %p172 = pneg %p171
    $region22: #{_lambda_.28} parent=5 // pred_check_branch
      %174 = sbr.rel (%p172) target = $region24
    $region23: #{_lambda_.28} parent=5 // pred_region
      // Predicated region
      $region25: #{_lambda_.28} parent=23 // pred_check
        %p175 = pneg %p50
      $region26: #{_lambda_.28} parent=23 // pred_check_branch
        %177 = sbr.rel (%p175) target = $region28
      $region27: #{_lambda_.28} parent=23 // pred_region
        %s178 = smul.u32 32, %s16
        %s179 = smul.u32 2, %s18
        %p180 = scmp.lt.s32.totalorder %s178, 63
        %s181 = scalar_select %p180, %s178, 63
        %p182 = scmp.lt.s32.totalorder %s179, 1
        %s183 = scalar_select %p182, %s179, 1
        %s184 = smul.addr %s181, 2
        %s185 = sadd.s32 %s183, %s184
        %s186 = smul.addr %s185, 4
        %s187 = scalar_lea.vmem %s0, %s186
        %s188 = smul.u32 32, %s16
        %s189 = smul.u32 2, %s18
      $region28: #{_lambda_.28} parent=23 // pred_fallthru
        _
    $region24: #{_lambda_.28} parent=5 // pred_fallthru
      _
    %p190 = scmp.le.s32.totalorder 1, %s9
    %p191 = scmp.lt.s32.totalorder %s9, 3
    %p192 = pnand %p190, %p191
    %p193 = pneg %p192
    // Predicated region
    $region29: #{_lambda_.28} parent=5 // pred_check
      _
    $region30: #{_lambda_.28} parent=5 // pred_check_branch
      %195 = sbr.rel (%p192) target = $region32
    $region31: #{_lambda_.28} parent=5 // pred_region
      %s196 = ssub.s32 %s9, 1
      %s197 = smul.u32 32, %s19
      %s198 = smul.u32 2, %s21
      %p199 = scmp.lt.s32.totalorder %s197, 63
      %s200 = scalar_select %p199, %s197, 63
      %p201 = scmp.lt.s32.totalorder %s198, 1
      %s202 = scalar_select %p201, %s198, 1
      %s203 = smul.addr %s200, 2
      %s204 = sadd.s32 %s202, %s203
      %s205 = smul.addr %s204, 4
      %s206 = scalar_lea.vmem %s0, %s205
      %p207 = pneg %p56
      %p208 = pneg %p53
      %s209 = smul.u32 32, %s21
      %p210 = scmp.lt.s32.totalorder %s209, 31
      %s211 = scalar_select %p210, %s209, 31
      %p212 = scmp.lt.s32.totalorder %s20, 0
      %s213 = scalar_select %p212, %s20, 0
      %s214 = sadd.s32 %s213, %s211
      %s215 = smul.addr %s214, 4
      %s216 = scalar_lea.vmem %s1, %s215
      %p217 = pneg %p84
      %p218 = pneg %p81
      %p219 = scmp.lt.s32.totalorder %s20, 0
      %s220 = scalar_select %p219, %s20, 0
      %s221 = scalar_lea.vmem %s2, %s220
      %p222 = pneg %p110
      %p223 = pneg %p107
      %p224 = pneg %p138
      %p225 = pneg %p135
      %s226 = smul.u32 32, %s19
      %p227 = scmp.lt.s32.totalorder %s226, 63
      %s228 = scalar_select %p227, %s226, 63
      %p229 = scmp.lt.s32.totalorder %s20, 0
      %s230 = scalar_select %p229, %s20, 0
      %s231 = sadd.s32 %s230, %s228
      %s232 = smul.addr %s231, 8
      %s233 = scalar_lea.vmem %s3, %s232
      %s234 = smul.u32 32, %s19
      %s235 = smul.u32 2, %s21
      %p236 = scmp.lt.s32.totalorder %s234, 63
      %s237 = scalar_select %p236, %s234, 63
      %p238 = scmp.lt.s32.totalorder %s235, 1
      %s239 = scalar_select %p238, %s235, 1
      %s240 = smul.addr %s237, 2
      %s241 = sadd.s32 %s239, %s240
      %s242 = smul.addr %s241, 4
      %s243 = scalar_lea.vmem %s0, %s242
      %s244 = smul.u32 32, %s19
      %s245 = smul.u32 2, %s21
      %s246 = smul.u32 32, %s21
      %p247 = scmp.lt.s32.totalorder %s246, 31
      %s248 = scalar_select %p247, %s246, 31
      %p249 = scmp.lt.s32.totalorder %s20, 0
      %s250 = scalar_select %p249, %s20, 0
      %s251 = sadd.s32 %s250, %s248
      %s252 = smul.addr %s251, 4
      %s253 = scalar_lea.vmem %s1, %s252
      %s254 = smul.u32 32, %s21
      %p255 = scmp.lt.s32.totalorder %s20, 0
      %s256 = scalar_select %p255, %s20, 0
      %s257 = scalar_lea.vmem %s2, %s256
      %s258 = smul.u32 32, %s19
      %p259 = scmp.lt.s32.totalorder %s258, 63
      %s260 = scalar_select %p259, %s258, 63
      %p261 = scmp.lt.s32.totalorder %s20, 0
      %s262 = scalar_select %p261, %s20, 0
      %s263 = sadd.s32 %s262, %s260
      %s264 = smul.addr %s263, 8
      %s265 = scalar_lea.vmem %s3, %s264
      %s266 = smul.u32 32, %s19
      %p268 = scmp.eq.s32.totalorder %s21, 0
      // Predicated region
      $region33: #{_lambda_.28} parent=31 // pred_check
        %p269 = pneg %p268
      $region34: #{_lambda_.28} parent=31 // pred_check_branch
        %271 = sbr.rel (%p269) target = $region36
      $region35: #{_lambda_.28} parent=31 // pred_region
        %272 = vst [vmem:[#allocation2] sm:$0xff] 0.0
        %273 = vst [vmem:[#allocation2 + $0x8] sm:$0xff] 0.0
        %274 = vst [vmem:[#allocation2 + $0x10] sm:$0xff] 0.0
        %275 = vst [vmem:[#allocation2 + $0x18] sm:$0xff] 0.0
        %276 = vst [vmem:[#allocation2 + $0x20] sm:$0xff] 0.0
        %277 = vst [vmem:[#allocation2 + $0x28] sm:$0xff] 0.0
        %278 = vst [vmem:[#allocation2 + $0x30] sm:$0xff] 0.0
        %279 = vst [vmem:[#allocation2 + $0x38] sm:$0xff] 0.0
        %280 = vst [vmem:[#allocation2 + $0x40] sm:$0xff] 0.0
        %281 = vst [vmem:[#allocation2 + $0x48] sm:$0xff] 0.0
        %282 = vst [vmem:[#allocation2 + $0x50] sm:$0xff] 0.0
        %283 = vst [vmem:[#allocation2 + $0x58] sm:$0xff] 0.0
        %284 = vst [vmem:[#allocation2 + $0x60] sm:$0xff] 0.0
        %285 = vst [vmem:[#allocation2 + $0x68] sm:$0xff] 0.0
        %286 = vst [vmem:[#allocation2 + $0x70] sm:$0xff] 0.0
        %287 = vst [vmem:[#allocation2 + $0x78] sm:$0xff] 0.0
        %288 = vst [vmem:[#allocation2 + $0x80] sm:$0xff] 0.0
        %289 = vst [vmem:[#allocation2 + $0x88] sm:$0xff] 0.0
        %290 = vst [vmem:[#allocation2 + $0x90] sm:$0xff] 0.0
        %291 = vst [vmem:[#allocation2 + $0x98] sm:$0xff] 0.0
        %292 = vst [vmem:[#allocation2 + $0xa0] sm:$0xff] 0.0
        %293 = vst [vmem:[#allocation2 + $0xa8] sm:$0xff] 0.0
        %294 = vst [vmem:[#allocation2 + $0xb0] sm:$0xff] 0.0
        %295 = vst [vmem:[#allocation2 + $0xb8] sm:$0xff] 0.0
        %296 = vst [vmem:[#allocation2 + $0xc0] sm:$0xff] 0.0
        %297 = vst [vmem:[#allocation2 + $0xc8] sm:$0xff] 0.0
        %298 = vst [vmem:[#allocation2 + $0xd0] sm:$0xff] 0.0
        %299 = vst [vmem:[#allocation2 + $0xd8] sm:$0xff] 0.0
        %300 = vst [vmem:[#allocation2 + $0xe0] sm:$0xff] 0.0
        %301 = vst [vmem:[#allocation2 + $0xe8] sm:$0xff] 0.0
        %302 = vst [vmem:[#allocation2 + $0xf0] sm:$0xff] 0.0
        %303 = vst [vmem:[#allocation2 + $0xf8] sm:$0xff] 0.0
      $region36: #{_lambda_.28} parent=31 // pred_fallthru
        _
      %v304 = vld [vmem:[#allocation2] sm:$0xff]
      %v305 = vld [vmem:[#allocation2 + $0x8] sm:$0xff]
      %v306 = vld [vmem:[#allocation2 + $0x10] sm:$0xff]
      %v307 = vld [vmem:[#allocation2 + $0x18] sm:$0xff]
      %v308 = vld [vmem:[#allocation2 + $0x20] sm:$0xff]
      %v309 = vld [vmem:[#allocation2 + $0x28] sm:$0xff]
      %v310 = vld [vmem:[#allocation2 + $0x30] sm:$0xff]
      %v311 = vld [vmem:[#allocation2 + $0x38] sm:$0xff]
      %v312 = vld [vmem:[#allocation2 + $0x40] sm:$0xff]
      %v313 = vld [vmem:[#allocation2 + $0x48] sm:$0xff]
      %v314 = vld [vmem:[#allocation2 + $0x50] sm:$0xff]
      %v315 = vld [vmem:[#allocation2 + $0x58] sm:$0xff]
      %v316 = vld [vmem:[#allocation2 + $0x60] sm:$0xff]
      %v317 = vld [vmem:[#allocation2 + $0x68] sm:$0xff]
      %v318 = vld [vmem:[#allocation2 + $0x70] sm:$0xff]
      %v319 = vld [vmem:[#allocation2 + $0x78] sm:$0xff]
      %v320 = vld [vmem:[#allocation2 + $0x80] sm:$0xff]
      %v321 = vld [vmem:[#allocation2 + $0x88] sm:$0xff]
      %v322 = vld [vmem:[#allocation2 + $0x90] sm:$0xff]
      %v323 = vld [vmem:[#allocation2 + $0x98] sm:$0xff]
      %v324 = vld [vmem:[#allocation2 + $0xa0] sm:$0xff]
      %v325 = vld [vmem:[#allocation2 + $0xa8] sm:$0xff]
      %v326 = vld [vmem:[#allocation2 + $0xb0] sm:$0xff]
      %v327 = vld [vmem:[#allocation2 + $0xb8] sm:$0xff]
      %v328 = vld [vmem:[#allocation2 + $0xc0] sm:$0xff]
      %v329 = vld [vmem:[#allocation2 + $0xc8] sm:$0xff]
      %v330 = vld [vmem:[#allocation2 + $0xd0] sm:$0xff]
      %v331 = vld [vmem:[#allocation2 + $0xd8] sm:$0xff]
      %v332 = vld [vmem:[#allocation2 + $0xe0] sm:$0xff]
      %v333 = vld [vmem:[#allocation2 + $0xe8] sm:$0xff]
      %v334 = vld [vmem:[#allocation2 + $0xf0] sm:$0xff]
      %v335 = vld [vmem:[#allocation2 + $0xf8] sm:$0xff]
      %v336 = vld [vmem:[%s243] sm:$0xff]
      %v337 = vld [vmem:[%s243 + $0x8] sm:$0xff]
      %v338 = vld [vmem:[%s243 + $0x10] sm:$0xff]
      %v339 = vld [vmem:[%s243 + $0x18] sm:$0xff]
      %v340 = vld [vmem:[%s243 + $0x20] sm:$0xff]
      %v341 = vld [vmem:[%s243 + $0x28] sm:$0xff]
      %v342 = vld [vmem:[%s243 + $0x30] sm:$0xff]
      %v343 = vld [vmem:[%s243 + $0x38] sm:$0xff]
      %v344 = vld [vmem:[%s243 + $0x40] sm:$0xff]
      %v345 = vld [vmem:[%s243 + $0x48] sm:$0xff]
      %v346 = vld [vmem:[%s243 + $0x50] sm:$0xff]
      %v347 = vld [vmem:[%s243 + $0x58] sm:$0xff]
      %v348 = vld [vmem:[%s243 + $0x60] sm:$0xff]
      %v349 = vld [vmem:[%s243 + $0x68] sm:$0xff]
      %v350 = vld [vmem:[%s243 + $0x70] sm:$0xff]
      %v351 = vld [vmem:[%s243 + $0x78] sm:$0xff]
      %v352 = vld [vmem:[%s243 + $0x80] sm:$0xff]
      %v353 = vld [vmem:[%s243 + $0x88] sm:$0xff]
      %v354 = vld [vmem:[%s243 + $0x90] sm:$0xff]
      %v355 = vld [vmem:[%s243 + $0x98] sm:$0xff]
      %v356 = vld [vmem:[%s243 + $0xa0] sm:$0xff]
      %v357 = vld [vmem:[%s243 + $0xa8] sm:$0xff]
      %v358 = vld [vmem:[%s243 + $0xb0] sm:$0xff]
      %v359 = vld [vmem:[%s243 + $0xb8] sm:$0xff]
      %v360 = vld [vmem:[%s243 + $0xc0] sm:$0xff]
      %v361 = vld [vmem:[%s243 + $0xc8] sm:$0xff]
      %v362 = vld [vmem:[%s243 + $0xd0] sm:$0xff]
      %v363 = vld [vmem:[%s243 + $0xd8] sm:$0xff]
      %v364 = vld [vmem:[%s243 + $0xe0] sm:$0xff]
      %v365 = vld [vmem:[%s243 + $0xe8] sm:$0xff]
      %v366 = vld [vmem:[%s243 + $0xf0] sm:$0xff]
      %v367 = vld [vmem:[%s243 + $0xf8] sm:$0xff]
      %v368 = vld [vmem:[%s253] sm:$0xf]
      %v369 = vld [vmem:[%s253 + $0x4] sm:$0xf]
      %v370 = vld [vmem:[%s253 + $0x8] sm:$0xf]
      %v371 = vld [vmem:[%s253 + $0xc] sm:$0xf]
      %v372 = vld [vmem:[%s253 + $0x10] sm:$0xf]
      %v373 = vld [vmem:[%s253 + $0x14] sm:$0xf]
      %v374 = vld [vmem:[%s253 + $0x18] sm:$0xf]
      %v375 = vld [vmem:[%s253 + $0x1c] sm:$0xf]
      %v376 = vld [vmem:[%s253 + $0x20] sm:$0xf]
      %v377 = vld [vmem:[%s253 + $0x24] sm:$0xf]
      %v378 = vld [vmem:[%s253 + $0x28] sm:$0xf]
      %v379 = vld [vmem:[%s253 + $0x2c] sm:$0xf]
      %v380 = vld [vmem:[%s253 + $0x30] sm:$0xf]
      %v381 = vld [vmem:[%s253 + $0x34] sm:$0xf]
      %v382 = vld [vmem:[%s253 + $0x38] sm:$0xf]
      %v383 = vld [vmem:[%s253 + $0x3c] sm:$0xf]
      %v384 = vld [vmem:[%s253 + $0x40] sm:$0xf]
      %v385 = vld [vmem:[%s253 + $0x44] sm:$0xf]
      %v386 = vld [vmem:[%s253 + $0x48] sm:$0xf]
      %v387 = vld [vmem:[%s253 + $0x4c] sm:$0xf]
      %v388 = vld [vmem:[%s253 + $0x50] sm:$0xf]
      %v389 = vld [vmem:[%s253 + $0x54] sm:$0xf]
      %v390 = vld [vmem:[%s253 + $0x58] sm:$0xf]
      %v391 = vld [vmem:[%s253 + $0x5c] sm:$0xf]
      %v392 = vld [vmem:[%s253 + $0x60] sm:$0xf]
      %v393 = vld [vmem:[%s253 + $0x64] sm:$0xf]
      %v394 = vld [vmem:[%s253 + $0x68] sm:$0xf]
      %v395 = vld [vmem:[%s253 + $0x6c] sm:$0xf]
      %v396 = vld [vmem:[%s253 + $0x70] sm:$0xf]
      %v397 = vld [vmem:[%s253 + $0x74] sm:$0xf]
      %v398 = vld [vmem:[%s253 + $0x78] sm:$0xf]
      %v399 = vld [vmem:[%s253 + $0x7c] sm:$0xf]
      %v432 = vunpack.c.l.b16 %v336
      %v433 = vunpack.c.h.b16 %v336
      %v434 = vunpack.c.l.b16 %v337
      %v435 = vunpack.c.h.b16 %v337
      %v436 = vunpack.c.l.b16 %v338
      %v437 = vunpack.c.h.b16 %v338
      %v438 = vunpack.c.l.b16 %v339
      %v439 = vunpack.c.h.b16 %v339
      %v440 = vunpack.c.l.b16 %v340
      %v441 = vunpack.c.h.b16 %v340
      %v442 = vunpack.c.l.b16 %v341
      %v443 = vunpack.c.h.b16 %v341
      %v444 = vunpack.c.l.b16 %v342
      %v445 = vunpack.c.h.b16 %v342
      %v446 = vunpack.c.l.b16 %v343
      %v447 = vunpack.c.h.b16 %v343
      %v448 = vunpack.c.l.b16 %v344
      %v449 = vunpack.c.h.b16 %v344
      %v450 = vunpack.c.l.b16 %v345
      %v451 = vunpack.c.h.b16 %v345
      %v452 = vunpack.c.l.b16 %v346
      %v453 = vunpack.c.h.b16 %v346
      %v454 = vunpack.c.l.b16 %v347
      %v455 = vunpack.c.h.b16 %v347
      %v456 = vunpack.c.l.b16 %v348
      %v457 = vunpack.c.h.b16 %v348
      %v458 = vunpack.c.l.b16 %v349
      %v459 = vunpack.c.h.b16 %v349
      %v460 = vunpack.c.l.b16 %v350
      %v461 = vunpack.c.h.b16 %v350
      %v462 = vunpack.c.l.b16 %v351
      %v463 = vunpack.c.h.b16 %v351
      %v464 = vunpack.c.l.b16 %v352
      %v465 = vunpack.c.h.b16 %v352
      %v466 = vunpack.c.l.b16 %v353
      %v467 = vunpack.c.h.b16 %v353
      %v468 = vunpack.c.l.b16 %v354
      %v469 = vunpack.c.h.b16 %v354
      %v470 = vunpack.c.l.b16 %v355
      %v471 = vunpack.c.h.b16 %v355
      %v472 = vunpack.c.l.b16 %v356
      %v473 = vunpack.c.h.b16 %v356
      %v474 = vunpack.c.l.b16 %v357
      %v475 = vunpack.c.h.b16 %v357
      %v476 = vunpack.c.l.b16 %v358
      %v477 = vunpack.c.h.b16 %v358
      %v478 = vunpack.c.l.b16 %v359
      %v479 = vunpack.c.h.b16 %v359
      %v480 = vunpack.c.l.b16 %v360
      %v481 = vunpack.c.h.b16 %v360
      %v482 = vunpack.c.l.b16 %v361
      %v483 = vunpack.c.h.b16 %v361
      %v484 = vunpack.c.l.b16 %v362
      %v485 = vunpack.c.h.b16 %v362
      %v486 = vunpack.c.l.b16 %v363
      %v487 = vunpack.c.h.b16 %v363
      %v488 = vunpack.c.l.b16 %v364
      %v489 = vunpack.c.h.b16 %v364
      %v490 = vunpack.c.l.b16 %v365
      %v491 = vunpack.c.h.b16 %v365
      %v492 = vunpack.c.l.b16 %v366
      %v493 = vunpack.c.h.b16 %v366
      %v494 = vunpack.c.l.b16 %v367
      %v495 = vunpack.c.h.b16 %v367
      %v496 = vpack.c.b16 %v434, %v432
      %v497 = vpack.c.b16 %v435, %v433
      %v498 = vpack.c.b16 %v438, %v436
      %v499 = vpack.c.b16 %v439, %v437
      %v500 = vpack.c.b16 %v442, %v440
      %v501 = vpack.c.b16 %v443, %v441
      %v502 = vpack.c.b16 %v446, %v444
      %v503 = vpack.c.b16 %v447, %v445
      %v504 = vpack.c.b16 %v450, %v448
      %v505 = vpack.c.b16 %v451, %v449
      %v506 = vpack.c.b16 %v454, %v452
      %v507 = vpack.c.b16 %v455, %v453
      %v508 = vpack.c.b16 %v458, %v456
      %v509 = vpack.c.b16 %v459, %v457
      %v510 = vpack.c.b16 %v462, %v460
      %v511 = vpack.c.b16 %v463, %v461
      %v512 = vpack.c.b16 %v466, %v464
      %v513 = vpack.c.b16 %v467, %v465
      %v514 = vpack.c.b16 %v470, %v468
      %v515 = vpack.c.b16 %v471, %v469
      %v516 = vpack.c.b16 %v474, %v472
      %v517 = vpack.c.b16 %v475, %v473
      %v518 = vpack.c.b16 %v478, %v476
      %v519 = vpack.c.b16 %v479, %v477
      %v520 = vpack.c.b16 %v482, %v480
      %v521 = vpack.c.b16 %v483, %v481
      %v522 = vpack.c.b16 %v486, %v484
      %v523 = vpack.c.b16 %v487, %v485
      %v524 = vpack.c.b16 %v490, %v488
      %v525 = vpack.c.b16 %v491, %v489
      %v526 = vpack.c.b16 %v494, %v492
      %v527 = vpack.c.b16 %v495, %v493
      %v592 = vunpack.c.l.b16 %v368
      %v593 = vunpack.c.l.b16 %v369
      %v594 = vunpack.c.l.b16 %v370
      %v595 = vunpack.c.l.b16 %v371
      %v596 = vunpack.c.l.b16 %v372
      %v597 = vunpack.c.l.b16 %v373
      %v598 = vunpack.c.l.b16 %v374
      %v599 = vunpack.c.l.b16 %v375
      %v600 = vunpack.c.l.b16 %v376
      %v601 = vunpack.c.l.b16 %v377
      %v602 = vunpack.c.l.b16 %v378
      %v603 = vunpack.c.l.b16 %v379
      %v604 = vunpack.c.l.b16 %v380
      %v605 = vunpack.c.l.b16 %v381
      %v606 = vunpack.c.l.b16 %v382
      %v607 = vunpack.c.l.b16 %v383
      %v608 = vunpack.c.l.b16 %v384
      %v609 = vunpack.c.l.b16 %v385
      %v610 = vunpack.c.l.b16 %v386
      %v611 = vunpack.c.l.b16 %v387
      %v612 = vunpack.c.l.b16 %v388
      %v613 = vunpack.c.l.b16 %v389
      %v614 = vunpack.c.l.b16 %v390
      %v615 = vunpack.c.l.b16 %v391
      %v616 = vunpack.c.l.b16 %v392
      %v617 = vunpack.c.l.b16 %v393
      %v618 = vunpack.c.l.b16 %v394
      %v619 = vunpack.c.l.b16 %v395
      %v620 = vunpack.c.l.b16 %v396
      %v621 = vunpack.c.l.b16 %v397
      %v622 = vunpack.c.l.b16 %v398
      %v623 = vunpack.c.l.b16 %v399
      %v624 = vpack.c.b16 %v593, %v592
      %v625 = vpack.c.b16 %v595, %v594
      %v626 = vpack.c.b16 %v597, %v596
      %v627 = vpack.c.b16 %v599, %v598
      %v628 = vpack.c.b16 %v601, %v600
      %v629 = vpack.c.b16 %v603, %v602
      %v630 = vpack.c.b16 %v605, %v604
      %v631 = vpack.c.b16 %v607, %v606
      %v632 = vpack.c.b16 %v609, %v608
      %v633 = vpack.c.b16 %v611, %v610
      %v634 = vpack.c.b16 %v613, %v612
      %v635 = vpack.c.b16 %v615, %v614
      %v636 = vpack.c.b16 %v617, %v616
      %v637 = vpack.c.b16 %v619, %v618
      %v638 = vpack.c.b16 %v621, %v620
      %v639 = vpack.c.b16 %v623, %v622
      %656 = vmatprep.subr.bf16.mxu0 0
      %657 = vmatpush1.bf16.msra.mxu0 %v631
      %658 = vmatprep.subr.bf16.mxu0 0
      %659 = vmatpush1.bf16.msra.mxu0 %v630
      %660 = vmatprep.subr.bf16.mxu0 0
      %661 = vmatpush1.bf16.msra.mxu0 %v629
      %662 = vmatprep.subr.bf16.mxu0 0
      %663 = vmatpush1.bf16.msra.mxu0 %v628
      %664 = vmatprep.subr.bf16.mxu0 0
      %665 = vmatpush1.bf16.msra.mxu0 %v627
      %666 = vmatprep.subr.bf16.mxu0 0
      %667 = vmatpush1.bf16.msra.mxu0 %v626
      %668 = vmatprep.subr.bf16.mxu0 0
      %669 = vmatpush1.bf16.msra.mxu0 %v625
      %670 = vmatprep.subr.bf16.mxu0 0
      %671 = vmatpush1.bf16.msra.mxu0 %v624
      %672 = vmatprep.subr.bf16.mxu0 0
      %673 = vmatpush2.bf16.msra.mxu0 %v639
      %674 = vmatprep.subr.bf16.mxu0 0
      %675 = vmatpush2.bf16.msra.mxu0 %v638
      %676 = vmatprep.subr.bf16.mxu0 0
      %677 = vmatpush2.bf16.msra.mxu0 %v637
      %678 = vmatprep.subr.bf16.mxu0 0
      %679 = vmatpush2.bf16.msra.mxu0 %v636
      %680 = vmatprep.subr.bf16.mxu0 0
      %681 = vmatpush2.bf16.msra.mxu0 %v635
      %682 = vmatprep.subr.bf16.mxu0 0
      %683 = vmatpush2.bf16.msra.mxu0 %v634
      %684 = vmatprep.subr.bf16.mxu0 0
      %685 = vmatpush2.bf16.msra.mxu0 %v633
      %686 = vmatprep.subr.bf16.mxu0 0
      %687 = vmatpush2.bf16.msra.mxu0 %v632
      %688 = vmatprep.mubr.bf16.mxu0 %v497
      %689 = vmatmul.mubr.bf16.gmra.mxu0 %v496
      %v690 = vpop.f32.mrf.mxu0
      %v691 = vadd.f32 0.0, %v690
      %v692 = vpop.f32.mrf.mxu0
      %v693 = vpop.f32.mrf.mxu0
      %v694 = vadd.f32 0.0, %v693
      %v695 = vpop.f32.mrf.mxu0
      %696 = vmatprep.mubr.bf16.mxu0 %v499
      %697 = vmatmul.mubr.bf16.gmra.mxu0 %v498
      %v698 = vpop.f32.mrf.mxu0
      %v699 = vadd.f32 0.0, %v698
      %v700 = vpop.f32.mrf.mxu0
      %v701 = vpop.f32.mrf.mxu0
      %v702 = vadd.f32 0.0, %v701
      %v703 = vpop.f32.mrf.mxu0
      %704 = vmatprep.mubr.bf16.mxu0 %v501
      %705 = vmatmul.mubr.bf16.gmra.mxu0 %v500
      %v706 = vpop.f32.mrf.mxu0
      %v707 = vadd.f32 0.0, %v706
      %v708 = vpop.f32.mrf.mxu0
      %v709 = vpop.f32.mrf.mxu0
      %v710 = vadd.f32 0.0, %v709
      %v711 = vpop.f32.mrf.mxu0
      %712 = vmatprep.mubr.bf16.mxu0 %v503
      %713 = vmatmul.mubr.bf16.gmra.mxu0 %v502
      %v714 = vpop.f32.mrf.mxu0
      %v715 = vadd.f32 0.0, %v714
      %v716 = vpop.f32.mrf.mxu0
      %v717 = vpop.f32.mrf.mxu0
      %v718 = vadd.f32 0.0, %v717
      %v719 = vpop.f32.mrf.mxu0
      %720 = vmatprep.mubr.bf16.mxu0 %v505
      %721 = vmatmul.mubr.bf16.gmra.mxu0 %v504
      %v722 = vpop.f32.mrf.mxu0
      %v723 = vadd.f32 0.0, %v722
      %v724 = vpop.f32.mrf.mxu0
      %v725 = vpop.f32.mrf.mxu0
      %v726 = vadd.f32 0.0, %v725
      %v727 = vpop.f32.mrf.mxu0
      %728 = vmatprep.mubr.bf16.mxu0 %v507
      %729 = vmatmul.mubr.bf16.gmra.mxu0 %v506
      %v730 = vpop.f32.mrf.mxu0
      %v731 = vadd.f32 0.0, %v730
      %v732 = vpop.f32.mrf.mxu0
      %v733 = vpop.f32.mrf.mxu0
      %v734 = vadd.f32 0.0, %v733
      %v735 = vpop.f32.mrf.mxu0
      %736 = vmatprep.mubr.bf16.mxu0 %v509
      %737 = vmatmul.mubr.bf16.gmra.mxu0 %v508
      %v738 = vpop.f32.mrf.mxu0
      %v739 = vadd.f32 0.0, %v738
      %v740 = vpop.f32.mrf.mxu0
      %v741 = vpop.f32.mrf.mxu0
      %v742 = vadd.f32 0.0, %v741
      %v743 = vpop.f32.mrf.mxu0
      %744 = vmatprep.mubr.bf16.mxu0 %v511
      %745 = vmatmul.mubr.bf16.gmra.mxu0 %v510
      %v746 = vpop.f32.mrf.mxu0
      %v747 = vadd.f32 0.0, %v746
      %v748 = vpop.f32.mrf.mxu0
      %v749 = vpop.f32.mrf.mxu0
      %v750 = vadd.f32 0.0, %v749
      %v751 = vpop.f32.mrf.mxu0
      %752 = vmatprep.mubr.bf16.mxu0 %v513
      %753 = vmatmul.mubr.bf16.gmra.mxu0 %v512
      %v754 = vpop.f32.mrf.mxu0
      %v755 = vadd.f32 0.0, %v754
      %v756 = vpop.f32.mrf.mxu0
      %v757 = vpop.f32.mrf.mxu0
      %v758 = vadd.f32 0.0, %v757
      %v759 = vpop.f32.mrf.mxu0
      %760 = vmatprep.mubr.bf16.mxu0 %v515
      %761 = vmatmul.mubr.bf16.gmra.mxu0 %v514
      %v762 = vpop.f32.mrf.mxu0
      %v763 = vadd.f32 0.0, %v762
      %v764 = vpop.f32.mrf.mxu0
      %v765 = vpop.f32.mrf.mxu0
      %v766 = vadd.f32 0.0, %v765
      %v767 = vpop.f32.mrf.mxu0
      %768 = vmatprep.mubr.bf16.mxu0 %v517
      %769 = vmatmul.mubr.bf16.gmra.mxu0 %v516
      %v770 = vpop.f32.mrf.mxu0
      %v771 = vadd.f32 0.0, %v770
      %v772 = vpop.f32.mrf.mxu0
      %v773 = vpop.f32.mrf.mxu0
      %v774 = vadd.f32 0.0, %v773
      %v775 = vpop.f32.mrf.mxu0
      %776 = vmatprep.mubr.bf16.mxu0 %v519
      %777 = vmatmul.mubr.bf16.gmra.mxu0 %v518
      %v778 = vpop.f32.mrf.mxu0
      %v779 = vadd.f32 0.0, %v778
      %v780 = vpop.f32.mrf.mxu0
      %v781 = vpop.f32.mrf.mxu0
      %v782 = vadd.f32 0.0, %v781
      %v783 = vpop.f32.mrf.mxu0
      %784 = vmatprep.mubr.bf16.mxu0 %v521
      %785 = vmatmul.mubr.bf16.gmra.mxu0 %v520
      %v786 = vpop.f32.mrf.mxu0
      %v787 = vadd.f32 0.0, %v786
      %v788 = vpop.f32.mrf.mxu0
      %v789 = vpop.f32.mrf.mxu0
      %v790 = vadd.f32 0.0, %v789
      %v791 = vpop.f32.mrf.mxu0
      %792 = vmatprep.mubr.bf16.mxu0 %v523
      %793 = vmatmul.mubr.bf16.gmra.mxu0 %v522
      %v794 = vpop.f32.mrf.mxu0
      %v795 = vadd.f32 0.0, %v794
      %v796 = vpop.f32.mrf.mxu0
      %v797 = vpop.f32.mrf.mxu0
      %v798 = vadd.f32 0.0, %v797
      %v799 = vpop.f32.mrf.mxu0
      %800 = vmatprep.mubr.bf16.mxu0 %v525
      %801 = vmatmul.mubr.bf16.gmra.mxu0 %v524
      %v802 = vpop.f32.mrf.mxu0
      %v803 = vadd.f32 0.0, %v802
      %v804 = vpop.f32.mrf.mxu0
      %v805 = vpop.f32.mrf.mxu0
      %v806 = vadd.f32 0.0, %v805
      %v807 = vpop.f32.mrf.mxu0
      %808 = vmatprep.mubr.bf16.mxu0 %v527
      %809 = vmatmul.mubr.bf16.gmra.mxu0 %v526
      %v810 = vpop.f32.mrf.mxu0
      %v811 = vadd.f32 0.0, %v810
      %v812 = vpop.f32.mrf.mxu0
      %v813 = vpop.f32.mrf.mxu0
      %v814 = vadd.f32 0.0, %v813
      %v815 = vpop.f32.mrf.mxu0
      %816 = vdwg.mxu0
      %v817 = vadd.f32 %v304, %v691
      %v818 = vadd.f32 %v305, %v694
      %v819 = vadd.f32 %v306, %v699
      %v820 = vadd.f32 %v307, %v702
      %v821 = vadd.f32 %v308, %v707
      %v822 = vadd.f32 %v309, %v710
      %v823 = vadd.f32 %v310, %v715
      %v824 = vadd.f32 %v311, %v718
      %v825 = vadd.f32 %v312, %v723
      %v826 = vadd.f32 %v313, %v726
      %v827 = vadd.f32 %v314, %v731
      %v828 = vadd.f32 %v315, %v734
      %v829 = vadd.f32 %v316, %v739
      %v830 = vadd.f32 %v317, %v742
      %v831 = vadd.f32 %v318, %v747
      %v832 = vadd.f32 %v319, %v750
      %v833 = vadd.f32 %v320, %v755
      %v834 = vadd.f32 %v321, %v758
      %v835 = vadd.f32 %v322, %v763
      %v836 = vadd.f32 %v323, %v766
      %v837 = vadd.f32 %v324, %v771
      %v838 = vadd.f32 %v325, %v774
      %v839 = vadd.f32 %v326, %v779
      %v840 = vadd.f32 %v327, %v782
      %v841 = vadd.f32 %v328, %v787
      %v842 = vadd.f32 %v329, %v790
      %v843 = vadd.f32 %v330, %v795
      %v844 = vadd.f32 %v331, %v798
      %v845 = vadd.f32 %v332, %v803
      %v846 = vadd.f32 %v333, %v806
      %v847 = vadd.f32 %v334, %v811
      %v848 = vadd.f32 %v335, %v814
      %849 = vst [vmem:[#allocation2] sm:$0xff] %v817
      %850 = vst [vmem:[#allocation2 + $0x8] sm:$0xff] %v818
      %851 = vst [vmem:[#allocation2 + $0x10] sm:$0xff] %v819
      %852 = vst [vmem:[#allocation2 + $0x18] sm:$0xff] %v820
      %853 = vst [vmem:[#allocation2 + $0x20] sm:$0xff] %v821
      %854 = vst [vmem:[#allocation2 + $0x28] sm:$0xff] %v822
      %855 = vst [vmem:[#allocation2 + $0x30] sm:$0xff] %v823
      %856 = vst [vmem:[#allocation2 + $0x38] sm:$0xff] %v824
      %857 = vst [vmem:[#allocation2 + $0x40] sm:$0xff] %v825
      %858 = vst [vmem:[#allocation2 + $0x48] sm:$0xff] %v826
      %859 = vst [vmem:[#allocation2 + $0x50] sm:$0xff] %v827
      %860 = vst [vmem:[#allocation2 + $0x58] sm:$0xff] %v828
      %861 = vst [vmem:[#allocation2 + $0x60] sm:$0xff] %v829
      %862 = vst [vmem:[#allocation2 + $0x68] sm:$0xff] %v830
      %863 = vst [vmem:[#allocation2 + $0x70] sm:$0xff] %v831
      %864 = vst [vmem:[#allocation2 + $0x78] sm:$0xff] %v832
      %865 = vst [vmem:[#allocation2 + $0x80] sm:$0xff] %v833
      %866 = vst [vmem:[#allocation2 + $0x88] sm:$0xff] %v834
      %867 = vst [vmem:[#allocation2 + $0x90] sm:$0xff] %v835
      %868 = vst [vmem:[#allocation2 + $0x98] sm:$0xff] %v836
      %869 = vst [vmem:[#allocation2 + $0xa0] sm:$0xff] %v837
      %870 = vst [vmem:[#allocation2 + $0xa8] sm:$0xff] %v838
      %871 = vst [vmem:[#allocation2 + $0xb0] sm:$0xff] %v839
      %872 = vst [vmem:[#allocation2 + $0xb8] sm:$0xff] %v840
      %873 = vst [vmem:[#allocation2 + $0xc0] sm:$0xff] %v841
      %874 = vst [vmem:[#allocation2 + $0xc8] sm:$0xff] %v842
      %875 = vst [vmem:[#allocation2 + $0xd0] sm:$0xff] %v843
      %876 = vst [vmem:[#allocation2 + $0xd8] sm:$0xff] %v844
      %877 = vst [vmem:[#allocation2 + $0xe0] sm:$0xff] %v845
      %878 = vst [vmem:[#allocation2 + $0xe8] sm:$0xff] %v846
      %879 = vst [vmem:[#allocation2 + $0xf0] sm:$0xff] %v847
      %880 = vst [vmem:[#allocation2 + $0xf8] sm:$0xff] %v848
      // Predicated region
      $region37: #{_lambda_.28} parent=31 // pred_check
        %p881 = pneg %p268
      $region38: #{_lambda_.28} parent=31 // pred_check_branch
        %883 = sbr.rel (%p881) target = $region40
      $region39: #{_lambda_.28} parent=31 // pred_region
        %v884 = vld [vmem:[#allocation2] sm:$0xff]
        %v885 = vld [vmem:[#allocation2 + $0x8] sm:$0xff]
        %v886 = vld [vmem:[#allocation2 + $0x10] sm:$0xff]
        %v887 = vld [vmem:[#allocation2 + $0x18] sm:$0xff]
        %v888 = vld [vmem:[#allocation2 + $0x20] sm:$0xff]
        %v889 = vld [vmem:[#allocation2 + $0x28] sm:$0xff]
        %v890 = vld [vmem:[#allocation2 + $0x30] sm:$0xff]
        %v891 = vld [vmem:[#allocation2 + $0x38] sm:$0xff]
        %v892 = vld [vmem:[#allocation2 + $0x40] sm:$0xff]
        %v893 = vld [vmem:[#allocation2 + $0x48] sm:$0xff]
        %v894 = vld [vmem:[#allocation2 + $0x50] sm:$0xff]
        %v895 = vld [vmem:[#allocation2 + $0x58] sm:$0xff]
        %v896 = vld [vmem:[#allocation2 + $0x60] sm:$0xff]
        %v897 = vld [vmem:[#allocation2 + $0x68] sm:$0xff]
        %v898 = vld [vmem:[#allocation2 + $0x70] sm:$0xff]
        %v899 = vld [vmem:[#allocation2 + $0x78] sm:$0xff]
        %v900 = vld [vmem:[#allocation2 + $0x80] sm:$0xff]
        %v901 = vld [vmem:[#allocation2 + $0x88] sm:$0xff]
        %v902 = vld [vmem:[#allocation2 + $0x90] sm:$0xff]
        %v903 = vld [vmem:[#allocation2 + $0x98] sm:$0xff]
        %v904 = vld [vmem:[#allocation2 + $0xa0] sm:$0xff]
        %v905 = vld [vmem:[#allocation2 + $0xa8] sm:$0xff]
        %v906 = vld [vmem:[#allocation2 + $0xb0] sm:$0xff]
        %v907 = vld [vmem:[#allocation2 + $0xb8] sm:$0xff]
        %v908 = vld [vmem:[#allocation2 + $0xc0] sm:$0xff]
        %v909 = vld [vmem:[#allocation2 + $0xc8] sm:$0xff]
        %v910 = vld [vmem:[#allocation2 + $0xd0] sm:$0xff]
        %v911 = vld [vmem:[#allocation2 + $0xd8] sm:$0xff]
        %v912 = vld [vmem:[#allocation2 + $0xe0] sm:$0xff]
        %v913 = vld [vmem:[#allocation2 + $0xe8] sm:$0xff]
        %v914 = vld [vmem:[#allocation2 + $0xf0] sm:$0xff]
        %v915 = vld [vmem:[#allocation2 + $0xf8] sm:$0xff]
        %v916 = vld [vmem:[%s257] sm:$0x1]
        %v918 = vlaneseq
        %v919 = vshrl.u32 %v918, 7
        %v920 = vsub.s32 0, %v919
        %v921 = vrot.slane %v916, %v920
        %v923 = vadd.f32 %v884, %v921
        %v924 = vadd.f32 %v885, %v921
        %v925 = vadd.f32 %v886, %v921
        %v926 = vadd.f32 %v887, %v921
        %v927 = vadd.f32 %v888, %v921
        %v928 = vadd.f32 %v889, %v921
        %v929 = vadd.f32 %v890, %v921
        %v930 = vadd.f32 %v891, %v921
        %v931 = vadd.f32 %v892, %v921
        %v932 = vadd.f32 %v893, %v921
        %v933 = vadd.f32 %v894, %v921
        %v934 = vadd.f32 %v895, %v921
        %v935 = vadd.f32 %v896, %v921
        %v936 = vadd.f32 %v897, %v921
        %v937 = vadd.f32 %v898, %v921
        %v938 = vadd.f32 %v899, %v921
        %v939 = vadd.f32 %v900, %v921
        %v940 = vadd.f32 %v901, %v921
        %v941 = vadd.f32 %v902, %v921
        %v942 = vadd.f32 %v903, %v921
        %v943 = vadd.f32 %v904, %v921
        %v944 = vadd.f32 %v905, %v921
        %v945 = vadd.f32 %v906, %v921
        %v946 = vadd.f32 %v907, %v921
        %v947 = vadd.f32 %v908, %v921
        %v948 = vadd.f32 %v909, %v921
        %v949 = vadd.f32 %v910, %v921
        %v950 = vadd.f32 %v911, %v921
        %v951 = vadd.f32 %v912, %v921
        %v952 = vadd.f32 %v913, %v921
        %v953 = vadd.f32 %v914, %v921
        %v954 = vadd.f32 %v915, %v921
        %955 = vst [vmem:[%s265] sm:$0xff] %v923
        %956 = vst [vmem:[%s265 + $0x8] sm:$0xff] %v924
        %957 = vst [vmem:[%s265 + $0x10] sm:$0xff] %v925
        %958 = vst [vmem:[%s265 + $0x18] sm:$0xff] %v926
        %959 = vst [vmem:[%s265 + $0x20] sm:$0xff] %v927
        %960 = vst [vmem:[%s265 + $0x28] sm:$0xff] %v928
        %961 = vst [vmem:[%s265 + $0x30] sm:$0xff] %v929
        %962 = vst [vmem:[%s265 + $0x38] sm:$0xff] %v930
        %963 = vst [vmem:[%s265 + $0x40] sm:$0xff] %v931
        %964 = vst [vmem:[%s265 + $0x48] sm:$0xff] %v932
        %965 = vst [vmem:[%s265 + $0x50] sm:$0xff] %v933
        %966 = vst [vmem:[%s265 + $0x58] sm:$0xff] %v934
        %967 = vst [vmem:[%s265 + $0x60] sm:$0xff] %v935
        %968 = vst [vmem:[%s265 + $0x68] sm:$0xff] %v936
        %969 = vst [vmem:[%s265 + $0x70] sm:$0xff] %v937
        %970 = vst [vmem:[%s265 + $0x78] sm:$0xff] %v938
        %971 = vst [vmem:[%s265 + $0x80] sm:$0xff] %v939
        %972 = vst [vmem:[%s265 + $0x88] sm:$0xff] %v940
        %973 = vst [vmem:[%s265 + $0x90] sm:$0xff] %v941
        %974 = vst [vmem:[%s265 + $0x98] sm:$0xff] %v942
        %975 = vst [vmem:[%s265 + $0xa0] sm:$0xff] %v943
        %976 = vst [vmem:[%s265 + $0xa8] sm:$0xff] %v944
        %977 = vst [vmem:[%s265 + $0xb0] sm:$0xff] %v945
        %978 = vst [vmem:[%s265 + $0xb8] sm:$0xff] %v946
        %979 = vst [vmem:[%s265 + $0xc0] sm:$0xff] %v947
        %980 = vst [vmem:[%s265 + $0xc8] sm:$0xff] %v948
        %981 = vst [vmem:[%s265 + $0xd0] sm:$0xff] %v949
        %982 = vst [vmem:[%s265 + $0xd8] sm:$0xff] %v950
        %983 = vst [vmem:[%s265 + $0xe0] sm:$0xff] %v951
        %984 = vst [vmem:[%s265 + $0xe8] sm:$0xff] %v952
        %985 = vst [vmem:[%s265 + $0xf0] sm:$0xff] %v953
        %986 = vst [vmem:[%s265 + $0xf8] sm:$0xff] %v954
      $region40: #{_lambda_.28} parent=31 // pred_fallthru
        _
      %s987 = smul.u32 32, %s19
      %p988 = scmp.lt.s32.totalorder %s987, 63
      %s989 = scalar_select %p988, %s987, 63
      %p990 = scmp.lt.s32.totalorder %s20, 0
      %s991 = scalar_select %p990, %s20, 0
      %s992 = sadd.s32 %s991, %s989
      %s993 = smul.addr %s992, 8
      %s994 = scalar_lea.vmem %s3, %s993
      // Predicated region
      $region41: #{_lambda_.28} parent=31 // pred_check
        %p995 = pneg %p135
      $region42: #{_lambda_.28} parent=31 // pred_check_branch
        %997 = sbr.rel (%p995) target = $region44
      $region43: #{_lambda_.28} parent=31 // pred_region
        %s998 = smul.u32 32, %s19
      $region44: #{_lambda_.28} parent=31 // pred_fallthru
        _
    $region32: #{_lambda_.28} parent=5 // pred_fallthru
      _
    %p999 = scmp.le.s32.totalorder 2, %s9
    // Predicated region
    $region45: #{_lambda_.28} parent=5 // pred_check
      %p1000 = pneg %p999
    $region46: #{_lambda_.28} parent=5 // pred_check_branch
      %1002 = sbr.rel (%p1000) target = $region48
    $region47: #{_lambda_.28} parent=5 // pred_region
      %s1003 = ssub.s32 %s9, 2
      // Predicated region
      $region49: #{_lambda_.28} parent=47 // pred_check
        %p1004 = pneg %p141
      $region50: #{_lambda_.28} parent=47 // pred_check_branch
        %1006 = sbr.rel (%p1004) target = $region52
      $region51: #{_lambda_.28} parent=47 // pred_region
        %s1007 = smul.u32 32, %s22
        %p1008 = scmp.lt.s32.totalorder %s1007, 63
        %s1009 = scalar_select %p1008, %s1007, 63
        %p1010 = scmp.lt.s32.totalorder %s23, 0
        %s1011 = scalar_select %p1010, %s23, 0
        %s1012 = sadd.s32 %s1011, %s1009
        %s1013 = smul.addr %s1012, 8
        %s1014 = scalar_lea.vmem %s3, %s1013
      $region52: #{_lambda_.28} parent=47 // pred_fallthru
        _
    $region48: #{_lambda_.28} parent=5 // pred_fallthru
      _
  $region6: #{_lambda_.28} parent=0 // loop_footer
    %s13 = sadd.s32 1, %s9
  $region7: #{_lambda_.28} parent=0 // loop_footer_branch
    %8 = sbr.rel target = $region3
  $region8: #{_lambda_.28} parent=0 // loop_exit
    _

// kernel: _lambda_.30
$region0: #{_lambda_.30}
  #allocation0 [shape = 'u32[]', space=smem, size = 0x4, offset = 0x4, fixed_abs, tag = 'smem constant byte address 0x4 - core index']
  #allocation1 [shape = 'u32[144,128]{1,0:T(1,128)}', space=vmem, size = 0x12000, scoped, tag = 'internal scratch']
  %s0 = inlined_call_operand.vmem [shape: f32[512,128], index: 0, kind: input, shape index: {}]
  %s1 = inlined_call_operand.vmem [shape: f32[1,128], index: 1, kind: input, shape index: {}]
  %s2 = inlined_call_operand.vmem [shape: f32[1,128], index: 2, kind: input, shape index: {}]
  %s3 = inlined_call_operand.vmem [shape: f32[1,128], index: 3, kind: input, shape index: {}]
  %s4 = inlined_call_operand.vmem [shape: f32[1,128], index: 4, kind: input, shape index: {}]
  %s5 = inlined_call_operand.vmem [shape: f32[512,128], index: 5, kind: output, shape index: {}]
  %s6 = sld [smem:[#allocation0]]
  $region53: #{_lambda_.30} parent=0
    _
  %s8 = ssub.s32 1, %s6
  %s9 = scalar_select 0, %s8, %s6
  loop: start=0, step=1, limit=4
  $region2: #{_lambda_.30} parent=0 // loop_pre_header
    _
  $region3: #{_lambda_.30} parent=0 // loop_header
    %s11 = sphi 0, %s15
    %p12 = scmp.ge.s32.totalorder %s11, 4
    %s21 = sphi 0, %s23
    %s24 = sphi 0, %s21
    %s25 = sphi 0, %s24
    %s41 = sphi 0, %s25
    %s45 = sphi 0, %s45
    %s47 = sphi 0, %s45
    %s48 = sphi 0, %s47
    %s62 = sphi 0, %s48
    %s66 = sphi 0, %s66
    %s68 = sphi 0, %s66
    %s69 = sphi 0, %s68
    %s83 = sphi 0, %s69
    %s87 = sphi 0, %s87
    %s89 = sphi 0, %s87
    %s90 = sphi 0, %s89
    %s104 = sphi 0, %s90
    %s108 = sphi 0, %s108
    %s110 = sphi 0, %s108
    %s111 = sphi 0, %s110
    %s125 = sphi 0, %s111
    %s131 = sphi 0, %s133
    %s134 = sphi 0, %s131
    %s135 = sphi 0, %s134
    %s151 = sphi 0, %s135
  $region4: #{_lambda_.30} parent=0 // loop_header_branch
    %14 = sbr.rel (%p12) target = $region8
  $region5: #{_lambda_.30} parent=0 // loop_body
    %s16 = ssub.s32 %s11, 1
    %s17 = ssub.s32 %s11, 2
    %s18 = sadd.s32 %s11, 1
    %s19 = ssub.s32 %s11, %s18
    %p20 = scmp.eq.s32.totalorder %s19, 0
    %s22 = sadd.s32 %s21, 1
    %s23 = scalar_select %p20, %s21, %s22
    %p26 = pneg %p20
    %p27 = scmp.eq.s32.totalorder %s11, 1
    %p28 = por %p26, %p27
    %p29 = scmp.ne.s32.totalorder %s21, %s24
    %p30 = scmp.eq.s32.totalorder %s11, 0
    %p31 = por %p29, %p30
    %p32 = scmp.ne.s32.totalorder %s21, %s24
    %p33 = scmp.eq.s32.totalorder %s16, 1
    %p34 = por %p32, %p33
    %p35 = scmp.ne.s32.totalorder %s24, %s25
    %p36 = scmp.eq.s32.totalorder %s16, 0
    %p37 = por %p35, %p36
    %p38 = scmp.ne.s32.totalorder %s24, %s25
    %p39 = scmp.eq.s32.totalorder %s17, 1
    %p40 = por %p38, %p39
    %p42 = scmp.ne.s32.totalorder %s25, %s41
    %p43 = scmp.eq.s32.totalorder %s17, 0
    %p44 = por %p42, %p43
    %s46 = sadd.s32 %s45, 1
    %p49 = scmp.eq.s32.totalorder %s11, 1
    %p50 = scmp.ne.s32.totalorder %s45, %s47
    %p51 = scmp.eq.s32.totalorder %s11, 0
    %p52 = por %p50, %p51
    %p53 = scmp.ne.s32.totalorder %s45, %s47
    %p54 = scmp.eq.s32.totalorder %s16, 1
    %p55 = por %p53, %p54
    %p56 = scmp.ne.s32.totalorder %s47, %s48
    %p57 = scmp.eq.s32.totalorder %s16, 0
    %p58 = por %p56, %p57
    %p59 = scmp.ne.s32.totalorder %s47, %s48
    %p60 = scmp.eq.s32.totalorder %s17, 1
    %p61 = por %p59, %p60
    %p63 = scmp.ne.s32.totalorder %s48, %s62
    %p64 = scmp.eq.s32.totalorder %s17, 0
    %p65 = por %p63, %p64
    %s67 = sadd.s32 %s66, 1
    %p70 = scmp.eq.s32.totalorder %s11, 1
    %p71 = scmp.ne.s32.totalorder %s66, %s68
    %p72 = scmp.eq.s32.totalorder %s11, 0
    %p73 = por %p71, %p72
    %p74 = scmp.ne.s32.totalorder %s66, %s68
    %p75 = scmp.eq.s32.totalorder %s16, 1
    %p76 = por %p74, %p75
    %p77 = scmp.ne.s32.totalorder %s68, %s69
    %p78 = scmp.eq.s32.totalorder %s16, 0
    %p79 = por %p77, %p78
    %p80 = scmp.ne.s32.totalorder %s68, %s69
    %p81 = scmp.eq.s32.totalorder %s17, 1
    %p82 = por %p80, %p81
    %p84 = scmp.ne.s32.totalorder %s69, %s83
    %p85 = scmp.eq.s32.totalorder %s17, 0
    %p86 = por %p84, %p85
    %s88 = sadd.s32 %s87, 1
    %p91 = scmp.eq.s32.totalorder %s11, 1
    %p92 = scmp.ne.s32.totalorder %s87, %s89
    %p93 = scmp.eq.s32.totalorder %s11, 0
    %p94 = por %p92, %p93
    %p95 = scmp.ne.s32.totalorder %s87, %s89
    %p96 = scmp.eq.s32.totalorder %s16, 1
    %p97 = por %p95, %p96
    %p98 = scmp.ne.s32.totalorder %s89, %s90
    %p99 = scmp.eq.s32.totalorder %s16, 0
    %p100 = por %p98, %p99
    %p101 = scmp.ne.s32.totalorder %s89, %s90
    %p102 = scmp.eq.s32.totalorder %s17, 1
    %p103 = por %p101, %p102
    %p105 = scmp.ne.s32.totalorder %s90, %s104
    %p106 = scmp.eq.s32.totalorder %s17, 0
    %p107 = por %p105, %p106
    %s109 = sadd.s32 %s108, 1
    %p112 = scmp.eq.s32.totalorder %s11, 1
    %p113 = scmp.ne.s32.totalorder %s108, %s110
    %p114 = scmp.eq.s32.totalorder %s11, 0
    %p115 = por %p113, %p114
    %p116 = scmp.ne.s32.totalorder %s108, %s110
    %p117 = scmp.eq.s32.totalorder %s16, 1
    %p118 = por %p116, %p117
    %p119 = scmp.ne.s32.totalorder %s110, %s111
    %p120 = scmp.eq.s32.totalorder %s16, 0
    %p121 = por %p119, %p120
    %p122 = scmp.ne.s32.totalorder %s110, %s111
    %p123 = scmp.eq.s32.totalorder %s17, 1
    %p124 = por %p122, %p123
    %p126 = scmp.ne.s32.totalorder %s111, %s125
    %p127 = scmp.eq.s32.totalorder %s17, 0
    %p128 = por %p126, %p127
    %s129 = ssub.s32 %s11, %s18
    %p130 = scmp.eq.s32.totalorder %s129, 0
    %s132 = sadd.s32 %s131, 1
    %s133 = scalar_select %p130, %s131, %s132
    %p136 = pneg %p130
    %p137 = scmp.eq.s32.totalorder %s11, 1
    %p138 = por %p136, %p137
    %p139 = scmp.ne.s32.totalorder %s131, %s134
    %p140 = scmp.eq.s32.totalorder %s11, 0
    %p141 = por %p139, %p140
    %p142 = scmp.ne.s32.totalorder %s131, %s134
    %p143 = scmp.eq.s32.totalorder %s16, 1
    %p144 = por %p142, %p143
    %p145 = scmp.ne.s32.totalorder %s134, %s135
    %p146 = scmp.eq.s32.totalorder %s16, 0
    %p147 = por %p145, %p146
    %p148 = scmp.ne.s32.totalorder %s134, %s135
    %p149 = scmp.eq.s32.totalorder %s17, 1
    %p150 = por %p148, %p149
    %p152 = scmp.ne.s32.totalorder %s135, %s151
    %p153 = scmp.eq.s32.totalorder %s17, 0
    %p154 = por %p152, %p153
    %p155 = scmp.le.s32.totalorder 1, %s11
    %p156 = scmp.lt.s32.totalorder %s11, 3
    %p157 = pnand %p155, %p156
    %p158 = pneg %p157
    // Predicated region
    $region9: #{_lambda_.30} parent=5 // pred_check
      _
    $region10: #{_lambda_.30} parent=5 // pred_check_branch
      %160 = sbr.rel (%p157) target = $region12
    $region11: #{_lambda_.30} parent=5 // pred_region
      %s161 = ssub.s32 %s11, 1
      // Predicated region
      $region13: #{_lambda_.30} parent=11 // pred_check
        %p162 = pneg %p58
      $region14: #{_lambda_.30} parent=11 // pred_check_branch
        %164 = sbr.rel (%p162) target = $region16
      $region15: #{_lambda_.30} parent=11 // pred_region
        _
      $region16: #{_lambda_.30} parent=11 // pred_fallthru
        _
      // Predicated region
      $region17: #{_lambda_.30} parent=11 // pred_check
        %p165 = pneg %p79
      $region18: #{_lambda_.30} parent=11 // pred_check_branch
        %167 = sbr.rel (%p165) target = $region20
      $region19: #{_lambda_.30} parent=11 // pred_region
        _
      $region20: #{_lambda_.30} parent=11 // pred_fallthru
        _
      // Predicated region
      $region21: #{_lambda_.30} parent=11 // pred_check
        %p168 = pneg %p100
      $region22: #{_lambda_.30} parent=11 // pred_check_branch
        %170 = sbr.rel (%p168) target = $region24
      $region23: #{_lambda_.30} parent=11 // pred_region
        _
      $region24: #{_lambda_.30} parent=11 // pred_fallthru
        _
      // Predicated region
      $region25: #{_lambda_.30} parent=11 // pred_check
        %p171 = pneg %p121
      $region26: #{_lambda_.30} parent=11 // pred_check_branch
        %173 = sbr.rel (%p171) target = $region28
      $region27: #{_lambda_.30} parent=11 // pred_region
        _
      $region28: #{_lambda_.30} parent=11 // pred_fallthru
        _
    $region12: #{_lambda_.30} parent=5 // pred_fallthru
      _
    %p174 = scmp.lt.s32.totalorder %s11, 2
    // Predicated region
    $region29: #{_lambda_.30} parent=5 // pred_check
      %p175 = pneg %p174
    $region30: #{_lambda_.30} parent=5 // pred_check_branch
      %177 = sbr.rel (%p175) target = $region32
    $region31: #{_lambda_.30} parent=5 // pred_region
      // Predicated region
      $region33: #{_lambda_.30} parent=31 // pred_check
        %p178 = pneg %p31
      $region34: #{_lambda_.30} parent=31 // pred_check_branch
        %180 = sbr.rel (%p178) target = $region36
      $region35: #{_lambda_.30} parent=31 // pred_region
        %s181 = smul.u32 32, %s11
        %p182 = scmp.lt.s32.totalorder %s181, 63
        %s183 = scalar_select %p182, %s181, 63
        %s184 = smul.addr %s183, 8
        %s185 = scalar_lea.vmem %s0, %s184
        %s186 = smul.u32 32, %s11
      $region36: #{_lambda_.30} parent=31 // pred_fallthru
        _
    $region32: #{_lambda_.30} parent=5 // pred_fallthru
      _
    %p187 = scmp.le.s32.totalorder 1, %s11
    %p188 = scmp.lt.s32.totalorder %s11, 3
    %p189 = pnand %p187, %p188
    %p190 = pneg %p189
    // Predicated region
    $region37: #{_lambda_.30} parent=5 // pred_check
      _
    $region38: #{_lambda_.30} parent=5 // pred_check_branch
      %192 = sbr.rel (%p189) target = $region40
    $region39: #{_lambda_.30} parent=5 // pred_region
      %s193 = ssub.s32 %s11, 1
      %s194 = smul.u32 32, %s16
      %p195 = scmp.lt.s32.totalorder %s194, 63
      %s196 = scalar_select %p195, %s194, 63
      %s197 = smul.addr %s196, 8
      %s198 = scalar_lea.vmem %s0, %s197
      %p199 = pneg %p37
      %p200 = pneg %p34
      %p201 = pneg %p58
      %p202 = pneg %p55
      %p203 = pneg %p79
      %p204 = pneg %p76
      %p205 = pneg %p100
      %p206 = pneg %p97
      %p207 = pneg %p121
      %p208 = pneg %p118
      %p209 = pneg %p147
      %p210 = pneg %p144
      %s211 = smul.u32 32, %s16
      %p212 = scmp.lt.s32.totalorder %s211, 63
      %s213 = scalar_select %p212, %s211, 63
      %s214 = smul.addr %s213, 8
      %s215 = scalar_lea.vmem %s5, %s214
      %s216 = smul.u32 32, %s16
      %p217 = scmp.lt.s32.totalorder %s216, 63
      %s218 = scalar_select %p217, %s216, 63
      %s219 = smul.addr %s218, 8
      %s220 = scalar_lea.vmem %s0, %s219
      %s221 = smul.u32 32, %s16
      %s222 = smul.u32 32, %s16
      %p223 = scmp.lt.s32.totalorder %s222, 63
      %s224 = scalar_select %p223, %s222, 63
      %s225 = smul.addr %s224, 8
      %s226 = scalar_lea.vmem %s5, %s225
      %s227 = smul.u32 32, %s16
      %v228 = vld [vmem:[%s1] sm:$0x1]
      %v229 = vmul.f32 %v228, 0.001953125
      %v230 = vld [vmem:[%s2] sm:$0x1]
      %v231 = vmul.f32 %v230, 0.001953125
      %v232 = vmul.f32 %v229, %v229
      %v233 = vsub.f32 %v231, %v232
      %v234 = vld [vmem:[%s3] sm:$0x1]
      %v235 = vadd.f32 %v233, 1e-05
      %v236 = vrsqrt.pop %v235
      %v237 = vmul.f32 %v234, %v236
      %v238 = vld [vmem:[%s4] sm:$0x1]
      %v239 = vmul.f32 %v229, %v237
      %v240 = vsub.f32 %v238, %v239
      %v241 = vld [vmem:[%s220] sm:$0xff]
      %v242 = vld [vmem:[%s220 + $0x8] sm:$0xff]
      %v243 = vld [vmem:[%s220 + $0x10] sm:$0xff]
      %v244 = vld [vmem:[%s220 + $0x18] sm:$0xff]
      %v245 = vld [vmem:[%s220 + $0x20] sm:$0xff]
      %v246 = vld [vmem:[%s220 + $0x28] sm:$0xff]
      %v247 = vld [vmem:[%s220 + $0x30] sm:$0xff]
      %v248 = vld [vmem:[%s220 + $0x38] sm:$0xff]
      %v249 = vld [vmem:[%s220 + $0x40] sm:$0xff]
      %v250 = vld [vmem:[%s220 + $0x48] sm:$0xff]
      %v251 = vld [vmem:[%s220 + $0x50] sm:$0xff]
      %v252 = vld [vmem:[%s220 + $0x58] sm:$0xff]
      %v253 = vld [vmem:[%s220 + $0x60] sm:$0xff]
      %v254 = vld [vmem:[%s220 + $0x68] sm:$0xff]
      %v255 = vld [vmem:[%s220 + $0x70] sm:$0xff]
      %v256 = vld [vmem:[%s220 + $0x78] sm:$0xff]
      %v257 = vld [vmem:[%s220 + $0x80] sm:$0xff]
      %v258 = vld [vmem:[%s220 + $0x88] sm:$0xff]
      %v259 = vld [vmem:[%s220 + $0x90] sm:$0xff]
      %v260 = vld [vmem:[%s220 + $0x98] sm:$0xff]
      %v261 = vld [vmem:[%s220 + $0xa0] sm:$0xff]
      %v262 = vld [vmem:[%s220 + $0xa8] sm:$0xff]
      %v263 = vld [vmem:[%s220 + $0xb0] sm:$0xff]
      %v264 = vld [vmem:[%s220 + $0xb8] sm:$0xff]
      %v265 = vld [vmem:[%s220 + $0xc0] sm:$0xff]
      %v266 = vld [vmem:[%s220 + $0xc8] sm:$0xff]
      %v267 = vld [vmem:[%s220 + $0xd0] sm:$0xff]
      %v268 = vld [vmem:[%s220 + $0xd8] sm:$0xff]
      %v269 = vld [vmem:[%s220 + $0xe0] sm:$0xff]
      %v270 = vld [vmem:[%s220 + $0xe8] sm:$0xff]
      %v271 = vld [vmem:[%s220 + $0xf0] sm:$0xff]
      %v272 = vld [vmem:[%s220 + $0xf8] sm:$0xff]
      %v274 = vlaneseq
      %v275 = vshrl.u32 %v274, 7
      %v276 = vsub.s32 0, %v275
      %v277 = vrot.slane %v237, %v276
      %v279 = vmul.f32 %v241, %v277
      %v280 = vmul.f32 %v242, %v277
      %v281 = vmul.f32 %v243, %v277
      %v282 = vmul.f32 %v244, %v277
      %v283 = vmul.f32 %v245, %v277
      %v284 = vmul.f32 %v246, %v277
      %v285 = vmul.f32 %v247, %v277
      %v286 = vmul.f32 %v248, %v277
      %v287 = vmul.f32 %v249, %v277
      %v288 = vmul.f32 %v250, %v277
      %v289 = vmul.f32 %v251, %v277
      %v290 = vmul.f32 %v252, %v277
      %v291 = vmul.f32 %v253, %v277
      %v292 = vmul.f32 %v254, %v277
      %v293 = vmul.f32 %v255, %v277
      %v294 = vmul.f32 %v256, %v277
      %v295 = vmul.f32 %v257, %v277
      %v296 = vmul.f32 %v258, %v277
      %v297 = vmul.f32 %v259, %v277
      %v298 = vmul.f32 %v260, %v277
      %v299 = vmul.f32 %v261, %v277
      %v300 = vmul.f32 %v262, %v277
      %v301 = vmul.f32 %v263, %v277
      %v302 = vmul.f32 %v264, %v277
      %v303 = vmul.f32 %v265, %v277
      %v304 = vmul.f32 %v266, %v277
      %v305 = vmul.f32 %v267, %v277
      %v306 = vmul.f32 %v268, %v277
      %v307 = vmul.f32 %v269, %v277
      %v308 = vmul.f32 %v270, %v277
      %v309 = vmul.f32 %v271, %v277
      %v310 = vmul.f32 %v272, %v277
      %v312 = vlaneseq
      %v313 = vshrl.u32 %v312, 7
      %v314 = vsub.s32 0, %v313
      %v315 = vrot.slane %v240, %v314
      %v317 = vadd.f32 %v279, %v315
      %v318 = vadd.f32 %v280, %v315
      %v319 = vadd.f32 %v281, %v315
      %v320 = vadd.f32 %v282, %v315
      %v321 = vadd.f32 %v283, %v315
      %v322 = vadd.f32 %v284, %v315
      %v323 = vadd.f32 %v285, %v315
      %v324 = vadd.f32 %v286, %v315
      %v325 = vadd.f32 %v287, %v315
      %v326 = vadd.f32 %v288, %v315
      %v327 = vadd.f32 %v289, %v315
      %v328 = vadd.f32 %v290, %v315
      %v329 = vadd.f32 %v291, %v315
      %v330 = vadd.f32 %v292, %v315
      %v331 = vadd.f32 %v293, %v315
      %v332 = vadd.f32 %v294, %v315
      %v333 = vadd.f32 %v295, %v315
      %v334 = vadd.f32 %v296, %v315
      %v335 = vadd.f32 %v297, %v315
      %v336 = vadd.f32 %v298, %v315
      %v337 = vadd.f32 %v299, %v315
      %v338 = vadd.f32 %v300, %v315
      %v339 = vadd.f32 %v301, %v315
      %v340 = vadd.f32 %v302, %v315
      %v341 = vadd.f32 %v303, %v315
      %v342 = vadd.f32 %v304, %v315
      %v343 = vadd.f32 %v305, %v315
      %v344 = vadd.f32 %v306, %v315
      %v345 = vadd.f32 %v307, %v315
      %v346 = vadd.f32 %v308, %v315
      %v347 = vadd.f32 %v309, %v315
      %v348 = vadd.f32 %v310, %v315
      %v349 = vmax.f32 %v317, 0.0
      %v350 = vmax.f32 %v318, 0.0
      %v351 = vmax.f32 %v319, 0.0
      %v352 = vmax.f32 %v320, 0.0
      %v353 = vmax.f32 %v321, 0.0
      %v354 = vmax.f32 %v322, 0.0
      %v355 = vmax.f32 %v323, 0.0
      %v356 = vmax.f32 %v324, 0.0
      %v357 = vmax.f32 %v325, 0.0
      %v358 = vmax.f32 %v326, 0.0
      %v359 = vmax.f32 %v327, 0.0
      %v360 = vmax.f32 %v328, 0.0
      %v361 = vmax.f32 %v329, 0.0
      %v362 = vmax.f32 %v330, 0.0
      %v363 = vmax.f32 %v331, 0.0
      %v364 = vmax.f32 %v332, 0.0
      %v365 = vmax.f32 %v333, 0.0
      %v366 = vmax.f32 %v334, 0.0
      %v367 = vmax.f32 %v335, 0.0
      %v368 = vmax.f32 %v336, 0.0
      %v369 = vmax.f32 %v337, 0.0
      %v370 = vmax.f32 %v338, 0.0
      %v371 = vmax.f32 %v339, 0.0
      %v372 = vmax.f32 %v340, 0.0
      %v373 = vmax.f32 %v341, 0.0
      %v374 = vmax.f32 %v342, 0.0
      %v375 = vmax.f32 %v343, 0.0
      %v376 = vmax.f32 %v344, 0.0
      %v377 = vmax.f32 %v345, 0.0
      %v378 = vmax.f32 %v346, 0.0
      %v379 = vmax.f32 %v347, 0.0
      %v380 = vmax.f32 %v348, 0.0
      %381 = vst [vmem:[%s226] sm:$0xff] %v349
      %382 = vst [vmem:[%s226 + $0x8] sm:$0xff] %v350
      %383 = vst [vmem:[%s226 + $0x10] sm:$0xff] %v351
      %384 = vst [vmem:[%s226 + $0x18] sm:$0xff] %v352
      %385 = vst [vmem:[%s226 + $0x20] sm:$0xff] %v353
      %386 = vst [vmem:[%s226 + $0x28] sm:$0xff] %v354
      %387 = vst [vmem:[%s226 + $0x30] sm:$0xff] %v355
      %388 = vst [vmem:[%s226 + $0x38] sm:$0xff] %v356
      %389 = vst [vmem:[%s226 + $0x40] sm:$0xff] %v357
      %390 = vst [vmem:[%s226 + $0x48] sm:$0xff] %v358
      %391 = vst [vmem:[%s226 + $0x50] sm:$0xff] %v359
      %392 = vst [vmem:[%s226 + $0x58] sm:$0xff] %v360
      %393 = vst [vmem:[%s226 + $0x60] sm:$0xff] %v361
      %394 = vst [vmem:[%s226 + $0x68] sm:$0xff] %v362
      %395 = vst [vmem:[%s226 + $0x70] sm:$0xff] %v363
      %396 = vst [vmem:[%s226 + $0x78] sm:$0xff] %v364
      %397 = vst [vmem:[%s226 + $0x80] sm:$0xff] %v365
      %398 = vst [vmem:[%s226 + $0x88] sm:$0xff] %v366
      %399 = vst [vmem:[%s226 + $0x90] sm:$0xff] %v367
      %400 = vst [vmem:[%s226 + $0x98] sm:$0xff] %v368
      %401 = vst [vmem:[%s226 + $0xa0] sm:$0xff] %v369
      %402 = vst [vmem:[%s226 + $0xa8] sm:$0xff] %v370
      %403 = vst [vmem:[%s226 + $0xb0] sm:$0xff] %v371
      %404 = vst [vmem:[%s226 + $0xb8] sm:$0xff] %v372
      %405 = vst [vmem:[%s226 + $0xc0] sm:$0xff] %v373
      %406 = vst [vmem:[%s226 + $0xc8] sm:$0xff] %v374
      %407 = vst [vmem:[%s226 + $0xd0] sm:$0xff] %v375
      %408 = vst [vmem:[%s226 + $0xd8] sm:$0xff] %v376
      %409 = vst [vmem:[%s226 + $0xe0] sm:$0xff] %v377
      %410 = vst [vmem:[%s226 + $0xe8] sm:$0xff] %v378
      %411 = vst [vmem:[%s226 + $0xf0] sm:$0xff] %v379
      %412 = vst [vmem:[%s226 + $0xf8] sm:$0xff] %v380
      %s413 = smul.u32 32, %s16
      %p414 = scmp.lt.s32.totalorder %s413, 63
      %s415 = scalar_select %p414, %s413, 63
      %s416 = smul.addr %s415, 8
      %s417 = scalar_lea.vmem %s5, %s416
      // Predicated region
      $region41: #{_lambda_.30} parent=39 // pred_check
        %p418 = pneg %p144
      $region42: #{_lambda_.30} parent=39 // pred_check_branch
        %420 = sbr.rel (%p418) target = $region44
      $region43: #{_lambda_.30} parent=39 // pred_region
        %s421 = smul.u32 32, %s16
      $region44: #{_lambda_.30} parent=39 // pred_fallthru
        _
    $region40: #{_lambda_.30} parent=5 // pred_fallthru
      _
    %p422 = scmp.le.s32.totalorder 2, %s11
    // Predicated region
    $region45: #{_lambda_.30} parent=5 // pred_check
      %p423 = pneg %p422
    $region46: #{_lambda_.30} parent=5 // pred_check_branch
      %425 = sbr.rel (%p423) target = $region48
    $region47: #{_lambda_.30} parent=5 // pred_region
      %s426 = ssub.s32 %s11, 2
      // Predicated region
      $region49: #{_lambda_.30} parent=47 // pred_check
        %p427 = pneg %p150
      $region50: #{_lambda_.30} parent=47 // pred_check_branch
        %429 = sbr.rel (%p427) target = $region52
      $region51: #{_lambda_.30} parent=47 // pred_region
        %s430 = smul.u32 32, %s17
        %p431 = scmp.lt.s32.totalorder %s430, 63
        %s432 = scalar_select %p431, %s430, 63
        %s433 = smul.addr %s432, 8
        %s434 = scalar_lea.vmem %s5, %s433
      $region52: #{_lambda_.30} parent=47 // pred_fallthru
        _
    $region48: #{_lambda_.30} parent=5 // pred_fallthru
      _
  $region6: #{_lambda_.30} parent=0 // loop_footer
    %s15 = sadd.s32 1, %s11
  $region7: #{_lambda_.30} parent=0 // loop_footer_branch
    %10 = sbr.rel target = $region3
  $region8: #{_lambda_.30} parent=0 // loop_exit
    _

// kernel: _lambda_.32
$region0: #{_lambda_.32}
  #allocation0 [shape = 'u32[]', space=smem, size = 0x4, offset = 0x4, fixed_abs, tag = 'smem constant byte address 0x4 - core index']
  #allocation1 [shape = 'u32[144,128]{1,0:T(1,128)}', space=vmem, size = 0x12000, scoped, tag = 'internal scratch']
  %s0 = inlined_call_operand.vmem [shape: f32[128,128], index: 0, kind: input, shape index: {}]
  %s1 = inlined_call_operand.vmem [shape: f32[1,128], index: 1, kind: output, shape index: {0}]
  %s2 = inlined_call_operand.vmem [shape: f32[1,128], index: 2, kind: output, shape index: {1}]
  %3 = xla_tuple %s1, %s2
  %s4 = sld [smem:[#allocation0]]
  $region26: #{_lambda_.32} parent=0
    _
  %s6 = ssub.s32 1, %s4
  %s7 = scalar_select 0, %s6, %s4
  // Predicated region
  $region2: #{_lambda_.32} parent=0 // pred_check
    _
  $region3: #{_lambda_.32} parent=0 // pred_check_branch
    %9 = sbr.rel (0) target = $region5
  $region4: #{_lambda_.32} parent=0 // pred_region
    _
  $region5: #{_lambda_.32} parent=0 // pred_fallthru
    _
  %p10 = scmp.eq.s32.totalorder 0, 0
  // Predicated region
  $region6: #{_lambda_.32} parent=0 // pred_check
    %p11 = pneg %p10
  $region7: #{_lambda_.32} parent=0 // pred_check_branch
    %13 = sbr.rel (%p11) target = $region9
  $region8: #{_lambda_.32} parent=0 // pred_region
    %14 = vst [vmem:[%s1] sm:$0x1] 0.0
    %15 = vst [vmem:[%s2] sm:$0x1] 0.0
  $region9: #{_lambda_.32} parent=0 // pred_fallthru
    _
  %v16 = vld [vmem:[%s0] sm:$0xff]
  %v17 = vld [vmem:[%s0 + $0x8] sm:$0xff]
  %v18 = vld [vmem:[%s0 + $0x10] sm:$0xff]
  %v19 = vld [vmem:[%s0 + $0x18] sm:$0xff]
  %v20 = vld [vmem:[%s0 + $0x20] sm:$0xff]
  %v21 = vld [vmem:[%s0 + $0x28] sm:$0xff]
  %v22 = vld [vmem:[%s0 + $0x30] sm:$0xff]
  %v23 = vld [vmem:[%s0 + $0x38] sm:$0xff]
  %v24 = vld [vmem:[%s0 + $0x40] sm:$0xff]
  %v25 = vld [vmem:[%s0 + $0x48] sm:$0xff]
  %v26 = vld [vmem:[%s0 + $0x50] sm:$0xff]
  %v27 = vld [vmem:[%s0 + $0x58] sm:$0xff]
  %v28 = vld [vmem:[%s0 + $0x60] sm:$0xff]
  %v29 = vld [vmem:[%s0 + $0x68] sm:$0xff]
  %v30 = vld [vmem:[%s0 + $0x70] sm:$0xff]
  %v31 = vld [vmem:[%s0 + $0x78] sm:$0xff]
  %v32 = vld [vmem:[%s1] sm:$0x1]
  %v33 = vadd.f32 %v16, %v17
  %v34 = vadd.f32 %v33, %v18
  %v35 = vadd.f32 %v34, %v19
  %v36 = vadd.f32 %v35, %v20
  %v37 = vadd.f32 %v36, %v21
  %v38 = vadd.f32 %v37, %v22
  %v39 = vadd.f32 %v38, %v23
  %v40 = vadd.f32 %v39, %v24
  %v41 = vadd.f32 %v40, %v25
  %v42 = vadd.f32 %v41, %v26
  %v43 = vadd.f32 %v42, %v27
  %v44 = vadd.f32 %v43, %v28
  %v45 = vadd.f32 %v44, %v29
  %v46 = vadd.f32 %v45, %v30
  %v47 = vadd.f32 %v46, %v31
  %v48 = vrot.slane %v47, 4
  %v49 = vadd.f32 %v47, %v48
  %v50 = vrot.slane %v49, 2
  %v51 = vadd.f32 %v49, %v50
  %v52 = vrot.slane %v51, 1
  %v53 = vadd.f32 %v51, %v52
  %v54 = vadd.f32 %v32, %v53
  %55 = vst [vmem:[%s1] sm:$0x1] %v54
  %v56 = vld [vmem:[%s2] sm:$0x1]
  %v57 = vmul.f32 %v16, %v16
  %v58 = vmul.f32 %v17, %v17
  %v59 = vmul.f32 %v18, %v18
  %v60 = vmul.f32 %v19, %v19
  %v61 = vmul.f32 %v20, %v20
  %v62 = vmul.f32 %v21, %v21
  %v63 = vmul.f32 %v22, %v22
  %v64 = vmul.f32 %v23, %v23
  %v65 = vmul.f32 %v24, %v24
  %v66 = vmul.f32 %v25, %v25
  %v67 = vmul.f32 %v26, %v26
  %v68 = vmul.f32 %v27, %v27
  %v69 = vmul.f32 %v28, %v28
  %v70 = vmul.f32 %v29, %v29
  %v71 = vmul.f32 %v30, %v30
  %v72 = vmul.f32 %v31, %v31
  %v73 = vadd.f32 %v57, %v58
  %v74 = vadd.f32 %v73, %v59
  %v75 = vadd.f32 %v74, %v60
  %v76 = vadd.f32 %v75, %v61
  %v77 = vadd.f32 %v76, %v62
  %v78 = vadd.f32 %v77, %v63
  %v79 = vadd.f32 %v78, %v64
  %v80 = vadd.f32 %v79, %v65
  %v81 = vadd.f32 %v80, %v66
  %v82 = vadd.f32 %v81, %v67
  %v83 = vadd.f32 %v82, %v68
  %v84 = vadd.f32 %v83, %v69
  %v85 = vadd.f32 %v84, %v70
  %v86 = vadd.f32 %v85, %v71
  %v87 = vadd.f32 %v86, %v72
  %v88 = vrot.slane %v87, 4
  %v89 = vadd.f32 %v87, %v88
  %v90 = vrot.slane %v89, 2
  %v91 = vadd.f32 %v89, %v90
  %v92 = vrot.slane %v91, 1
  %v93 = vadd.f32 %v91, %v92
  %v94 = vadd.f32 %v56, %v93
  %95 = vst [vmem:[%s2] sm:$0x1] %v94
  // Predicated region
  $region10: #{_lambda_.32} parent=0 // pred_check
    _
  $region11: #{_lambda_.32} parent=0 // pred_check_branch
    %97 = sbr.rel (0) target = $region13
  $region12: #{_lambda_.32} parent=0 // pred_region
    _
  $region13: #{_lambda_.32} parent=0 // pred_fallthru
    _
  // Predicated region
  $region14: #{_lambda_.32} parent=0 // pred_check
    _
  $region15: #{_lambda_.32} parent=0 // pred_check_branch
    %99 = sbr.rel (0) target = $region17
  $region16: #{_lambda_.32} parent=0 // pred_region
    _
  $region17: #{_lambda_.32} parent=0 // pred_fallthru
    _
  // Predicated region
  $region18: #{_lambda_.32} parent=0 // pred_check
    _
  $region19: #{_lambda_.32} parent=0 // pred_check_branch
    %101 = sbr.rel (0) target = $region21
  $region20: #{_lambda_.32} parent=0 // pred_region
    _
  $region21: #{_lambda_.32} parent=0 // pred_fallthru
    _
  // Predicated region
  $region22: #{_lambda_.32} parent=0 // pred_check
    _
  $region23: #{_lambda_.32} parent=0 // pred_check_branch
    %103 = sbr.rel (0) target = $region25
  $region24: #{_lambda_.32} parent=0 // pred_region
    _
  $region25: #{_lambda_.32} parent=0 // pred_fallthru
    _

// kernel: _lambda_.31
$region0: #{_lambda_.31}
  #allocation0 [shape = 'u32[]', space=smem, size = 0x4, offset = 0x4, fixed_abs, tag = 'smem constant byte address 0x4 - core index']
  #allocation1 [shape = 'u32[144,128]{1,0:T(1,128)}', space=vmem, size = 0x12000, scoped, tag = 'internal scratch']
  #allocation2 [shape = 'f32[128,128]{1,0:T(8,128)}', space=vmem, size = 0x10000, scoped, tag = 'scratch operand']
  %s0 = inlined_call_operand.vmem [shape: bf16[128,128], index: 0, kind: input, shape index: {}]
  %s1 = inlined_call_operand.vmem [shape: bf16[128,128], index: 1, kind: input, shape index: {}]
  %s2 = inlined_call_operand.vmem [shape: f32[1,128], index: 2, kind: input, shape index: {}]
  %s3 = inlined_call_operand.vmem [shape: f32[128,128], index: 3, kind: output, shape index: {}]
  %s4 = sld [smem:[#allocation0]]
  $region30: #{_lambda_.31} parent=0
    _
  %s6 = ssub.s32 1, %s4
  %s7 = scalar_select 0, %s6, %s4
  // Predicated region
  $region2: #{_lambda_.31} parent=0 // pred_check
    _
  $region3: #{_lambda_.31} parent=0 // pred_check_branch
    %9 = sbr.rel (0) target = $region5
  $region4: #{_lambda_.31} parent=0 // pred_region
    _
  $region5: #{_lambda_.31} parent=0 // pred_fallthru
    _
  // Predicated region
  $region6: #{_lambda_.31} parent=0 // pred_check
    _
  $region7: #{_lambda_.31} parent=0 // pred_check_branch
    %11 = sbr.rel (0) target = $region9
  $region8: #{_lambda_.31} parent=0 // pred_region
    _
  $region9: #{_lambda_.31} parent=0 // pred_fallthru
    _
  // Predicated region
  $region10: #{_lambda_.31} parent=0 // pred_check
    _
  $region11: #{_lambda_.31} parent=0 // pred_check_branch
    %13 = sbr.rel (0) target = $region13
  $region12: #{_lambda_.31} parent=0 // pred_region
    _
  $region13: #{_lambda_.31} parent=0 // pred_fallthru
    _
  %p15 = scmp.eq.s32.totalorder 0, 0
  // Predicated region
  $region14: #{_lambda_.31} parent=0 // pred_check
    %p16 = pneg %p15
  $region15: #{_lambda_.31} parent=0 // pred_check_branch
    %18 = sbr.rel (%p16) target = $region17
  $region16: #{_lambda_.31} parent=0 // pred_region
    %19 = vst [vmem:[#allocation2] sm:$0xff] 0.0
    %20 = vst [vmem:[#allocation2 + $0x8] sm:$0xff] 0.0
    %21 = vst [vmem:[#allocation2 + $0x10] sm:$0xff] 0.0
    %22 = vst [vmem:[#allocation2 + $0x18] sm:$0xff] 0.0
    %23 = vst [vmem:[#allocation2 + $0x20] sm:$0xff] 0.0
    %24 = vst [vmem:[#allocation2 + $0x28] sm:$0xff] 0.0
    %25 = vst [vmem:[#allocation2 + $0x30] sm:$0xff] 0.0
    %26 = vst [vmem:[#allocation2 + $0x38] sm:$0xff] 0.0
    %27 = vst [vmem:[#allocation2 + $0x40] sm:$0xff] 0.0
    %28 = vst [vmem:[#allocation2 + $0x48] sm:$0xff] 0.0
    %29 = vst [vmem:[#allocation2 + $0x50] sm:$0xff] 0.0
    %30 = vst [vmem:[#allocation2 + $0x58] sm:$0xff] 0.0
    %31 = vst [vmem:[#allocation2 + $0x60] sm:$0xff] 0.0
    %32 = vst [vmem:[#allocation2 + $0x68] sm:$0xff] 0.0
    %33 = vst [vmem:[#allocation2 + $0x70] sm:$0xff] 0.0
    %34 = vst [vmem:[#allocation2 + $0x78] sm:$0xff] 0.0
  $region17: #{_lambda_.31} parent=0 // pred_fallthru
    _
  %v35 = vld [vmem:[#allocation2] sm:$0xff]
  %v36 = vld [vmem:[#allocation2 + $0x8] sm:$0xff]
  %v37 = vld [vmem:[#allocation2 + $0x10] sm:$0xff]
  %v38 = vld [vmem:[#allocation2 + $0x18] sm:$0xff]
  %v39 = vld [vmem:[#allocation2 + $0x20] sm:$0xff]
  %v40 = vld [vmem:[#allocation2 + $0x28] sm:$0xff]
  %v41 = vld [vmem:[#allocation2 + $0x30] sm:$0xff]
  %v42 = vld [vmem:[#allocation2 + $0x38] sm:$0xff]
  %v43 = vld [vmem:[#allocation2 + $0x40] sm:$0xff]
  %v44 = vld [vmem:[#allocation2 + $0x48] sm:$0xff]
  %v45 = vld [vmem:[#allocation2 + $0x50] sm:$0xff]
  %v46 = vld [vmem:[#allocation2 + $0x58] sm:$0xff]
  %v47 = vld [vmem:[#allocation2 + $0x60] sm:$0xff]
  %v48 = vld [vmem:[#allocation2 + $0x68] sm:$0xff]
  %v49 = vld [vmem:[#allocation2 + $0x70] sm:$0xff]
  %v50 = vld [vmem:[#allocation2 + $0x78] sm:$0xff]
  %v51 = vld [vmem:[%s0] sm:$0xf]
  %v52 = vld [vmem:[%s0 + $0x4] sm:$0xf]
  %v53 = vld [vmem:[%s0 + $0x8] sm:$0xf]
  %v54 = vld [vmem:[%s0 + $0xc] sm:$0xf]
  %v55 = vld [vmem:[%s0 + $0x10] sm:$0xf]
  %v56 = vld [vmem:[%s0 + $0x14] sm:$0xf]
  %v57 = vld [vmem:[%s0 + $0x18] sm:$0xf]
  %v58 = vld [vmem:[%s0 + $0x1c] sm:$0xf]
  %v59 = vld [vmem:[%s0 + $0x20] sm:$0xf]
  %v60 = vld [vmem:[%s0 + $0x24] sm:$0xf]
  %v61 = vld [vmem:[%s0 + $0x28] sm:$0xf]
  %v62 = vld [vmem:[%s0 + $0x2c] sm:$0xf]
  %v63 = vld [vmem:[%s0 + $0x30] sm:$0xf]
  %v64 = vld [vmem:[%s0 + $0x34] sm:$0xf]
  %v65 = vld [vmem:[%s0 + $0x38] sm:$0xf]
  %v66 = vld [vmem:[%s0 + $0x3c] sm:$0xf]
  %v67 = vld [vmem:[%s1] sm:$0xf]
  %v68 = vld [vmem:[%s1 + $0x4] sm:$0xf]
  %v69 = vld [vmem:[%s1 + $0x8] sm:$0xf]
  %v70 = vld [vmem:[%s1 + $0xc] sm:$0xf]
  %v71 = vld [vmem:[%s1 + $0x10] sm:$0xf]
  %v72 = vld [vmem:[%s1 + $0x14] sm:$0xf]
  %v73 = vld [vmem:[%s1 + $0x18] sm:$0xf]
  %v74 = vld [vmem:[%s1 + $0x1c] sm:$0xf]
  %v75 = vld [vmem:[%s1 + $0x20] sm:$0xf]
  %v76 = vld [vmem:[%s1 + $0x24] sm:$0xf]
  %v77 = vld [vmem:[%s1 + $0x28] sm:$0xf]
  %v78 = vld [vmem:[%s1 + $0x2c] sm:$0xf]
  %v79 = vld [vmem:[%s1 + $0x30] sm:$0xf]
  %v80 = vld [vmem:[%s1 + $0x34] sm:$0xf]
  %v81 = vld [vmem:[%s1 + $0x38] sm:$0xf]
  %v82 = vld [vmem:[%s1 + $0x3c] sm:$0xf]
  %v99 = vunpack.c.l.b16 %v51
  %v100 = vunpack.c.l.b16 %v52
  %v101 = vunpack.c.l.b16 %v53
  %v102 = vunpack.c.l.b16 %v54
  %v103 = vunpack.c.l.b16 %v55
  %v104 = vunpack.c.l.b16 %v56
  %v105 = vunpack.c.l.b16 %v57
  %v106 = vunpack.c.l.b16 %v58
  %v107 = vunpack.c.l.b16 %v59
  %v108 = vunpack.c.l.b16 %v60
  %v109 = vunpack.c.l.b16 %v61
  %v110 = vunpack.c.l.b16 %v62
  %v111 = vunpack.c.l.b16 %v63
  %v112 = vunpack.c.l.b16 %v64
  %v113 = vunpack.c.l.b16 %v65
  %v114 = vunpack.c.l.b16 %v66
  %v115 = vpack.c.b16 %v100, %v99
  %v116 = vpack.c.b16 %v102, %v101
  %v117 = vpack.c.b16 %v104, %v103
  %v118 = vpack.c.b16 %v106, %v105
  %v119 = vpack.c.b16 %v108, %v107
  %v120 = vpack.c.b16 %v110, %v109
  %v121 = vpack.c.b16 %v112, %v111
  %v122 = vpack.c.b16 %v114, %v113
  %v147 = vunpack.c.l.b16 %v67
  %v148 = vunpack.c.l.b16 %v68
  %v149 = vunpack.c.l.b16 %v69
  %v150 = vunpack.c.l.b16 %v70
  %v151 = vunpack.c.l.b16 %v71
  %v152 = vunpack.c.l.b16 %v72
  %v153 = vunpack.c.l.b16 %v73
  %v154 = vunpack.c.l.b16 %v74
  %v155 = vunpack.c.l.b16 %v75
  %v156 = vunpack.c.l.b16 %v76
  %v157 = vunpack.c.l.b16 %v77
  %v158 = vunpack.c.l.b16 %v78
  %v159 = vunpack.c.l.b16 %v79
  %v160 = vunpack.c.l.b16 %v80
  %v161 = vunpack.c.l.b16 %v81
  %v162 = vunpack.c.l.b16 %v82
  %v163 = vpack.c.b16 %v148, %v147
  %v164 = vpack.c.b16 %v150, %v149
  %v165 = vpack.c.b16 %v152, %v151
  %v166 = vpack.c.b16 %v154, %v153
  %v167 = vpack.c.b16 %v156, %v155
  %v168 = vpack.c.b16 %v158, %v157
  %v169 = vpack.c.b16 %v160, %v159
  %v170 = vpack.c.b16 %v162, %v161
  %179 = vmatprep.subr.bf16.mxu0 0
  %180 = vmatpush1.bf16.msra.mxu0 %v170
  %181 = vmatprep.subr.bf16.mxu0 0
  %182 = vmatpush1.bf16.msra.mxu0 %v169
  %183 = vmatprep.subr.bf16.mxu0 0
  %184 = vmatpush1.bf16.msra.mxu0 %v168
  %185 = vmatprep.subr.bf16.mxu0 0
  %186 = vmatpush1.bf16.msra.mxu0 %v167
  %187 = vmatprep.subr.bf16.mxu0 0
  %188 = vmatpush1.bf16.msra.mxu0 %v166
  %189 = vmatprep.subr.bf16.mxu0 0
  %190 = vmatpush1.bf16.msra.mxu0 %v165
  %191 = vmatprep.subr.bf16.mxu0 0
  %192 = vmatpush1.bf16.msra.mxu0 %v164
  %193 = vmatprep.subr.bf16.mxu0 0
  %194 = vmatpush1.bf16.msra.mxu0 %v163
  %195 = vmatprep.subr.bf16.mxu0 0
  %196 = vmatpush2.bf16.msra.mxu0 0
  %197 = vmatprep.subr.bf16.mxu0 0
  %198 = vmatpush2.bf16.msra.mxu0 0
  %199 = vmatprep.subr.bf16.mxu0 0
  %200 = vmatpush2.bf16.msra.mxu0 0
  %201 = vmatprep.subr.bf16.mxu0 0
  %202 = vmatpush2.bf16.msra.mxu0 0
  %203 = vmatprep.subr.bf16.mxu0 0
  %204 = vmatpush2.bf16.msra.mxu0 0
  %205 = vmatprep.subr.bf16.mxu0 0
  %206 = vmatpush2.bf16.msra.mxu0 0
  %207 = vmatprep.subr.bf16.mxu0 0
  %208 = vmatpush2.bf16.msra.mxu0 0
  %209 = vmatprep.subr.bf16.mxu0 0
  %210 = vmatpush2.bf16.msra.mxu0 0
  %211 = vmatprep.mubr.bf16.mxu0 0
  %212 = vmatmul.mubr.bf16.gmra.mxu0 %v115
  %v213 = vpop.f32.mrf.mxu0
  %v214 = vadd.f32 0.0, %v213
  %v215 = vpop.f32.mrf.mxu0
  %v216 = vpop.f32.mrf.mxu0
  %v217 = vadd.f32 0.0, %v216
  %v218 = vpop.f32.mrf.mxu0
  %219 = vmatprep.mubr.bf16.mxu0 0
  %220 = vmatmul.mubr.bf16.gmra.mxu0 %v116
  %v221 = vpop.f32.mrf.mxu0
  %v222 = vadd.f32 0.0, %v221
  %v223 = vpop.f32.mrf.mxu0
  %v224 = vpop.f32.mrf.mxu0
  %v225 = vadd.f32 0.0, %v224
  %v226 = vpop.f32.mrf.mxu0
  %227 = vmatprep.mubr.bf16.mxu0 0
  %228 = vmatmul.mubr.bf16.gmra.mxu0 %v117
  %v229 = vpop.f32.mrf.mxu0
  %v230 = vadd.f32 0.0, %v229
  %v231 = vpop.f32.mrf.mxu0
  %v232 = vpop.f32.mrf.mxu0
  %v233 = vadd.f32 0.0, %v232
  %v234 = vpop.f32.mrf.mxu0
  %235 = vmatprep.mubr.bf16.mxu0 0
  %236 = vmatmul.mubr.bf16.gmra.mxu0 %v118
  %v237 = vpop.f32.mrf.mxu0
  %v238 = vadd.f32 0.0, %v237
  %v239 = vpop.f32.mrf.mxu0
  %v240 = vpop.f32.mrf.mxu0
  %v241 = vadd.f32 0.0, %v240
  %v242 = vpop.f32.mrf.mxu0
  %243 = vmatprep.mubr.bf16.mxu0 0
  %244 = vmatmul.mubr.bf16.gmra.mxu0 %v119
  %v245 = vpop.f32.mrf.mxu0
  %v246 = vadd.f32 0.0, %v245
  %v247 = vpop.f32.mrf.mxu0
  %v248 = vpop.f32.mrf.mxu0
  %v249 = vadd.f32 0.0, %v248
  %v250 = vpop.f32.mrf.mxu0
  %251 = vmatprep.mubr.bf16.mxu0 0
  %252 = vmatmul.mubr.bf16.gmra.mxu0 %v120
  %v253 = vpop.f32.mrf.mxu0
  %v254 = vadd.f32 0.0, %v253
  %v255 = vpop.f32.mrf.mxu0
  %v256 = vpop.f32.mrf.mxu0
  %v257 = vadd.f32 0.0, %v256
  %v258 = vpop.f32.mrf.mxu0
  %259 = vmatprep.mubr.bf16.mxu0 0
  %260 = vmatmul.mubr.bf16.gmra.mxu0 %v121
  %v261 = vpop.f32.mrf.mxu0
  %v262 = vadd.f32 0.0, %v261
  %v263 = vpop.f32.mrf.mxu0
  %v264 = vpop.f32.mrf.mxu0
  %v265 = vadd.f32 0.0, %v264
  %v266 = vpop.f32.mrf.mxu0
  %267 = vmatprep.mubr.bf16.mxu0 0
  %268 = vmatmul.mubr.bf16.gmra.mxu0 %v122
  %v269 = vpop.f32.mrf.mxu0
  %v270 = vadd.f32 0.0, %v269
  %v271 = vpop.f32.mrf.mxu0
  %v272 = vpop.f32.mrf.mxu0
  %v273 = vadd.f32 0.0, %v272
  %v274 = vpop.f32.mrf.mxu0
  %275 = vdwg.mxu0
  %v276 = vadd.f32 %v35, %v214
  %v277 = vadd.f32 %v36, %v217
  %v278 = vadd.f32 %v37, %v222
  %v279 = vadd.f32 %v38, %v225
  %v280 = vadd.f32 %v39, %v230
  %v281 = vadd.f32 %v40, %v233
  %v282 = vadd.f32 %v41, %v238
  %v283 = vadd.f32 %v42, %v241
  %v284 = vadd.f32 %v43, %v246
  %v285 = vadd.f32 %v44, %v249
  %v286 = vadd.f32 %v45, %v254
  %v287 = vadd.f32 %v46, %v257
  %v288 = vadd.f32 %v47, %v262
  %v289 = vadd.f32 %v48, %v265
  %v290 = vadd.f32 %v49, %v270
  %v291 = vadd.f32 %v50, %v273
  %292 = vst [vmem:[#allocation2] sm:$0xff] %v276
  %293 = vst [vmem:[#allocation2 + $0x8] sm:$0xff] %v277
  %294 = vst [vmem:[#allocation2 + $0x10] sm:$0xff] %v278
  %295 = vst [vmem:[#allocation2 + $0x18] sm:$0xff] %v279
  %296 = vst [vmem:[#allocation2 + $0x20] sm:$0xff] %v280
  %297 = vst [vmem:[#allocation2 + $0x28] sm:$0xff] %v281
  %298 = vst [vmem:[#allocation2 + $0x30] sm:$0xff] %v282
  %299 = vst [vmem:[#allocation2 + $0x38] sm:$0xff] %v283
  %300 = vst [vmem:[#allocation2 + $0x40] sm:$0xff] %v284
  %301 = vst [vmem:[#allocation2 + $0x48] sm:$0xff] %v285
  %302 = vst [vmem:[#allocation2 + $0x50] sm:$0xff] %v286
  %303 = vst [vmem:[#allocation2 + $0x58] sm:$0xff] %v287
  %304 = vst [vmem:[#allocation2 + $0x60] sm:$0xff] %v288
  %305 = vst [vmem:[#allocation2 + $0x68] sm:$0xff] %v289
  %306 = vst [vmem:[#allocation2 + $0x70] sm:$0xff] %v290
  %307 = vst [vmem:[#allocation2 + $0x78] sm:$0xff] %v291
  // Predicated region
  $region18: #{_lambda_.31} parent=0 // pred_check
    %p308 = pneg %p15
  $region19: #{_lambda_.31} parent=0 // pred_check_branch
    %310 = sbr.rel (%p308) target = $region21
  $region20: #{_lambda_.31} parent=0 // pred_region
    %v311 = vld [vmem:[#allocation2] sm:$0xff]
    %v312 = vld [vmem:[#allocation2 + $0x8] sm:$0xff]
    %v313 = vld [vmem:[#allocation2 + $0x10] sm:$0xff]
    %v314 = vld [vmem:[#allocation2 + $0x18] sm:$0xff]
    %v315 = vld [vmem:[#allocation2 + $0x20] sm:$0xff]
    %v316 = vld [vmem:[#allocation2 + $0x28] sm:$0xff]
    %v317 = vld [vmem:[#allocation2 + $0x30] sm:$0xff]
    %v318 = vld [vmem:[#allocation2 + $0x38] sm:$0xff]
    %v319 = vld [vmem:[#allocation2 + $0x40] sm:$0xff]
    %v320 = vld [vmem:[#allocation2 + $0x48] sm:$0xff]
    %v321 = vld [vmem:[#allocation2 + $0x50] sm:$0xff]
    %v322 = vld [vmem:[#allocation2 + $0x58] sm:$0xff]
    %v323 = vld [vmem:[#allocation2 + $0x60] sm:$0xff]
    %v324 = vld [vmem:[#allocation2 + $0x68] sm:$0xff]
    %v325 = vld [vmem:[#allocation2 + $0x70] sm:$0xff]
    %v326 = vld [vmem:[#allocation2 + $0x78] sm:$0xff]
    %v327 = vld [vmem:[%s2] sm:$0x1]
    %v329 = vlaneseq
    %v330 = vshrl.u32 %v329, 7
    %v331 = vsub.s32 0, %v330
    %v332 = vrot.slane %v327, %v331
    %v334 = vadd.f32 %v311, %v332
    %v335 = vadd.f32 %v312, %v332
    %v336 = vadd.f32 %v313, %v332
    %v337 = vadd.f32 %v314, %v332
    %v338 = vadd.f32 %v315, %v332
    %v339 = vadd.f32 %v316, %v332
    %v340 = vadd.f32 %v317, %v332
    %v341 = vadd.f32 %v318, %v332
    %v342 = vadd.f32 %v319, %v332
    %v343 = vadd.f32 %v320, %v332
    %v344 = vadd.f32 %v321, %v332
    %v345 = vadd.f32 %v322, %v332
    %v346 = vadd.f32 %v323, %v332
    %v347 = vadd.f32 %v324, %v332
    %v348 = vadd.f32 %v325, %v332
    %v349 = vadd.f32 %v326, %v332
    %350 = vst [vmem:[%s3] sm:$0xff] %v334
    %351 = vst [vmem:[%s3 + $0x8] sm:$0xff] %v335
    %352 = vst [vmem:[%s3 + $0x10] sm:$0xff] %v336
    %353 = vst [vmem:[%s3 + $0x18] sm:$0xff] %v337
    %354 = vst [vmem:[%s3 + $0x20] sm:$0xff] %v338
    %355 = vst [vmem:[%s3 + $0x28] sm:$0xff] %v339
    %356 = vst [vmem:[%s3 + $0x30] sm:$0xff] %v340
    %357 = vst [vmem:[%s3 + $0x38] sm:$0xff] %v341
    %358 = vst [vmem:[%s3 + $0x40] sm:$0xff] %v342
    %359 = vst [vmem:[%s3 + $0x48] sm:$0xff] %v343
    %360 = vst [vmem:[%s3 + $0x50] sm:$0xff] %v344
    %361 = vst [vmem:[%s3 + $0x58] sm:$0xff] %v345
    %362 = vst [vmem:[%s3 + $0x60] sm:$0xff] %v346
    %363 = vst [vmem:[%s3 + $0x68] sm:$0xff] %v347
    %364 = vst [vmem:[%s3 + $0x70] sm:$0xff] %v348
    %365 = vst [vmem:[%s3 + $0x78] sm:$0xff] %v349
  $region21: #{_lambda_.31} parent=0 // pred_fallthru
    _
  // Predicated region
  $region22: #{_lambda_.31} parent=0 // pred_check
    _
  $region23: #{_lambda_.31} parent=0 // pred_check_branch
    %367 = sbr.rel (0) target = $region25
  $region24: #{_lambda_.31} parent=0 // pred_region
    _
  $region25: #{_lambda_.31} parent=0 // pred_fallthru
    _
  // Predicated region
  $region26: #{_lambda_.31} parent=0 // pred_check
    _
  $region27: #{_lambda_.31} parent=0 // pred_check_branch
    %369 = sbr.rel (0) target = $region29
  $region28: #{_lambda_.31} parent=0 // pred_region
    _
  $region29: #{_lambda_.31} parent=0 // pred_fallthru
    _

// kernel: _lambda_.33
$region0: #{_lambda_.33}
  #allocation0 [shape = 'u32[]', space=smem, size = 0x4, offset = 0x4, fixed_abs, tag = 'smem constant byte address 0x4 - core index']
  #allocation1 [shape = 'u32[144,128]{1,0:T(1,128)}', space=vmem, size = 0x12000, scoped, tag = 'internal scratch']
  %s0 = inlined_call_operand.vmem [shape: f32[128,128], index: 0, kind: input, shape index: {}]
  %s1 = inlined_call_operand.vmem [shape: f32[1,128], index: 1, kind: input, shape index: {}]
  %s2 = inlined_call_operand.vmem [shape: f32[1,128], index: 2, kind: input, shape index: {}]
  %s3 = inlined_call_operand.vmem [shape: f32[1,128], index: 3, kind: input, shape index: {}]
  %s4 = inlined_call_operand.vmem [shape: f32[1,128], index: 4, kind: input, shape index: {}]
  %s5 = inlined_call_operand.vmem [shape: f32[128,128], index: 5, kind: output, shape index: {}]
  %s6 = sld [smem:[#allocation0]]
  $region30: #{_lambda_.33} parent=0
    _
  %s8 = ssub.s32 1, %s6
  %s9 = scalar_select 0, %s8, %s6
  // Predicated region
  $region2: #{_lambda_.33} parent=0 // pred_check
    _
  $region3: #{_lambda_.33} parent=0 // pred_check_branch
    %11 = sbr.rel (0) target = $region5
  $region4: #{_lambda_.33} parent=0 // pred_region
    _
  $region5: #{_lambda_.33} parent=0 // pred_fallthru
    _
  // Predicated region
  $region6: #{_lambda_.33} parent=0 // pred_check
    _
  $region7: #{_lambda_.33} parent=0 // pred_check_branch
    %13 = sbr.rel (0) target = $region9
  $region8: #{_lambda_.33} parent=0 // pred_region
    _
  $region9: #{_lambda_.33} parent=0 // pred_fallthru
    _
  // Predicated region
  $region10: #{_lambda_.33} parent=0 // pred_check
    _
  $region11: #{_lambda_.33} parent=0 // pred_check_branch
    %15 = sbr.rel (0) target = $region13
  $region12: #{_lambda_.33} parent=0 // pred_region
    _
  $region13: #{_lambda_.33} parent=0 // pred_fallthru
    _
  // Predicated region
  $region14: #{_lambda_.33} parent=0 // pred_check
    _
  $region15: #{_lambda_.33} parent=0 // pred_check_branch
    %17 = sbr.rel (0) target = $region17
  $region16: #{_lambda_.33} parent=0 // pred_region
    _
  $region17: #{_lambda_.33} parent=0 // pred_fallthru
    _
  // Predicated region
  $region18: #{_lambda_.33} parent=0 // pred_check
    _
  $region19: #{_lambda_.33} parent=0 // pred_check_branch
    %19 = sbr.rel (0) target = $region21
  $region20: #{_lambda_.33} parent=0 // pred_region
    _
  $region21: #{_lambda_.33} parent=0 // pred_fallthru
    _
  %v20 = vld [vmem:[%s1] sm:$0x1]
  %v21 = vmul.f32 %v20, 0.0078125
  %v22 = vld [vmem:[%s2] sm:$0x1]
  %v23 = vmul.f32 %v22, 0.0078125
  %v24 = vmul.f32 %v21, %v21
  %v25 = vsub.f32 %v23, %v24
  %v26 = vld [vmem:[%s3] sm:$0x1]
  %v27 = vadd.f32 %v25, 1e-05
  %v28 = vrsqrt.pop %v27
  %v29 = vmul.f32 %v26, %v28
  %v30 = vld [vmem:[%s4] sm:$0x1]
  %v31 = vmul.f32 %v21, %v29
  %v32 = vsub.f32 %v30, %v31
  %v33 = vld [vmem:[%s0] sm:$0xff]
  %v34 = vld [vmem:[%s0 + $0x8] sm:$0xff]
  %v35 = vld [vmem:[%s0 + $0x10] sm:$0xff]
  %v36 = vld [vmem:[%s0 + $0x18] sm:$0xff]
  %v37 = vld [vmem:[%s0 + $0x20] sm:$0xff]
  %v38 = vld [vmem:[%s0 + $0x28] sm:$0xff]
  %v39 = vld [vmem:[%s0 + $0x30] sm:$0xff]
  %v40 = vld [vmem:[%s0 + $0x38] sm:$0xff]
  %v41 = vld [vmem:[%s0 + $0x40] sm:$0xff]
  %v42 = vld [vmem:[%s0 + $0x48] sm:$0xff]
  %v43 = vld [vmem:[%s0 + $0x50] sm:$0xff]
  %v44 = vld [vmem:[%s0 + $0x58] sm:$0xff]
  %v45 = vld [vmem:[%s0 + $0x60] sm:$0xff]
  %v46 = vld [vmem:[%s0 + $0x68] sm:$0xff]
  %v47 = vld [vmem:[%s0 + $0x70] sm:$0xff]
  %v48 = vld [vmem:[%s0 + $0x78] sm:$0xff]
  %v50 = vlaneseq
  %v51 = vshrl.u32 %v50, 7
  %v52 = vsub.s32 0, %v51
  %v53 = vrot.slane %v29, %v52
  %v55 = vmul.f32 %v33, %v53
  %v56 = vmul.f32 %v34, %v53
  %v57 = vmul.f32 %v35, %v53
  %v58 = vmul.f32 %v36, %v53
  %v59 = vmul.f32 %v37, %v53
  %v60 = vmul.f32 %v38, %v53
  %v61 = vmul.f32 %v39, %v53
  %v62 = vmul.f32 %v40, %v53
  %v63 = vmul.f32 %v41, %v53
  %v64 = vmul.f32 %v42, %v53
  %v65 = vmul.f32 %v43, %v53
  %v66 = vmul.f32 %v44, %v53
  %v67 = vmul.f32 %v45, %v53
  %v68 = vmul.f32 %v46, %v53
  %v69 = vmul.f32 %v47, %v53
  %v70 = vmul.f32 %v48, %v53
  %v72 = vlaneseq
  %v73 = vshrl.u32 %v72, 7
  %v74 = vsub.s32 0, %v73
  %v75 = vrot.slane %v32, %v74
  %v77 = vadd.f32 %v55, %v75
  %v78 = vadd.f32 %v56, %v75
  %v79 = vadd.f32 %v57, %v75
  %v80 = vadd.f32 %v58, %v75
  %v81 = vadd.f32 %v59, %v75
  %v82 = vadd.f32 %v60, %v75
  %v83 = vadd.f32 %v61, %v75
  %v84 = vadd.f32 %v62, %v75
  %v85 = vadd.f32 %v63, %v75
  %v86 = vadd.f32 %v64, %v75
  %v87 = vadd.f32 %v65, %v75
  %v88 = vadd.f32 %v66, %v75
  %v89 = vadd.f32 %v67, %v75
  %v90 = vadd.f32 %v68, %v75
  %v91 = vadd.f32 %v69, %v75
  %v92 = vadd.f32 %v70, %v75
  %v93 = vmax.f32 %v77, 0.0
  %v94 = vmax.f32 %v78, 0.0
  %v95 = vmax.f32 %v79, 0.0
  %v96 = vmax.f32 %v80, 0.0
  %v97 = vmax.f32 %v81, 0.0
  %v98 = vmax.f32 %v82, 0.0
  %v99 = vmax.f32 %v83, 0.0
  %v100 = vmax.f32 %v84, 0.0
  %v101 = vmax.f32 %v85, 0.0
  %v102 = vmax.f32 %v86, 0.0
  %v103 = vmax.f32 %v87, 0.0
  %v104 = vmax.f32 %v88, 0.0
  %v105 = vmax.f32 %v89, 0.0
  %v106 = vmax.f32 %v90, 0.0
  %v107 = vmax.f32 %v91, 0.0
  %v108 = vmax.f32 %v92, 0.0
  %109 = vst [vmem:[%s5] sm:$0xff] %v93
  %110 = vst [vmem:[%s5 + $0x8] sm:$0xff] %v94
  %111 = vst [vmem:[%s5 + $0x10] sm:$0xff] %v95
  %112 = vst [vmem:[%s5 + $0x18] sm:$0xff] %v96
  %113 = vst [vmem:[%s5 + $0x20] sm:$0xff] %v97
  %114 = vst [vmem:[%s5 + $0x28] sm:$0xff] %v98
  %115 = vst [vmem:[%s5 + $0x30] sm:$0xff] %v99
  %116 = vst [vmem:[%s5 + $0x38] sm:$0xff] %v100
  %117 = vst [vmem:[%s5 + $0x40] sm:$0xff] %v101
  %118 = vst [vmem:[%s5 + $0x48] sm:$0xff] %v102
  %119 = vst [vmem:[%s5 + $0x50] sm:$0xff] %v103
  %120 = vst [vmem:[%s5 + $0x58] sm:$0xff] %v104
  %121 = vst [vmem:[%s5 + $0x60] sm:$0xff] %v105
  %122 = vst [vmem:[%s5 + $0x68] sm:$0xff] %v106
  %123 = vst [vmem:[%s5 + $0x70] sm:$0xff] %v107
  %124 = vst [vmem:[%s5 + $0x78] sm:$0xff] %v108
  // Predicated region
  $region22: #{_lambda_.33} parent=0 // pred_check
    _
  $region23: #{_lambda_.33} parent=0 // pred_check_branch
    %126 = sbr.rel (0) target = $region25
  $region24: #{_lambda_.33} parent=0 // pred_region
    _
  $region25: #{_lambda_.33} parent=0 // pred_fallthru
    _
  // Predicated region
  $region26: #{_lambda_.33} parent=0 // pred_check
    _
  $region27: #{_lambda_.33} parent=0 // pred_check_branch
    %128 = sbr.rel (0) target = $region29
  $region28: #{_lambda_.33} parent=0 // pred_region
    _
  $region29: #{_lambda_.33} parent=0 // pred_fallthru
    _

// kernel: _lambda_.35
$region0: #{_lambda_.35}
  #allocation0 [shape = 'u32[]', space=smem, size = 0x4, offset = 0x4, fixed_abs, tag = 'smem constant byte address 0x4 - core index']
  #allocation1 [shape = 'u32[144,128]{1,0:T(1,128)}', space=vmem, size = 0x12000, scoped, tag = 'internal scratch']
  %s0 = inlined_call_operand.vmem [shape: f32[32,128], index: 0, kind: input, shape index: {}]
  %s1 = inlined_call_operand.vmem [shape: f32[1,128], index: 1, kind: output, shape index: {0}]
  %s2 = inlined_call_operand.vmem [shape: f32[1,128], index: 2, kind: output, shape index: {1}]
  %3 = xla_tuple %s1, %s2
  %s4 = sld [smem:[#allocation0]]
  $region26: #{_lambda_.35} parent=0
    _
  %s6 = ssub.s32 1, %s4
  %s7 = scalar_select 0, %s6, %s4
  // Predicated region
  $region2: #{_lambda_.35} parent=0 // pred_check
    _
  $region3: #{_lambda_.35} parent=0 // pred_check_branch
    %9 = sbr.rel (0) target = $region5
  $region4: #{_lambda_.35} parent=0 // pred_region
    _
  $region5: #{_lambda_.35} parent=0 // pred_fallthru
    _
  %p10 = scmp.eq.s32.totalorder 0, 0
  // Predicated region
  $region6: #{_lambda_.35} parent=0 // pred_check
    %p11 = pneg %p10
  $region7: #{_lambda_.35} parent=0 // pred_check_branch
    %13 = sbr.rel (%p11) target = $region9
  $region8: #{_lambda_.35} parent=0 // pred_region
    %14 = vst [vmem:[%s1] sm:$0x1] 0.0
    %15 = vst [vmem:[%s2] sm:$0x1] 0.0
  $region9: #{_lambda_.35} parent=0 // pred_fallthru
    _
  %v16 = vld [vmem:[%s0] sm:$0xff]
  %v17 = vld [vmem:[%s0 + $0x8] sm:$0xff]
  %v18 = vld [vmem:[%s0 + $0x10] sm:$0xff]
  %v19 = vld [vmem:[%s0 + $0x18] sm:$0xff]
  %v20 = vld [vmem:[%s1] sm:$0x1]
  %v21 = vadd.f32 %v16, %v17
  %v22 = vadd.f32 %v21, %v18
  %v23 = vadd.f32 %v22, %v19
  %v24 = vrot.slane %v23, 4
  %v25 = vadd.f32 %v23, %v24
  %v26 = vrot.slane %v25, 2
  %v27 = vadd.f32 %v25, %v26
  %v28 = vrot.slane %v27, 1
  %v29 = vadd.f32 %v27, %v28
  %v30 = vadd.f32 %v20, %v29
  %31 = vst [vmem:[%s1] sm:$0x1] %v30
  %v32 = vld [vmem:[%s2] sm:$0x1]
  %v33 = vmul.f32 %v16, %v16
  %v34 = vmul.f32 %v17, %v17
  %v35 = vmul.f32 %v18, %v18
  %v36 = vmul.f32 %v19, %v19
  %v37 = vadd.f32 %v33, %v34
  %v38 = vadd.f32 %v37, %v35
  %v39 = vadd.f32 %v38, %v36
  %v40 = vrot.slane %v39, 4
  %v41 = vadd.f32 %v39, %v40
  %v42 = vrot.slane %v41, 2
  %v43 = vadd.f32 %v41, %v42
  %v44 = vrot.slane %v43, 1
  %v45 = vadd.f32 %v43, %v44
  %v46 = vadd.f32 %v32, %v45
  %47 = vst [vmem:[%s2] sm:$0x1] %v46
  // Predicated region
  $region10: #{_lambda_.35} parent=0 // pred_check
    _
  $region11: #{_lambda_.35} parent=0 // pred_check_branch
    %49 = sbr.rel (0) target = $region13
  $region12: #{_lambda_.35} parent=0 // pred_region
    _
  $region13: #{_lambda_.35} parent=0 // pred_fallthru
    _
  // Predicated region
  $region14: #{_lambda_.35} parent=0 // pred_check
    _
  $region15: #{_lambda_.35} parent=0 // pred_check_branch
    %51 = sbr.rel (0) target = $region17
  $region16: #{_lambda_.35} parent=0 // pred_region
    _
  $region17: #{_lambda_.35} parent=0 // pred_fallthru
    _
  // Predicated region
  $region18: #{_lambda_.35} parent=0 // pred_check
    _
  $region19: #{_lambda_.35} parent=0 // pred_check_branch
    %53 = sbr.rel (0) target = $region21
  $region20: #{_lambda_.35} parent=0 // pred_region
    _
  $region21: #{_lambda_.35} parent=0 // pred_fallthru
    _
  // Predicated region
  $region22: #{_lambda_.35} parent=0 // pred_check
    _
  $region23: #{_lambda_.35} parent=0 // pred_check_branch
    %55 = sbr.rel (0) target = $region25
  $region24: #{_lambda_.35} parent=0 // pred_region
    _
  $region25: #{_lambda_.35} parent=0 // pred_fallthru
    _

// kernel: _lambda_.34
$region0: #{_lambda_.34}
  #allocation0 [shape = 'u32[]', space=smem, size = 0x4, offset = 0x4, fixed_abs, tag = 'smem constant byte address 0x4 - core index']
  #allocation1 [shape = 'u32[144,128]{1,0:T(1,128)}', space=vmem, size = 0x12000, scoped, tag = 'internal scratch']
  #allocation2 [shape = 'f32[32,128]{1,0:T(8,128)}', space=vmem, size = 0x4000, scoped, tag = 'scratch operand']
  %s0 = inlined_call_operand.vmem [shape: bf16[32,256], index: 0, kind: input, shape index: {}]
  %s1 = inlined_call_operand.vmem [shape: bf16[256,128], index: 1, kind: input, shape index: {}]
  %s2 = inlined_call_operand.vmem [shape: f32[1,128], index: 2, kind: input, shape index: {}]
  %s3 = inlined_call_operand.vmem [shape: f32[32,128], index: 3, kind: output, shape index: {}]
  %s4 = sld [smem:[#allocation0]]
  $region30: #{_lambda_.34} parent=0
    _
  %s6 = ssub.s32 1, %s4
  %s7 = scalar_select 0, %s6, %s4
  // Predicated region
  $region2: #{_lambda_.34} parent=0 // pred_check
    _
  $region3: #{_lambda_.34} parent=0 // pred_check_branch
    %9 = sbr.rel (0) target = $region5
  $region4: #{_lambda_.34} parent=0 // pred_region
    _
  $region5: #{_lambda_.34} parent=0 // pred_fallthru
    _
  // Predicated region
  $region6: #{_lambda_.34} parent=0 // pred_check
    _
  $region7: #{_lambda_.34} parent=0 // pred_check_branch
    %11 = sbr.rel (0) target = $region9
  $region8: #{_lambda_.34} parent=0 // pred_region
    _
  $region9: #{_lambda_.34} parent=0 // pred_fallthru
    _
  // Predicated region
  $region10: #{_lambda_.34} parent=0 // pred_check
    _
  $region11: #{_lambda_.34} parent=0 // pred_check_branch
    %13 = sbr.rel (0) target = $region13
  $region12: #{_lambda_.34} parent=0 // pred_region
    _
  $region13: #{_lambda_.34} parent=0 // pred_fallthru
    _
  %p15 = scmp.eq.s32.totalorder 0, 0
  // Predicated region
  $region14: #{_lambda_.34} parent=0 // pred_check
    %p16 = pneg %p15
  $region15: #{_lambda_.34} parent=0 // pred_check_branch
    %18 = sbr.rel (%p16) target = $region17
  $region16: #{_lambda_.34} parent=0 // pred_region
    %19 = vst [vmem:[#allocation2] sm:$0xff] 0.0
    %20 = vst [vmem:[#allocation2 + $0x8] sm:$0xff] 0.0
    %21 = vst [vmem:[#allocation2 + $0x10] sm:$0xff] 0.0
    %22 = vst [vmem:[#allocation2 + $0x18] sm:$0xff] 0.0
  $region17: #{_lambda_.34} parent=0 // pred_fallthru
    _
  %v23 = vld [vmem:[#allocation2] sm:$0xff]
  %v24 = vld [vmem:[#allocation2 + $0x8] sm:$0xff]
  %v25 = vld [vmem:[#allocation2 + $0x10] sm:$0xff]
  %v26 = vld [vmem:[#allocation2 + $0x18] sm:$0xff]
  %v27 = vld [vmem:[%s0] sm:$0xff]
  %v28 = vld [vmem:[%s0 + $0x8] sm:$0xff]
  %v29 = vld [vmem:[%s0 + $0x10] sm:$0xff]
  %v30 = vld [vmem:[%s0 + $0x18] sm:$0xff]
  %v31 = vld [vmem:[%s1] sm:$0xf]
  %v32 = vld [vmem:[%s1 + $0x4] sm:$0xf]
  %v33 = vld [vmem:[%s1 + $0x8] sm:$0xf]
  %v34 = vld [vmem:[%s1 + $0xc] sm:$0xf]
  %v35 = vld [vmem:[%s1 + $0x10] sm:$0xf]
  %v36 = vld [vmem:[%s1 + $0x14] sm:$0xf]
  %v37 = vld [vmem:[%s1 + $0x18] sm:$0xf]
  %v38 = vld [vmem:[%s1 + $0x1c] sm:$0xf]
  %v39 = vld [vmem:[%s1 + $0x20] sm:$0xf]
  %v40 = vld [vmem:[%s1 + $0x24] sm:$0xf]
  %v41 = vld [vmem:[%s1 + $0x28] sm:$0xf]
  %v42 = vld [vmem:[%s1 + $0x2c] sm:$0xf]
  %v43 = vld [vmem:[%s1 + $0x30] sm:$0xf]
  %v44 = vld [vmem:[%s1 + $0x34] sm:$0xf]
  %v45 = vld [vmem:[%s1 + $0x38] sm:$0xf]
  %v46 = vld [vmem:[%s1 + $0x3c] sm:$0xf]
  %v47 = vld [vmem:[%s1 + $0x40] sm:$0xf]
  %v48 = vld [vmem:[%s1 + $0x44] sm:$0xf]
  %v49 = vld [vmem:[%s1 + $0x48] sm:$0xf]
  %v50 = vld [vmem:[%s1 + $0x4c] sm:$0xf]
  %v51 = vld [vmem:[%s1 + $0x50] sm:$0xf]
  %v52 = vld [vmem:[%s1 + $0x54] sm:$0xf]
  %v53 = vld [vmem:[%s1 + $0x58] sm:$0xf]
  %v54 = vld [vmem:[%s1 + $0x5c] sm:$0xf]
  %v55 = vld [vmem:[%s1 + $0x60] sm:$0xf]
  %v56 = vld [vmem:[%s1 + $0x64] sm:$0xf]
  %v57 = vld [vmem:[%s1 + $0x68] sm:$0xf]
  %v58 = vld [vmem:[%s1 + $0x6c] sm:$0xf]
  %v59 = vld [vmem:[%s1 + $0x70] sm:$0xf]
  %v60 = vld [vmem:[%s1 + $0x74] sm:$0xf]
  %v61 = vld [vmem:[%s1 + $0x78] sm:$0xf]
  %v62 = vld [vmem:[%s1 + $0x7c] sm:$0xf]
  %v67 = vunpack.c.l.b16 %v27
  %v68 = vunpack.c.h.b16 %v27
  %v69 = vunpack.c.l.b16 %v28
  %v70 = vunpack.c.h.b16 %v28
  %v71 = vunpack.c.l.b16 %v29
  %v72 = vunpack.c.h.b16 %v29
  %v73 = vunpack.c.l.b16 %v30
  %v74 = vunpack.c.h.b16 %v30
  %v75 = vpack.c.b16 %v69, %v67
  %v76 = vpack.c.b16 %v70, %v68
  %v77 = vpack.c.b16 %v73, %v71
  %v78 = vpack.c.b16 %v74, %v72
  %v115 = vunpack.c.l.b16 %v31
  %v116 = vunpack.c.l.b16 %v32
  %v117 = vunpack.c.l.b16 %v33
  %v118 = vunpack.c.l.b16 %v34
  %v119 = vunpack.c.l.b16 %v35
  %v120 = vunpack.c.l.b16 %v36
  %v121 = vunpack.c.l.b16 %v37
  %v122 = vunpack.c.l.b16 %v38
  %v123 = vunpack.c.l.b16 %v39
  %v124 = vunpack.c.l.b16 %v40
  %v125 = vunpack.c.l.b16 %v41
  %v126 = vunpack.c.l.b16 %v42
  %v127 = vunpack.c.l.b16 %v43
  %v128 = vunpack.c.l.b16 %v44
  %v129 = vunpack.c.l.b16 %v45
  %v130 = vunpack.c.l.b16 %v46
  %v131 = vunpack.c.l.b16 %v47
  %v132 = vunpack.c.l.b16 %v48
  %v133 = vunpack.c.l.b16 %v49
  %v134 = vunpack.c.l.b16 %v50
  %v135 = vunpack.c.l.b16 %v51
  %v136 = vunpack.c.l.b16 %v52
  %v137 = vunpack.c.l.b16 %v53
  %v138 = vunpack.c.l.b16 %v54
  %v139 = vunpack.c.l.b16 %v55
  %v140 = vunpack.c.l.b16 %v56
  %v141 = vunpack.c.l.b16 %v57
  %v142 = vunpack.c.l.b16 %v58
  %v143 = vunpack.c.l.b16 %v59
  %v144 = vunpack.c.l.b16 %v60
  %v145 = vunpack.c.l.b16 %v61
  %v146 = vunpack.c.l.b16 %v62
  %v147 = vpack.c.b16 %v116, %v115
  %v148 = vpack.c.b16 %v118, %v117
  %v149 = vpack.c.b16 %v120, %v119
  %v150 = vpack.c.b16 %v122, %v121
  %v151 = vpack.c.b16 %v124, %v123
  %v152 = vpack.c.b16 %v126, %v125
  %v153 = vpack.c.b16 %v128, %v127
  %v154 = vpack.c.b16 %v130, %v129
  %v155 = vpack.c.b16 %v132, %v131
  %v156 = vpack.c.b16 %v134, %v133
  %v157 = vpack.c.b16 %v136, %v135
  %v158 = vpack.c.b16 %v138, %v137
  %v159 = vpack.c.b16 %v140, %v139
  %v160 = vpack.c.b16 %v142, %v141
  %v161 = vpack.c.b16 %v144, %v143
  %v162 = vpack.c.b16 %v146, %v145
  %179 = vmatprep.subr.bf16.mxu0 0
  %180 = vmatpush1.bf16.msra.mxu0 %v154
  %181 = vmatprep.subr.bf16.mxu0 0
  %182 = vmatpush1.bf16.msra.mxu0 %v153
  %183 = vmatprep.subr.bf16.mxu0 0
  %184 = vmatpush1.bf16.msra.mxu0 %v152
  %185 = vmatprep.subr.bf16.mxu0 0
  %186 = vmatpush1.bf16.msra.mxu0 %v151
  %187 = vmatprep.subr.bf16.mxu0 0
  %188 = vmatpush1.bf16.msra.mxu0 %v150
  %189 = vmatprep.subr.bf16.mxu0 0
  %190 = vmatpush1.bf16.msra.mxu0 %v149
  %191 = vmatprep.subr.bf16.mxu0 0
  %192 = vmatpush1.bf16.msra.mxu0 %v148
  %193 = vmatprep.subr.bf16.mxu0 0
  %194 = vmatpush1.bf16.msra.mxu0 %v147
  %195 = vmatprep.subr.bf16.mxu0 0
  %196 = vmatpush2.bf16.msra.mxu0 %v162
  %197 = vmatprep.subr.bf16.mxu0 0
  %198 = vmatpush2.bf16.msra.mxu0 %v161
  %199 = vmatprep.subr.bf16.mxu0 0
  %200 = vmatpush2.bf16.msra.mxu0 %v160
  %201 = vmatprep.subr.bf16.mxu0 0
  %202 = vmatpush2.bf16.msra.mxu0 %v159
  %203 = vmatprep.subr.bf16.mxu0 0
  %204 = vmatpush2.bf16.msra.mxu0 %v158
  %205 = vmatprep.subr.bf16.mxu0 0
  %206 = vmatpush2.bf16.msra.mxu0 %v157
  %207 = vmatprep.subr.bf16.mxu0 0
  %208 = vmatpush2.bf16.msra.mxu0 %v156
  %209 = vmatprep.subr.bf16.mxu0 0
  %210 = vmatpush2.bf16.msra.mxu0 %v155
  %211 = vmatprep.mubr.bf16.mxu0 %v76
  %212 = vmatmul.mubr.bf16.gmra.mxu0 %v75
  %v213 = vpop.f32.mrf.mxu0
  %v214 = vadd.f32 0.0, %v213
  %v215 = vpop.f32.mrf.mxu0
  %v216 = vpop.f32.mrf.mxu0
  %v217 = vadd.f32 0.0, %v216
  %v218 = vpop.f32.mrf.mxu0
  %219 = vmatprep.mubr.bf16.mxu0 %v78
  %220 = vmatmul.mubr.bf16.gmra.mxu0 %v77
  %v221 = vpop.f32.mrf.mxu0
  %v222 = vadd.f32 0.0, %v221
  %v223 = vpop.f32.mrf.mxu0
  %v224 = vpop.f32.mrf.mxu0
  %v225 = vadd.f32 0.0, %v224
  %v226 = vpop.f32.mrf.mxu0
  %227 = vdwg.mxu0
  %v228 = vadd.f32 %v23, %v214
  %v229 = vadd.f32 %v24, %v217
  %v230 = vadd.f32 %v25, %v222
  %v231 = vadd.f32 %v26, %v225
  %232 = vst [vmem:[#allocation2] sm:$0xff] %v228
  %233 = vst [vmem:[#allocation2 + $0x8] sm:$0xff] %v229
  %234 = vst [vmem:[#allocation2 + $0x10] sm:$0xff] %v230
  %235 = vst [vmem:[#allocation2 + $0x18] sm:$0xff] %v231
  // Predicated region
  $region18: #{_lambda_.34} parent=0 // pred_check
    %p236 = pneg %p15
  $region19: #{_lambda_.34} parent=0 // pred_check_branch
    %238 = sbr.rel (%p236) target = $region21
  $region20: #{_lambda_.34} parent=0 // pred_region
    %v239 = vld [vmem:[#allocation2] sm:$0xff]
    %v240 = vld [vmem:[#allocation2 + $0x8] sm:$0xff]
    %v241 = vld [vmem:[#allocation2 + $0x10] sm:$0xff]
    %v242 = vld [vmem:[#allocation2 + $0x18] sm:$0xff]
    %v243 = vld [vmem:[%s2] sm:$0x1]
    %v245 = vlaneseq
    %v246 = vshrl.u32 %v245, 7
    %v247 = vsub.s32 0, %v246
    %v248 = vrot.slane %v243, %v247
    %v250 = vadd.f32 %v239, %v248
    %v251 = vadd.f32 %v240, %v248
    %v252 = vadd.f32 %v241, %v248
    %v253 = vadd.f32 %v242, %v248
    %254 = vst [vmem:[%s3] sm:$0xff] %v250
    %255 = vst [vmem:[%s3 + $0x8] sm:$0xff] %v251
    %256 = vst [vmem:[%s3 + $0x10] sm:$0xff] %v252
    %257 = vst [vmem:[%s3 + $0x18] sm:$0xff] %v253
  $region21: #{_lambda_.34} parent=0 // pred_fallthru
    _
  // Predicated region
  $region22: #{_lambda_.34} parent=0 // pred_check
    _
  $region23: #{_lambda_.34} parent=0 // pred_check_branch
    %259 = sbr.rel (0) target = $region25
  $region24: #{_lambda_.34} parent=0 // pred_region
    _
  $region25: #{_lambda_.34} parent=0 // pred_fallthru
    _
  // Predicated region
  $region26: #{_lambda_.34} parent=0 // pred_check
    _
  $region27: #{_lambda_.34} parent=0 // pred_check_branch
    %261 = sbr.rel (0) target = $region29
  $region28: #{_lambda_.34} parent=0 // pred_region
    _
  $region29: #{_lambda_.34} parent=0 // pred_fallthru
    _

// kernel: _lambda_.36
$region0: #{_lambda_.36}
  #allocation0 [shape = 'u32[]', space=smem, size = 0x4, offset = 0x4, fixed_abs, tag = 'smem constant byte address 0x4 - core index']
  #allocation1 [shape = 'u32[144,128]{1,0:T(1,128)}', space=vmem, size = 0x12000, scoped, tag = 'internal scratch']
  %s0 = inlined_call_operand.vmem [shape: f32[32,128], index: 0, kind: input, shape index: {}]
  %s1 = inlined_call_operand.vmem [shape: f32[1,128], index: 1, kind: input, shape index: {}]
  %s2 = inlined_call_operand.vmem [shape: f32[1,128], index: 2, kind: input, shape index: {}]
  %s3 = inlined_call_operand.vmem [shape: f32[1,128], index: 3, kind: input, shape index: {}]
  %s4 = inlined_call_operand.vmem [shape: f32[1,128], index: 4, kind: input, shape index: {}]
  %s5 = inlined_call_operand.vmem [shape: f32[32,128], index: 5, kind: output, shape index: {}]
  %s6 = sld [smem:[#allocation0]]
  $region30: #{_lambda_.36} parent=0
    _
  %s8 = ssub.s32 1, %s6
  %s9 = scalar_select 0, %s8, %s6
  // Predicated region
  $region2: #{_lambda_.36} parent=0 // pred_check
    _
  $region3: #{_lambda_.36} parent=0 // pred_check_branch
    %11 = sbr.rel (0) target = $region5
  $region4: #{_lambda_.36} parent=0 // pred_region
    _
  $region5: #{_lambda_.36} parent=0 // pred_fallthru
    _
  // Predicated region
  $region6: #{_lambda_.36} parent=0 // pred_check
    _
  $region7: #{_lambda_.36} parent=0 // pred_check_branch
    %13 = sbr.rel (0) target = $region9
  $region8: #{_lambda_.36} parent=0 // pred_region
    _
  $region9: #{_lambda_.36} parent=0 // pred_fallthru
    _
  // Predicated region
  $region10: #{_lambda_.36} parent=0 // pred_check
    _
  $region11: #{_lambda_.36} parent=0 // pred_check_branch
    %15 = sbr.rel (0) target = $region13
  $region12: #{_lambda_.36} parent=0 // pred_region
    _
  $region13: #{_lambda_.36} parent=0 // pred_fallthru
    _
  // Predicated region
  $region14: #{_lambda_.36} parent=0 // pred_check
    _
  $region15: #{_lambda_.36} parent=0 // pred_check_branch
    %17 = sbr.rel (0) target = $region17
  $region16: #{_lambda_.36} parent=0 // pred_region
    _
  $region17: #{_lambda_.36} parent=0 // pred_fallthru
    _
  // Predicated region
  $region18: #{_lambda_.36} parent=0 // pred_check
    _
  $region19: #{_lambda_.36} parent=0 // pred_check_branch
    %19 = sbr.rel (0) target = $region21
  $region20: #{_lambda_.36} parent=0 // pred_region
    _
  $region21: #{_lambda_.36} parent=0 // pred_fallthru
    _
  %v20 = vld [vmem:[%s1] sm:$0x1]
  %v21 = vmul.f32 %v20, 0.03125
  %v22 = vld [vmem:[%s2] sm:$0x1]
  %v23 = vmul.f32 %v22, 0.03125
  %v24 = vmul.f32 %v21, %v21
  %v25 = vsub.f32 %v23, %v24
  %v26 = vld [vmem:[%s3] sm:$0x1]
  %v27 = vadd.f32 %v25, 1e-05
  %v28 = vrsqrt.pop %v27
  %v29 = vmul.f32 %v26, %v28
  %v30 = vld [vmem:[%s4] sm:$0x1]
  %v31 = vmul.f32 %v21, %v29
  %v32 = vsub.f32 %v30, %v31
  %v33 = vld [vmem:[%s0] sm:$0xff]
  %v34 = vld [vmem:[%s0 + $0x8] sm:$0xff]
  %v35 = vld [vmem:[%s0 + $0x10] sm:$0xff]
  %v36 = vld [vmem:[%s0 + $0x18] sm:$0xff]
  %v38 = vlaneseq
  %v39 = vshrl.u32 %v38, 7
  %v40 = vsub.s32 0, %v39
  %v41 = vrot.slane %v29, %v40
  %v43 = vmul.f32 %v33, %v41
  %v44 = vmul.f32 %v34, %v41
  %v45 = vmul.f32 %v35, %v41
  %v46 = vmul.f32 %v36, %v41
  %v48 = vlaneseq
  %v49 = vshrl.u32 %v48, 7
  %v50 = vsub.s32 0, %v49
  %v51 = vrot.slane %v32, %v50
  %v53 = vadd.f32 %v43, %v51
  %v54 = vadd.f32 %v44, %v51
  %v55 = vadd.f32 %v45, %v51
  %v56 = vadd.f32 %v46, %v51
  %v57 = vmax.f32 %v53, 0.0
  %v58 = vmax.f32 %v54, 0.0
  %v59 = vmax.f32 %v55, 0.0
  %v60 = vmax.f32 %v56, 0.0
  %61 = vst [vmem:[%s5] sm:$0xff] %v57
  %62 = vst [vmem:[%s5 + $0x8] sm:$0xff] %v58
  %63 = vst [vmem:[%s5 + $0x10] sm:$0xff] %v59
  %64 = vst [vmem:[%s5 + $0x18] sm:$0xff] %v60
  // Predicated region
  $region22: #{_lambda_.36} parent=0 // pred_check
    _
  $region23: #{_lambda_.36} parent=0 // pred_check_branch
    %66 = sbr.rel (0) target = $region25
  $region24: #{_lambda_.36} parent=0 // pred_region
    _
  $region25: #{_lambda_.36} parent=0 // pred_fallthru
    _
  // Predicated region
  $region26: #{_lambda_.36} parent=0 // pred_check
    _
  $region27: #{_lambda_.36} parent=0 // pred_check_branch
    %68 = sbr.rel (0) target = $region29
  $region28: #{_lambda_.36} parent=0 // pred_region
    _
  $region29: #{_lambda_.36} parent=0 // pred_fallthru
    _

// kernel: _lambda_.37
$region0: #{_lambda_.37}
  #allocation0 [shape = 'u32[]', space=smem, size = 0x4, offset = 0x4, fixed_abs, tag = 'smem constant byte address 0x4 - core index']
  #allocation1 [shape = 'u32[144,128]{1,0:T(1,128)}', space=vmem, size = 0x12000, scoped, tag = 'internal scratch']
  #allocation2 [shape = 'f32[32,128]{1,0:T(8,128)}', space=vmem, size = 0x4000, scoped, tag = 'scratch operand']
  %s0 = inlined_call_operand.vmem [shape: bf16[32,384], index: 0, kind: input, shape index: {}]
  %s1 = inlined_call_operand.vmem [shape: bf16[384,128], index: 1, kind: input, shape index: {}]
  %s2 = inlined_call_operand.vmem [shape: f32[1,128], index: 2, kind: input, shape index: {}]
  %s3 = inlined_call_operand.vmem [shape: f32[32,128], index: 3, kind: output, shape index: {}]
  %s4 = sld [smem:[#allocation0]]
  $region30: #{_lambda_.37} parent=0
    _
  %s6 = ssub.s32 1, %s4
  %s7 = scalar_select 0, %s6, %s4
  // Predicated region
  $region2: #{_lambda_.37} parent=0 // pred_check
    _
  $region3: #{_lambda_.37} parent=0 // pred_check_branch
    %9 = sbr.rel (0) target = $region5
  $region4: #{_lambda_.37} parent=0 // pred_region
    _
  $region5: #{_lambda_.37} parent=0 // pred_fallthru
    _
  // Predicated region
  $region6: #{_lambda_.37} parent=0 // pred_check
    _
  $region7: #{_lambda_.37} parent=0 // pred_check_branch
    %11 = sbr.rel (0) target = $region9
  $region8: #{_lambda_.37} parent=0 // pred_region
    _
  $region9: #{_lambda_.37} parent=0 // pred_fallthru
    _
  // Predicated region
  $region10: #{_lambda_.37} parent=0 // pred_check
    _
  $region11: #{_lambda_.37} parent=0 // pred_check_branch
    %13 = sbr.rel (0) target = $region13
  $region12: #{_lambda_.37} parent=0 // pred_region
    _
  $region13: #{_lambda_.37} parent=0 // pred_fallthru
    _
  %p15 = scmp.eq.s32.totalorder 0, 0
  // Predicated region
  $region14: #{_lambda_.37} parent=0 // pred_check
    %p16 = pneg %p15
  $region15: #{_lambda_.37} parent=0 // pred_check_branch
    %18 = sbr.rel (%p16) target = $region17
  $region16: #{_lambda_.37} parent=0 // pred_region
    %19 = vst [vmem:[#allocation2] sm:$0xff] 0.0
    %20 = vst [vmem:[#allocation2 + $0x8] sm:$0xff] 0.0
    %21 = vst [vmem:[#allocation2 + $0x10] sm:$0xff] 0.0
    %22 = vst [vmem:[#allocation2 + $0x18] sm:$0xff] 0.0
  $region17: #{_lambda_.37} parent=0 // pred_fallthru
    _
  %v23 = vld [vmem:[#allocation2] sm:$0xff]
  %v24 = vld [vmem:[#allocation2 + $0x8] sm:$0xff]
  %v25 = vld [vmem:[#allocation2 + $0x10] sm:$0xff]
  %v26 = vld [vmem:[#allocation2 + $0x18] sm:$0xff]
  %v27 = vld [vmem:[%s0] sm:$0xff]
  %v28 = vld [vmem:[%s0 + $0x8] sm:$0xf]
  %v29 = vld [vmem:[%s0 + $0xc] sm:$0xff]
  %v30 = vld [vmem:[%s0 + $0x14] sm:$0xf]
  %v31 = vld [vmem:[%s0 + $0x18] sm:$0xff]
  %v32 = vld [vmem:[%s0 + $0x20] sm:$0xf]
  %v33 = vld [vmem:[%s0 + $0x24] sm:$0xff]
  %v34 = vld [vmem:[%s0 + $0x2c] sm:$0xf]
  %v35 = vld [vmem:[%s1] sm:$0xf]
  %v36 = vld [vmem:[%s1 + $0x4] sm:$0xf]
  %v37 = vld [vmem:[%s1 + $0x8] sm:$0xf]
  %v38 = vld [vmem:[%s1 + $0xc] sm:$0xf]
  %v39 = vld [vmem:[%s1 + $0x10] sm:$0xf]
  %v40 = vld [vmem:[%s1 + $0x14] sm:$0xf]
  %v41 = vld [vmem:[%s1 + $0x18] sm:$0xf]
  %v42 = vld [vmem:[%s1 + $0x1c] sm:$0xf]
  %v43 = vld [vmem:[%s1 + $0x20] sm:$0xf]
  %v44 = vld [vmem:[%s1 + $0x24] sm:$0xf]
  %v45 = vld [vmem:[%s1 + $0x28] sm:$0xf]
  %v46 = vld [vmem:[%s1 + $0x2c] sm:$0xf]
  %v47 = vld [vmem:[%s1 + $0x30] sm:$0xf]
  %v48 = vld [vmem:[%s1 + $0x34] sm:$0xf]
  %v49 = vld [vmem:[%s1 + $0x38] sm:$0xf]
  %v50 = vld [vmem:[%s1 + $0x3c] sm:$0xf]
  %v51 = vld [vmem:[%s1 + $0x40] sm:$0xf]
  %v52 = vld [vmem:[%s1 + $0x44] sm:$0xf]
  %v53 = vld [vmem:[%s1 + $0x48] sm:$0xf]
  %v54 = vld [vmem:[%s1 + $0x4c] sm:$0xf]
  %v55 = vld [vmem:[%s1 + $0x50] sm:$0xf]
  %v56 = vld [vmem:[%s1 + $0x54] sm:$0xf]
  %v57 = vld [vmem:[%s1 + $0x58] sm:$0xf]
  %v58 = vld [vmem:[%s1 + $0x5c] sm:$0xf]
  %v59 = vld [vmem:[%s1 + $0x60] sm:$0xf]
  %v60 = vld [vmem:[%s1 + $0x64] sm:$0xf]
  %v61 = vld [vmem:[%s1 + $0x68] sm:$0xf]
  %v62 = vld [vmem:[%s1 + $0x6c] sm:$0xf]
  %v63 = vld [vmem:[%s1 + $0x70] sm:$0xf]
  %v64 = vld [vmem:[%s1 + $0x74] sm:$0xf]
  %v65 = vld [vmem:[%s1 + $0x78] sm:$0xf]
  %v66 = vld [vmem:[%s1 + $0x7c] sm:$0xf]
  %v67 = vld [vmem:[%s1 + $0x80] sm:$0xf]
  %v68 = vld [vmem:[%s1 + $0x84] sm:$0xf]
  %v69 = vld [vmem:[%s1 + $0x88] sm:$0xf]
  %v70 = vld [vmem:[%s1 + $0x8c] sm:$0xf]
  %v71 = vld [vmem:[%s1 + $0x90] sm:$0xf]
  %v72 = vld [vmem:[%s1 + $0x94] sm:$0xf]
  %v73 = vld [vmem:[%s1 + $0x98] sm:$0xf]
  %v74 = vld [vmem:[%s1 + $0x9c] sm:$0xf]
  %v75 = vld [vmem:[%s1 + $0xa0] sm:$0xf]
  %v76 = vld [vmem:[%s1 + $0xa4] sm:$0xf]
  %v77 = vld [vmem:[%s1 + $0xa8] sm:$0xf]
  %v78 = vld [vmem:[%s1 + $0xac] sm:$0xf]
  %v79 = vld [vmem:[%s1 + $0xb0] sm:$0xf]
  %v80 = vld [vmem:[%s1 + $0xb4] sm:$0xf]
  %v81 = vld [vmem:[%s1 + $0xb8] sm:$0xf]
  %v82 = vld [vmem:[%s1 + $0xbc] sm:$0xf]
  %v91 = vunpack.c.l.b16 %v27
  %v92 = vunpack.c.h.b16 %v27
  %v93 = vunpack.c.l.b16 %v28
  %v94 = vunpack.c.l.b16 %v29
  %v95 = vunpack.c.h.b16 %v29
  %v96 = vunpack.c.l.b16 %v30
  %v97 = vunpack.c.l.b16 %v31
  %v98 = vunpack.c.h.b16 %v31
  %v99 = vunpack.c.l.b16 %v32
  %v100 = vunpack.c.l.b16 %v33
  %v101 = vunpack.c.h.b16 %v33
  %v102 = vunpack.c.l.b16 %v34
  %v103 = vpack.c.b16 %v94, %v91
  %v104 = vpack.c.b16 %v95, %v92
  %v105 = vpack.c.b16 %v96, %v93
  %v106 = vpack.c.b16 %v100, %v97
  %v107 = vpack.c.b16 %v101, %v98
  %v108 = vpack.c.b16 %v102, %v99
  %v163 = vunpack.c.l.b16 %v35
  %v164 = vunpack.c.l.b16 %v36
  %v165 = vunpack.c.l.b16 %v37
  %v166 = vunpack.c.l.b16 %v38
  %v167 = vunpack.c.l.b16 %v39
  %v168 = vunpack.c.l.b16 %v40
  %v169 = vunpack.c.l.b16 %v41
  %v170 = vunpack.c.l.b16 %v42
  %v171 = vunpack.c.l.b16 %v43
  %v172 = vunpack.c.l.b16 %v44
  %v173 = vunpack.c.l.b16 %v45
  %v174 = vunpack.c.l.b16 %v46
  %v175 = vunpack.c.l.b16 %v47
  %v176 = vunpack.c.l.b16 %v48
  %v177 = vunpack.c.l.b16 %v49
  %v178 = vunpack.c.l.b16 %v50
  %v179 = vunpack.c.l.b16 %v51
  %v180 = vunpack.c.l.b16 %v52
  %v181 = vunpack.c.l.b16 %v53
  %v182 = vunpack.c.l.b16 %v54
  %v183 = vunpack.c.l.b16 %v55
  %v184 = vunpack.c.l.b16 %v56
  %v185 = vunpack.c.l.b16 %v57
  %v186 = vunpack.c.l.b16 %v58
  %v187 = vunpack.c.l.b16 %v59
  %v188 = vunpack.c.l.b16 %v60
  %v189 = vunpack.c.l.b16 %v61
  %v190 = vunpack.c.l.b16 %v62
  %v191 = vunpack.c.l.b16 %v63
  %v192 = vunpack.c.l.b16 %v64
  %v193 = vunpack.c.l.b16 %v65
  %v194 = vunpack.c.l.b16 %v66
  %v195 = vunpack.c.l.b16 %v67
  %v196 = vunpack.c.l.b16 %v68
  %v197 = vunpack.c.l.b16 %v69
  %v198 = vunpack.c.l.b16 %v70
  %v199 = vunpack.c.l.b16 %v71
  %v200 = vunpack.c.l.b16 %v72
  %v201 = vunpack.c.l.b16 %v73
  %v202 = vunpack.c.l.b16 %v74
  %v203 = vunpack.c.l.b16 %v75
  %v204 = vunpack.c.l.b16 %v76
  %v205 = vunpack.c.l.b16 %v77
  %v206 = vunpack.c.l.b16 %v78
  %v207 = vunpack.c.l.b16 %v79
  %v208 = vunpack.c.l.b16 %v80
  %v209 = vunpack.c.l.b16 %v81
  %v210 = vunpack.c.l.b16 %v82
  %v211 = vpack.c.b16 %v164, %v163
  %v212 = vpack.c.b16 %v166, %v165
  %v213 = vpack.c.b16 %v168, %v167
  %v214 = vpack.c.b16 %v170, %v169
  %v215 = vpack.c.b16 %v172, %v171
  %v216 = vpack.c.b16 %v174, %v173
  %v217 = vpack.c.b16 %v176, %v175
  %v218 = vpack.c.b16 %v178, %v177
  %v219 = vpack.c.b16 %v180, %v179
  %v220 = vpack.c.b16 %v182, %v181
  %v221 = vpack.c.b16 %v184, %v183
  %v222 = vpack.c.b16 %v186, %v185
  %v223 = vpack.c.b16 %v188, %v187
  %v224 = vpack.c.b16 %v190, %v189
  %v225 = vpack.c.b16 %v192, %v191
  %v226 = vpack.c.b16 %v194, %v193
  %v227 = vpack.c.b16 %v196, %v195
  %v228 = vpack.c.b16 %v198, %v197
  %v229 = vpack.c.b16 %v200, %v199
  %v230 = vpack.c.b16 %v202, %v201
  %v231 = vpack.c.b16 %v204, %v203
  %v232 = vpack.c.b16 %v206, %v205
  %v233 = vpack.c.b16 %v208, %v207
  %v234 = vpack.c.b16 %v210, %v209
  %259 = vmatprep.subr.bf16.mxu0 0
  %260 = vmatpush1.bf16.msra.mxu0 %v218
  %261 = vmatprep.subr.bf16.mxu0 0
  %262 = vmatpush1.bf16.msra.mxu0 %v217
  %263 = vmatprep.subr.bf16.mxu0 0
  %264 = vmatpush1.bf16.msra.mxu0 %v216
  %265 = vmatprep.subr.bf16.mxu0 0
  %266 = vmatpush1.bf16.msra.mxu0 %v215
  %267 = vmatprep.subr.bf16.mxu0 0
  %268 = vmatpush1.bf16.msra.mxu0 %v214
  %269 = vmatprep.subr.bf16.mxu0 0
  %270 = vmatpush1.bf16.msra.mxu0 %v213
  %271 = vmatprep.subr.bf16.mxu0 0
  %272 = vmatpush1.bf16.msra.mxu0 %v212
  %273 = vmatprep.subr.bf16.mxu0 0
  %274 = vmatpush1.bf16.msra.mxu0 %v211
  %275 = vmatprep.subr.bf16.mxu0 0
  %276 = vmatpush2.bf16.msra.mxu0 %v226
  %277 = vmatprep.subr.bf16.mxu0 0
  %278 = vmatpush2.bf16.msra.mxu0 %v225
  %279 = vmatprep.subr.bf16.mxu0 0
  %280 = vmatpush2.bf16.msra.mxu0 %v224
  %281 = vmatprep.subr.bf16.mxu0 0
  %282 = vmatpush2.bf16.msra.mxu0 %v223
  %283 = vmatprep.subr.bf16.mxu0 0
  %284 = vmatpush2.bf16.msra.mxu0 %v222
  %285 = vmatprep.subr.bf16.mxu0 0
  %286 = vmatpush2.bf16.msra.mxu0 %v221
  %287 = vmatprep.subr.bf16.mxu0 0
  %288 = vmatpush2.bf16.msra.mxu0 %v220
  %289 = vmatprep.subr.bf16.mxu0 0
  %290 = vmatpush2.bf16.msra.mxu0 %v219
  %291 = vmatprep.mubr.bf16.mxu0 %v104
  %292 = vmatmul.mubr.bf16.gmra.mxu0 %v103
  %v293 = vpop.f32.mrf.mxu0
  %v294 = vadd.f32 0.0, %v293
  %v295 = vpop.f32.mrf.mxu0
  %v296 = vpop.f32.mrf.mxu0
  %v297 = vadd.f32 0.0, %v296
  %v298 = vpop.f32.mrf.mxu0
  %299 = vmatprep.mubr.bf16.mxu0 %v107
  %300 = vmatmul.mubr.bf16.gmra.mxu0 %v106
  %v301 = vpop.f32.mrf.mxu0
  %v302 = vadd.f32 0.0, %v301
  %v303 = vpop.f32.mrf.mxu0
  %v304 = vpop.f32.mrf.mxu0
  %v305 = vadd.f32 0.0, %v304
  %v306 = vpop.f32.mrf.mxu0
  %307 = vdwg.mxu0
  %308 = vmatprep.subr.bf16.mxu0 0
  %309 = vmatpush1.bf16.msra.mxu0 %v234
  %310 = vmatprep.subr.bf16.mxu0 0
  %311 = vmatpush1.bf16.msra.mxu0 %v233
  %312 = vmatprep.subr.bf16.mxu0 0
  %313 = vmatpush1.bf16.msra.mxu0 %v232
  %314 = vmatprep.subr.bf16.mxu0 0
  %315 = vmatpush1.bf16.msra.mxu0 %v231
  %316 = vmatprep.subr.bf16.mxu0 0
  %317 = vmatpush1.bf16.msra.mxu0 %v230
  %318 = vmatprep.subr.bf16.mxu0 0
  %319 = vmatpush1.bf16.msra.mxu0 %v229
  %320 = vmatprep.subr.bf16.mxu0 0
  %321 = vmatpush1.bf16.msra.mxu0 %v228
  %322 = vmatprep.subr.bf16.mxu0 0
  %323 = vmatpush1.bf16.msra.mxu0 %v227
  %324 = vmatprep.subr.bf16.mxu0 0
  %325 = vmatpush2.bf16.msra.mxu0 0
  %326 = vmatprep.subr.bf16.mxu0 0
  %327 = vmatpush2.bf16.msra.mxu0 0
  %328 = vmatprep.subr.bf16.mxu0 0
  %329 = vmatpush2.bf16.msra.mxu0 0
  %330 = vmatprep.subr.bf16.mxu0 0
  %331 = vmatpush2.bf16.msra.mxu0 0
  %332 = vmatprep.subr.bf16.mxu0 0
  %333 = vmatpush2.bf16.msra.mxu0 0
  %334 = vmatprep.subr.bf16.mxu0 0
  %335 = vmatpush2.bf16.msra.mxu0 0
  %336 = vmatprep.subr.bf16.mxu0 0
  %337 = vmatpush2.bf16.msra.mxu0 0
  %338 = vmatprep.subr.bf16.mxu0 0
  %339 = vmatpush2.bf16.msra.mxu0 0
  %340 = vmatprep.mubr.bf16.mxu0 0
  %341 = vmatmul.mubr.bf16.gmra.mxu0 %v105
  %v342 = vpop.f32.mrf.mxu0
  %v343 = vadd.f32 %v294, %v342
  %v344 = vpop.f32.mrf.mxu0
  %v345 = vpop.f32.mrf.mxu0
  %v346 = vadd.f32 %v297, %v345
  %v347 = vpop.f32.mrf.mxu0
  %348 = vmatprep.mubr.bf16.mxu0 0
  %349 = vmatmul.mubr.bf16.gmra.mxu0 %v108
  %v350 = vpop.f32.mrf.mxu0
  %v351 = vadd.f32 %v302, %v350
  %v352 = vpop.f32.mrf.mxu0
  %v353 = vpop.f32.mrf.mxu0
  %v354 = vadd.f32 %v305, %v353
  %v355 = vpop.f32.mrf.mxu0
  %356 = vdwg.mxu0
  %v357 = vadd.f32 %v23, %v343
  %v358 = vadd.f32 %v24, %v346
  %v359 = vadd.f32 %v25, %v351
  %v360 = vadd.f32 %v26, %v354
  %361 = vst [vmem:[#allocation2] sm:$0xff] %v357
  %362 = vst [vmem:[#allocation2 + $0x8] sm:$0xff] %v358
  %363 = vst [vmem:[#allocation2 + $0x10] sm:$0xff] %v359
  %364 = vst [vmem:[#allocation2 + $0x18] sm:$0xff] %v360
  // Predicated region
  $region18: #{_lambda_.37} parent=0 // pred_check
    %p365 = pneg %p15
  $region19: #{_lambda_.37} parent=0 // pred_check_branch
    %367 = sbr.rel (%p365) target = $region21
  $region20: #{_lambda_.37} parent=0 // pred_region
    %v368 = vld [vmem:[#allocation2] sm:$0xff]
    %v369 = vld [vmem:[#allocation2 + $0x8] sm:$0xff]
    %v370 = vld [vmem:[#allocation2 + $0x10] sm:$0xff]
    %v371 = vld [vmem:[#allocation2 + $0x18] sm:$0xff]
    %v372 = vld [vmem:[%s2] sm:$0x1]
    %v374 = vlaneseq
    %v375 = vshrl.u32 %v374, 7
    %v376 = vsub.s32 0, %v375
    %v377 = vrot.slane %v372, %v376
    %v379 = vadd.f32 %v368, %v377
    %v380 = vadd.f32 %v369, %v377
    %v381 = vadd.f32 %v370, %v377
    %v382 = vadd.f32 %v371, %v377
    %383 = vst [vmem:[%s3] sm:$0xff] %v379
    %384 = vst [vmem:[%s3 + $0x8] sm:$0xff] %v380
    %385 = vst [vmem:[%s3 + $0x10] sm:$0xff] %v381
    %386 = vst [vmem:[%s3 + $0x18] sm:$0xff] %v382
  $region21: #{_lambda_.37} parent=0 // pred_fallthru
    _
  // Predicated region
  $region22: #{_lambda_.37} parent=0 // pred_check
    _
  $region23: #{_lambda_.37} parent=0 // pred_check_branch
    %388 = sbr.rel (0) target = $region25
  $region24: #{_lambda_.37} parent=0 // pred_region
    _
  $region25: #{_lambda_.37} parent=0 // pred_fallthru
    _
  // Predicated region
  $region26: #{_lambda_.37} parent=0 // pred_check
    _
  $region27: #{_lambda_.37} parent=0 // pred_check_branch
    %390 = sbr.rel (0) target = $region29
  $region28: #{_lambda_.37} parent=0 // pred_region
    _
  $region29: #{_lambda_.37} parent=0 // pred_fallthru
    _

// kernel: _lambda_.42
$region0: #{_lambda_.42}
  #allocation0 [shape = 'u32[]', space=smem, size = 0x4, offset = 0x4, fixed_abs, tag = 'smem constant byte address 0x4 - core index']
  #allocation1 [shape = 'u32[144,128]{1,0:T(1,128)}', space=vmem, size = 0x12000, scoped, tag = 'internal scratch']
  %s0 = inlined_call_operand.vmem [shape: f32[32,128], index: 0, kind: input, shape index: {}]
  %s1 = inlined_call_operand.vmem [shape: f32[32,128], index: 1, kind: input, shape index: {}]
  %s2 = inlined_call_operand.vmem [shape: f32[1,128], index: 2, kind: input, shape index: {}]
  %s3 = inlined_call_operand.vmem [shape: f32[1,128], index: 3, kind: input, shape index: {}]
  %s4 = inlined_call_operand.vmem [shape: f32[1,128], index: 4, kind: input, shape index: {}]
  %s5 = inlined_call_operand.vmem [shape: f32[1,128], index: 5, kind: input, shape index: {}]
  %s6 = inlined_call_operand.vmem [shape: f32[32,128], index: 6, kind: output, shape index: {}]
  %s7 = sld [smem:[#allocation0]]
  $region34: #{_lambda_.42} parent=0
    _
  %s9 = ssub.s32 1, %s7
  %s10 = scalar_select 0, %s9, %s7
  // Predicated region
  $region2: #{_lambda_.42} parent=0 // pred_check
    _
  $region3: #{_lambda_.42} parent=0 // pred_check_branch
    %12 = sbr.rel (0) target = $region5
  $region4: #{_lambda_.42} parent=0 // pred_region
    _
  $region5: #{_lambda_.42} parent=0 // pred_fallthru
    _
  // Predicated region
  $region6: #{_lambda_.42} parent=0 // pred_check
    _
  $region7: #{_lambda_.42} parent=0 // pred_check_branch
    %14 = sbr.rel (0) target = $region9
  $region8: #{_lambda_.42} parent=0 // pred_region
    _
  $region9: #{_lambda_.42} parent=0 // pred_fallthru
    _
  // Predicated region
  $region10: #{_lambda_.42} parent=0 // pred_check
    _
  $region11: #{_lambda_.42} parent=0 // pred_check_branch
    %16 = sbr.rel (0) target = $region13
  $region12: #{_lambda_.42} parent=0 // pred_region
    _
  $region13: #{_lambda_.42} parent=0 // pred_fallthru
    _
  // Predicated region
  $region14: #{_lambda_.42} parent=0 // pred_check
    _
  $region15: #{_lambda_.42} parent=0 // pred_check_branch
    %18 = sbr.rel (0) target = $region17
  $region16: #{_lambda_.42} parent=0 // pred_region
    _
  $region17: #{_lambda_.42} parent=0 // pred_fallthru
    _
  // Predicated region
  $region18: #{_lambda_.42} parent=0 // pred_check
    _
  $region19: #{_lambda_.42} parent=0 // pred_check_branch
    %20 = sbr.rel (0) target = $region21
  $region20: #{_lambda_.42} parent=0 // pred_region
    _
  $region21: #{_lambda_.42} parent=0 // pred_fallthru
    _
  // Predicated region
  $region22: #{_lambda_.42} parent=0 // pred_check
    _
  $region23: #{_lambda_.42} parent=0 // pred_check_branch
    %22 = sbr.rel (0) target = $region25
  $region24: #{_lambda_.42} parent=0 // pred_region
    _
  $region25: #{_lambda_.42} parent=0 // pred_fallthru
    _
  %v23 = vld [vmem:[%s2] sm:$0x1]
  %v24 = vmul.f32 %v23, 0.03125
  %v25 = vld [vmem:[%s3] sm:$0x1]
  %v26 = vmul.f32 %v25, 0.03125
  %v27 = vmul.f32 %v24, %v24
  %v28 = vsub.f32 %v26, %v27
  %v29 = vld [vmem:[%s4] sm:$0x1]
  %v30 = vadd.f32 %v28, 1e-05
  %v31 = vrsqrt.pop %v30
  %v32 = vmul.f32 %v29, %v31
  %v33 = vld [vmem:[%s5] sm:$0x1]
  %v34 = vmul.f32 %v24, %v32
  %v35 = vsub.f32 %v33, %v34
  %v36 = vld [vmem:[%s0] sm:$0xff]
  %v37 = vld [vmem:[%s0 + $0x8] sm:$0xff]
  %v38 = vld [vmem:[%s0 + $0x10] sm:$0xff]
  %v39 = vld [vmem:[%s0 + $0x18] sm:$0xff]
  %v41 = vlaneseq
  %v42 = vshrl.u32 %v41, 7
  %v43 = vsub.s32 0, %v42
  %v44 = vrot.slane %v32, %v43
  %v46 = vmul.f32 %v36, %v44
  %v47 = vmul.f32 %v37, %v44
  %v48 = vmul.f32 %v38, %v44
  %v49 = vmul.f32 %v39, %v44
  %v51 = vlaneseq
  %v52 = vshrl.u32 %v51, 7
  %v53 = vsub.s32 0, %v52
  %v54 = vrot.slane %v35, %v53
  %v56 = vadd.f32 %v46, %v54
  %v57 = vadd.f32 %v47, %v54
  %v58 = vadd.f32 %v48, %v54
  %v59 = vadd.f32 %v49, %v54
  %v60 = vld [vmem:[%s1] sm:$0xff]
  %v61 = vld [vmem:[%s1 + $0x8] sm:$0xff]
  %v62 = vld [vmem:[%s1 + $0x10] sm:$0xff]
  %v63 = vld [vmem:[%s1 + $0x18] sm:$0xff]
  %v64 = vadd.f32 %v56, %v60
  %v65 = vadd.f32 %v57, %v61
  %v66 = vadd.f32 %v58, %v62
  %v67 = vadd.f32 %v59, %v63
  %68 = vst [vmem:[%s6] sm:$0xff] %v64
  %69 = vst [vmem:[%s6 + $0x8] sm:$0xff] %v65
  %70 = vst [vmem:[%s6 + $0x10] sm:$0xff] %v66
  %71 = vst [vmem:[%s6 + $0x18] sm:$0xff] %v67
  // Predicated region
  $region26: #{_lambda_.42} parent=0 // pred_check
    _
  $region27: #{_lambda_.42} parent=0 // pred_check_branch
    %73 = sbr.rel (0) target = $region29
  $region28: #{_lambda_.42} parent=0 // pred_region
    _
  $region29: #{_lambda_.42} parent=0 // pred_fallthru
    _
  // Predicated region
  $region30: #{_lambda_.42} parent=0 // pred_check
    _
  $region31: #{_lambda_.42} parent=0 // pred_check_branch
    %75 = sbr.rel (0) target = $region33
  $region32: #{_lambda_.42} parent=0 // pred_region
    _
  $region33: #{_lambda_.42} parent=0 // pred_fallthru
    _

// kernel: _lambda_.49
$region0: #{_lambda_.49}
  #allocation0 [shape = 'u32[]', space=smem, size = 0x4, offset = 0x4, fixed_abs, tag = 'smem constant byte address 0x4 - core index']
  #allocation1 [shape = 'u32[144,128]{1,0:T(1,128)}', space=vmem, size = 0x12000, scoped, tag = 'internal scratch']
  #allocation2 [shape = 'f32[32,256]{1,0:T(8,128)}', space=vmem, size = 0x8000, scoped, tag = 'scratch operand']
  %s0 = inlined_call_operand.vmem [shape: bf16[32,128], index: 0, kind: input, shape index: {}]
  %s1 = inlined_call_operand.vmem [shape: bf16[128,256], index: 1, kind: input, shape index: {}]
  %s2 = inlined_call_operand.vmem [shape: f32[1,256], index: 2, kind: input, shape index: {}]
  %s3 = inlined_call_operand.vmem [shape: f32[32,256], index: 3, kind: output, shape index: {}]
  %s4 = sld [smem:[#allocation0]]
  $region30: #{_lambda_.49} parent=0
    _
  %s6 = ssub.s32 1, %s4
  %s7 = scalar_select 0, %s6, %s4
  // Predicated region
  $region2: #{_lambda_.49} parent=0 // pred_check
    _
  $region3: #{_lambda_.49} parent=0 // pred_check_branch
    %9 = sbr.rel (0) target = $region5
  $region4: #{_lambda_.49} parent=0 // pred_region
    _
  $region5: #{_lambda_.49} parent=0 // pred_fallthru
    _
  // Predicated region
  $region6: #{_lambda_.49} parent=0 // pred_check
    _
  $region7: #{_lambda_.49} parent=0 // pred_check_branch
    %11 = sbr.rel (0) target = $region9
  $region8: #{_lambda_.49} parent=0 // pred_region
    _
  $region9: #{_lambda_.49} parent=0 // pred_fallthru
    _
  // Predicated region
  $region10: #{_lambda_.49} parent=0 // pred_check
    _
  $region11: #{_lambda_.49} parent=0 // pred_check_branch
    %13 = sbr.rel (0) target = $region13
  $region12: #{_lambda_.49} parent=0 // pred_region
    _
  $region13: #{_lambda_.49} parent=0 // pred_fallthru
    _
  %p15 = scmp.eq.s32.totalorder 0, 0
  // Predicated region
  $region14: #{_lambda_.49} parent=0 // pred_check
    %p16 = pneg %p15
  $region15: #{_lambda_.49} parent=0 // pred_check_branch
    %18 = sbr.rel (%p16) target = $region17
  $region16: #{_lambda_.49} parent=0 // pred_region
    %19 = vst [vmem:[#allocation2] sm:$0xff] 0.0
    %20 = vst [vmem:[#allocation2 + $0x8] sm:$0xff] 0.0
    %21 = vst [vmem:[#allocation2 + $0x10] sm:$0xff] 0.0
    %22 = vst [vmem:[#allocation2 + $0x18] sm:$0xff] 0.0
    %23 = vst [vmem:[#allocation2 + $0x20] sm:$0xff] 0.0
    %24 = vst [vmem:[#allocation2 + $0x28] sm:$0xff] 0.0
    %25 = vst [vmem:[#allocation2 + $0x30] sm:$0xff] 0.0
    %26 = vst [vmem:[#allocation2 + $0x38] sm:$0xff] 0.0
  $region17: #{_lambda_.49} parent=0 // pred_fallthru
    _
  %v27 = vld [vmem:[#allocation2] sm:$0xff]
  %v28 = vld [vmem:[#allocation2 + $0x8] sm:$0xff]
  %v29 = vld [vmem:[#allocation2 + $0x10] sm:$0xff]
  %v30 = vld [vmem:[#allocation2 + $0x18] sm:$0xff]
  %v31 = vld [vmem:[#allocation2 + $0x20] sm:$0xff]
  %v32 = vld [vmem:[#allocation2 + $0x28] sm:$0xff]
  %v33 = vld [vmem:[#allocation2 + $0x30] sm:$0xff]
  %v34 = vld [vmem:[#allocation2 + $0x38] sm:$0xff]
  %v35 = vld [vmem:[%s0] sm:$0xf]
  %v36 = vld [vmem:[%s0 + $0x4] sm:$0xf]
  %v37 = vld [vmem:[%s0 + $0x8] sm:$0xf]
  %v38 = vld [vmem:[%s0 + $0xc] sm:$0xf]
  %v39 = vld [vmem:[%s1] sm:$0xff]
  %v40 = vld [vmem:[%s1 + $0x8] sm:$0xff]
  %v41 = vld [vmem:[%s1 + $0x10] sm:$0xff]
  %v42 = vld [vmem:[%s1 + $0x18] sm:$0xff]
  %v43 = vld [vmem:[%s1 + $0x20] sm:$0xff]
  %v44 = vld [vmem:[%s1 + $0x28] sm:$0xff]
  %v45 = vld [vmem:[%s1 + $0x30] sm:$0xff]
  %v46 = vld [vmem:[%s1 + $0x38] sm:$0xff]
  %v47 = vld [vmem:[%s1 + $0x40] sm:$0xff]
  %v48 = vld [vmem:[%s1 + $0x48] sm:$0xff]
  %v49 = vld [vmem:[%s1 + $0x50] sm:$0xff]
  %v50 = vld [vmem:[%s1 + $0x58] sm:$0xff]
  %v51 = vld [vmem:[%s1 + $0x60] sm:$0xff]
  %v52 = vld [vmem:[%s1 + $0x68] sm:$0xff]
  %v53 = vld [vmem:[%s1 + $0x70] sm:$0xff]
  %v54 = vld [vmem:[%s1 + $0x78] sm:$0xff]
  %v59 = vunpack.c.l.b16 %v35
  %v60 = vunpack.c.l.b16 %v36
  %v61 = vunpack.c.l.b16 %v37
  %v62 = vunpack.c.l.b16 %v38
  %v63 = vpack.c.b16 %v60, %v59
  %v64 = vpack.c.b16 %v62, %v61
  %v83 = vunpack.c.l.b16 %v39
  %v84 = vunpack.c.h.b16 %v39
  %v85 = vunpack.c.l.b16 %v40
  %v86 = vunpack.c.h.b16 %v40
  %v87 = vunpack.c.l.b16 %v41
  %v88 = vunpack.c.h.b16 %v41
  %v89 = vunpack.c.l.b16 %v42
  %v90 = vunpack.c.h.b16 %v42
  %v91 = vunpack.c.l.b16 %v43
  %v92 = vunpack.c.h.b16 %v43
  %v93 = vunpack.c.l.b16 %v44
  %v94 = vunpack.c.h.b16 %v44
  %v95 = vunpack.c.l.b16 %v45
  %v96 = vunpack.c.h.b16 %v45
  %v97 = vunpack.c.l.b16 %v46
  %v98 = vunpack.c.h.b16 %v46
  %v99 = vunpack.c.l.b16 %v47
  %v100 = vunpack.c.h.b16 %v47
  %v101 = vunpack.c.l.b16 %v48
  %v102 = vunpack.c.h.b16 %v48
  %v103 = vunpack.c.l.b16 %v49
  %v104 = vunpack.c.h.b16 %v49
  %v105 = vunpack.c.l.b16 %v50
  %v106 = vunpack.c.h.b16 %v50
  %v107 = vunpack.c.l.b16 %v51
  %v108 = vunpack.c.h.b16 %v51
  %v109 = vunpack.c.l.b16 %v52
  %v110 = vunpack.c.h.b16 %v52
  %v111 = vunpack.c.l.b16 %v53
  %v112 = vunpack.c.h.b16 %v53
  %v113 = vunpack.c.l.b16 %v54
  %v114 = vunpack.c.h.b16 %v54
  %v115 = vpack.c.b16 %v85, %v83
  %v116 = vpack.c.b16 %v86, %v84
  %v117 = vpack.c.b16 %v89, %v87
  %v118 = vpack.c.b16 %v90, %v88
  %v119 = vpack.c.b16 %v93, %v91
  %v120 = vpack.c.b16 %v94, %v92
  %v121 = vpack.c.b16 %v97, %v95
  %v122 = vpack.c.b16 %v98, %v96
  %v123 = vpack.c.b16 %v101, %v99
  %v124 = vpack.c.b16 %v102, %v100
  %v125 = vpack.c.b16 %v105, %v103
  %v126 = vpack.c.b16 %v106, %v104
  %v127 = vpack.c.b16 %v109, %v107
  %v128 = vpack.c.b16 %v110, %v108
  %v129 = vpack.c.b16 %v113, %v111
  %v130 = vpack.c.b16 %v114, %v112
  %147 = vmatprep.subr.bf16.mxu0 %v130
  %148 = vmatpush1.bf16.msra.mxu0 %v129
  %149 = vmatprep.subr.bf16.mxu0 %v128
  %150 = vmatpush1.bf16.msra.mxu0 %v127
  %151 = vmatprep.subr.bf16.mxu0 %v126
  %152 = vmatpush1.bf16.msra.mxu0 %v125
  %153 = vmatprep.subr.bf16.mxu0 %v124
  %154 = vmatpush1.bf16.msra.mxu0 %v123
  %155 = vmatprep.subr.bf16.mxu0 %v122
  %156 = vmatpush1.bf16.msra.mxu0 %v121
  %157 = vmatprep.subr.bf16.mxu0 %v120
  %158 = vmatpush1.bf16.msra.mxu0 %v119
  %159 = vmatprep.subr.bf16.mxu0 %v118
  %160 = vmatpush1.bf16.msra.mxu0 %v117
  %161 = vmatprep.subr.bf16.mxu0 %v116
  %162 = vmatpush1.bf16.msra.mxu0 %v115
  %163 = vmatprep.subr.bf16.mxu0 0
  %164 = vmatpush2.bf16.msra.mxu0 0
  %165 = vmatprep.subr.bf16.mxu0 0
  %166 = vmatpush2.bf16.msra.mxu0 0
  %167 = vmatprep.subr.bf16.mxu0 0
  %168 = vmatpush2.bf16.msra.mxu0 0
  %169 = vmatprep.subr.bf16.mxu0 0
  %170 = vmatpush2.bf16.msra.mxu0 0
  %171 = vmatprep.subr.bf16.mxu0 0
  %172 = vmatpush2.bf16.msra.mxu0 0
  %173 = vmatprep.subr.bf16.mxu0 0
  %174 = vmatpush2.bf16.msra.mxu0 0
  %175 = vmatprep.subr.bf16.mxu0 0
  %176 = vmatpush2.bf16.msra.mxu0 0
  %177 = vmatprep.subr.bf16.mxu0 0
  %178 = vmatpush2.bf16.msra.mxu0 0
  %179 = vmatprep.mubr.bf16.mxu0 0
  %180 = vmatmul.mubr.bf16.gmra.mxu0 %v63
  %v181 = vpop.f32.mrf.mxu0
  %v182 = vadd.f32 0.0, %v181
  %v183 = vpop.f32.mrf.mxu0
  %v184 = vadd.f32 0.0, %v183
  %v185 = vpop.f32.mrf.mxu0
  %v186 = vadd.f32 0.0, %v185
  %v187 = vpop.f32.mrf.mxu0
  %v188 = vadd.f32 0.0, %v187
  %189 = vmatprep.mubr.bf16.mxu0 0
  %190 = vmatmul.mubr.bf16.gmra.mxu0 %v64
  %v191 = vpop.f32.mrf.mxu0
  %v192 = vadd.f32 0.0, %v191
  %v193 = vpop.f32.mrf.mxu0
  %v194 = vadd.f32 0.0, %v193
  %v195 = vpop.f32.mrf.mxu0
  %v196 = vadd.f32 0.0, %v195
  %v197 = vpop.f32.mrf.mxu0
  %v198 = vadd.f32 0.0, %v197
  %199 = vdwg.mxu0
  %v200 = vadd.f32 %v27, %v182
  %v201 = vadd.f32 %v28, %v184
  %v202 = vadd.f32 %v29, %v186
  %v203 = vadd.f32 %v30, %v188
  %v204 = vadd.f32 %v31, %v192
  %v205 = vadd.f32 %v32, %v194
  %v206 = vadd.f32 %v33, %v196
  %v207 = vadd.f32 %v34, %v198
  %208 = vst [vmem:[#allocation2] sm:$0xff] %v200
  %209 = vst [vmem:[#allocation2 + $0x8] sm:$0xff] %v201
  %210 = vst [vmem:[#allocation2 + $0x10] sm:$0xff] %v202
  %211 = vst [vmem:[#allocation2 + $0x18] sm:$0xff] %v203
  %212 = vst [vmem:[#allocation2 + $0x20] sm:$0xff] %v204
  %213 = vst [vmem:[#allocation2 + $0x28] sm:$0xff] %v205
  %214 = vst [vmem:[#allocation2 + $0x30] sm:$0xff] %v206
  %215 = vst [vmem:[#allocation2 + $0x38] sm:$0xff] %v207
  // Predicated region
  $region18: #{_lambda_.49} parent=0 // pred_check
    %p216 = pneg %p15
  $region19: #{_lambda_.49} parent=0 // pred_check_branch
    %218 = sbr.rel (%p216) target = $region21
  $region20: #{_lambda_.49} parent=0 // pred_region
    %v219 = vld [vmem:[#allocation2] sm:$0xff]
    %v220 = vld [vmem:[#allocation2 + $0x8] sm:$0xff]
    %v221 = vld [vmem:[#allocation2 + $0x10] sm:$0xff]
    %v222 = vld [vmem:[#allocation2 + $0x18] sm:$0xff]
    %v223 = vld [vmem:[#allocation2 + $0x20] sm:$0xff]
    %v224 = vld [vmem:[#allocation2 + $0x28] sm:$0xff]
    %v225 = vld [vmem:[#allocation2 + $0x30] sm:$0xff]
    %v226 = vld [vmem:[#allocation2 + $0x38] sm:$0xff]
    %v227 = vld [vmem:[%s2] sm:$0x3]
    %v229 = vlaneseq
    %v230 = vshrl.u32 %v229, 7
    %v231 = vsub.s32 0, %v230
    %v232 = vrot.slane %v227, %v231
    %v233 = vlaneseq
    %v234 = vshrl.u32 %v233, 7
    %v235 = vsub.s32 1, %v234
    %v236 = vrot.slane %v227, %v235
    %v239 = vadd.f32 %v219, %v232
    %v240 = vadd.f32 %v220, %v236
    %v241 = vadd.f32 %v221, %v232
    %v242 = vadd.f32 %v222, %v236
    %v243 = vadd.f32 %v223, %v232
    %v244 = vadd.f32 %v224, %v236
    %v245 = vadd.f32 %v225, %v232
    %v246 = vadd.f32 %v226, %v236
    %247 = vst [vmem:[%s3] sm:$0xff] %v239
    %248 = vst [vmem:[%s3 + $0x8] sm:$0xff] %v240
    %249 = vst [vmem:[%s3 + $0x10] sm:$0xff] %v241
    %250 = vst [vmem:[%s3 + $0x18] sm:$0xff] %v242
    %251 = vst [vmem:[%s3 + $0x20] sm:$0xff] %v243
    %252 = vst [vmem:[%s3 + $0x28] sm:$0xff] %v244
    %253 = vst [vmem:[%s3 + $0x30] sm:$0xff] %v245
    %254 = vst [vmem:[%s3 + $0x38] sm:$0xff] %v246
  $region21: #{_lambda_.49} parent=0 // pred_fallthru
    _
  // Predicated region
  $region22: #{_lambda_.49} parent=0 // pred_check
    _
  $region23: #{_lambda_.49} parent=0 // pred_check_branch
    %256 = sbr.rel (0) target = $region25
  $region24: #{_lambda_.49} parent=0 // pred_region
    _
  $region25: #{_lambda_.49} parent=0 // pred_fallthru
    _
  // Predicated region
  $region26: #{_lambda_.49} parent=0 // pred_check
    _
  $region27: #{_lambda_.49} parent=0 // pred_check_branch
    %258 = sbr.rel (0) target = $region29
  $region28: #{_lambda_.49} parent=0 // pred_region
    _
  $region29: #{_lambda_.49} parent=0 // pred_fallthru
    _

// kernel: _lambda_.55
$region0: #{_lambda_.55}
  #allocation0 [shape = 'u32[]', space=smem, size = 0x4, offset = 0x4, fixed_abs, tag = 'smem constant byte address 0x4 - core index']
  #allocation1 [shape = 'u32[144,128]{1,0:T(1,128)}', space=vmem, size = 0x12000, scoped, tag = 'internal scratch']
  #allocation2 [shape = 'f32[256,128]{1,0:T(8,128)}', space=vmem, size = 0x20000, scoped, tag = 'scratch operand']
  %s0 = inlined_call_operand.vmem [shape: bf16[512,512], index: 0, kind: input, shape index: {}]
  %s1 = inlined_call_operand.vmem [shape: bf16[512,128], index: 1, kind: input, shape index: {}]
  %s2 = inlined_call_operand.vmem [shape: f32[1,128], index: 2, kind: input, shape index: {}]
  %s3 = inlined_call_operand.vmem [shape: f32[512,128], index: 3, kind: output, shape index: {}]
  %s4 = sld [smem:[#allocation0]]
  $region53: #{_lambda_.55} parent=0
    _
  %s6 = ssub.s32 1, %s4
  %s7 = scalar_select 0, %s6, %s4
  loop: start=0, step=1, limit=4
  $region2: #{_lambda_.55} parent=0 // loop_pre_header
    _
  $region3: #{_lambda_.55} parent=0 // loop_header
    %s9 = sphi 0, %s13
    %p10 = scmp.ge.s32.totalorder %s9, 4
    %s16 = sphi 0, %s35
    %s17 = sphi 0, %s31
    %s18 = sphi 0, %s27
    %s19 = sphi 0, %s16
    %s20 = sphi 0, %s17
    %s21 = sphi 0, %s18
    %s22 = sphi 0, %s19
    %s23 = sphi 0, %s20
    %s24 = sphi 0, %s21
    %s40 = sphi 0, %s42
    %s43 = sphi 0, %s40
    %s44 = sphi 0, %s43
    %s60 = sphi 0, %s44
    %s68 = sphi 0, %s70
    %s71 = sphi 0, %s68
    %s72 = sphi 0, %s71
    %s88 = sphi 0, %s72
    %s94 = sphi 0, %s96
    %s97 = sphi 0, %s94
    %s98 = sphi 0, %s97
    %s114 = sphi 0, %s98
    %s122 = sphi 0, %s124
    %s125 = sphi 0, %s122
    %s126 = sphi 0, %s125
    %s142 = sphi 0, %s126
  $region4: #{_lambda_.55} parent=0 // loop_header_branch
    %12 = sbr.rel (%p10) target = $region8
  $region5: #{_lambda_.55} parent=0 // loop_body
    %s14 = ssub.s32 %s9, 1
    %s15 = ssub.s32 %s9, 2
    %s25 = sadd.s32 1, %s18
    %p26 = scmp.ge.s32.totalorder %s25, 1
    %s27 = scalar_select %p26, 0, %s25
    %s28 = sadd.s32 1, %s17
    %s29 = scalar_select %p26, %s28, %s17
    %p30 = scmp.ge.s32.totalorder %s29, 1
    %s31 = scalar_select %p30, 0, %s29
    %s32 = sadd.s32 1, %s16
    %s33 = scalar_select %p30, %s32, %s16
    %p34 = scmp.ge.s32.totalorder %s33, 2
    %s35 = scalar_select %p34, 0, %s33
    %s36 = ssub.s32 %s16, %s35
    %s37 = ssub.s32 %s18, %s27
    %s38 = sor.u32 %s36, %s37
    %p39 = scmp.eq.s32.totalorder %s38, 0
    %s41 = sadd.s32 %s40, 1
    %s42 = scalar_select %p39, %s40, %s41
    %p45 = pneg %p39
    %p46 = scmp.eq.s32.totalorder %s9, 1
    %p47 = por %p45, %p46
    %p48 = scmp.ne.s32.totalorder %s40, %s43
    %p49 = scmp.eq.s32.totalorder %s9, 0
    %p50 = por %p48, %p49
    %p51 = scmp.ne.s32.totalorder %s40, %s43
    %p52 = scmp.eq.s32.totalorder %s14, 1
    %p53 = por %p51, %p52
    %p54 = scmp.ne.s32.totalorder %s43, %s44
    %p55 = scmp.eq.s32.totalorder %s14, 0
    %p56 = por %p54, %p55
    %p57 = scmp.ne.s32.totalorder %s43, %s44
    %p58 = scmp.eq.s32.totalorder %s15, 1
    %p59 = por %p57, %p58
    %p61 = scmp.ne.s32.totalorder %s44, %s60
    %p62 = scmp.eq.s32.totalorder %s15, 0
    %p63 = por %p61, %p62
    %s64 = ssub.s32 %s18, %s27
    %s65 = ssub.s32 %s17, %s31
    %s66 = sor.u32 %s64, %s65
    %p67 = scmp.eq.s32.totalorder %s66, 0
    %s69 = sadd.s32 %s68, 1
    %s70 = scalar_select %p67, %s68, %s69
    %p73 = pneg %p67
    %p74 = scmp.eq.s32.totalorder %s9, 1
    %p75 = por %p73, %p74
    %p76 = scmp.ne.s32.totalorder %s68, %s71
    %p77 = scmp.eq.s32.totalorder %s9, 0
    %p78 = por %p76, %p77
    %p79 = scmp.ne.s32.totalorder %s68, %s71
    %p80 = scmp.eq.s32.totalorder %s14, 1
    %p81 = por %p79, %p80
    %p82 = scmp.ne.s32.totalorder %s71, %s72
    %p83 = scmp.eq.s32.totalorder %s14, 0
    %p84 = por %p82, %p83
    %p85 = scmp.ne.s32.totalorder %s71, %s72
    %p86 = scmp.eq.s32.totalorder %s15, 1
    %p87 = por %p85, %p86
    %p89 = scmp.ne.s32.totalorder %s72, %s88
    %p90 = scmp.eq.s32.totalorder %s15, 0
    %p91 = por %p89, %p90
    %s92 = ssub.s32 %s17, %s31
    %p93 = scmp.eq.s32.totalorder %s92, 0
    %s95 = sadd.s32 %s94, 1
    %s96 = scalar_select %p93, %s94, %s95
    %p99 = pneg %p93
    %p100 = scmp.eq.s32.totalorder %s9, 1
    %p101 = por %p99, %p100
    %p102 = scmp.ne.s32.totalorder %s94, %s97
    %p103 = scmp.eq.s32.totalorder %s9, 0
    %p104 = por %p102, %p103
    %p105 = scmp.ne.s32.totalorder %s94, %s97
    %p106 = scmp.eq.s32.totalorder %s14, 1
    %p107 = por %p105, %p106
    %p108 = scmp.ne.s32.totalorder %s97, %s98
    %p109 = scmp.eq.s32.totalorder %s14, 0
    %p110 = por %p108, %p109
    %p111 = scmp.ne.s32.totalorder %s97, %s98
    %p112 = scmp.eq.s32.totalorder %s15, 1
    %p113 = por %p111, %p112
    %p115 = scmp.ne.s32.totalorder %s98, %s114
    %p116 = scmp.eq.s32.totalorder %s15, 0
    %p117 = por %p115, %p116
    %s118 = ssub.s32 %s16, %s35
    %s119 = ssub.s32 %s17, %s31
    %s120 = sor.u32 %s118, %s119
    %p121 = scmp.eq.s32.totalorder %s120, 0
    %s123 = sadd.s32 %s122, 1
    %s124 = scalar_select %p121, %s122, %s123
    %p127 = pneg %p121
    %p128 = scmp.eq.s32.totalorder %s9, 1
    %p129 = por %p127, %p128
    %p130 = scmp.ne.s32.totalorder %s122, %s125
    %p131 = scmp.eq.s32.totalorder %s9, 0
    %p132 = por %p130, %p131
    %p133 = scmp.ne.s32.totalorder %s122, %s125
    %p134 = scmp.eq.s32.totalorder %s14, 1
    %p135 = por %p133, %p134
    %p136 = scmp.ne.s32.totalorder %s125, %s126
    %p137 = scmp.eq.s32.totalorder %s14, 0
    %p138 = por %p136, %p137
    %p139 = scmp.ne.s32.totalorder %s125, %s126
    %p140 = scmp.eq.s32.totalorder %s15, 1
    %p141 = por %p139, %p140
    %p143 = scmp.ne.s32.totalorder %s126, %s142
    %p144 = scmp.eq.s32.totalorder %s15, 0
    %p145 = por %p143, %p144
    %p146 = scmp.le.s32.totalorder 1, %s9
    %p147 = scmp.lt.s32.totalorder %s9, 3
    %p148 = pnand %p146, %p147
    %p149 = pneg %p148
    // Predicated region
    $region9: #{_lambda_.55} parent=5 // pred_check
      _
    $region10: #{_lambda_.55} parent=5 // pred_check_branch
      %151 = sbr.rel (%p148) target = $region12
    $region11: #{_lambda_.55} parent=5 // pred_region
      %s152 = ssub.s32 %s9, 1
      // Predicated region
      $region13: #{_lambda_.55} parent=11 // pred_check
        %p153 = pneg %p84
      $region14: #{_lambda_.55} parent=11 // pred_check_branch
        %155 = sbr.rel (%p153) target = $region16
      $region15: #{_lambda_.55} parent=11 // pred_region
        %s156 = smul.u32 64, %s21
        %p157 = scmp.lt.s32.totalorder %s156, 63
        %s158 = scalar_select %p157, %s156, 63
        %p159 = scmp.lt.s32.totalorder %s20, 0
        %s160 = scalar_select %p159, %s20, 0
        %s161 = sadd.s32 %s160, %s158
        %s162 = smul.addr %s161, 4
        %s163 = scalar_lea.vmem %s1, %s162
        %s164 = smul.u32 64, %s21
      $region16: #{_lambda_.55} parent=11 // pred_fallthru
        _
      // Predicated region
      $region17: #{_lambda_.55} parent=11 // pred_check
        %p165 = pneg %p110
      $region18: #{_lambda_.55} parent=11 // pred_check_branch
        %167 = sbr.rel (%p165) target = $region20
      $region19: #{_lambda_.55} parent=11 // pred_region
        %p168 = scmp.lt.s32.totalorder %s20, 0
        %s169 = scalar_select %p168, %s20, 0
        %s170 = scalar_lea.vmem %s2, %s169
      $region20: #{_lambda_.55} parent=11 // pred_fallthru
        _
    $region12: #{_lambda_.55} parent=5 // pred_fallthru
      _
    %p171 = scmp.lt.s32.totalorder %s9, 2
    // Predicated region
    $region21: #{_lambda_.55} parent=5 // pred_check
      %p172 = pneg %p171
    $region22: #{_lambda_.55} parent=5 // pred_check_branch
      %174 = sbr.rel (%p172) target = $region24
    $region23: #{_lambda_.55} parent=5 // pred_region
      // Predicated region
      $region25: #{_lambda_.55} parent=23 // pred_check
        %p175 = pneg %p50
      $region26: #{_lambda_.55} parent=23 // pred_check_branch
        %177 = sbr.rel (%p175) target = $region28
      $region27: #{_lambda_.55} parent=23 // pred_region
        %s178 = smul.u32 32, %s16
        %s179 = smul.u32 4, %s18
        %p180 = scmp.lt.s32.totalorder %s178, 63
        %s181 = scalar_select %p180, %s178, 63
        %p182 = scmp.lt.s32.totalorder %s179, 3
        %s183 = scalar_select %p182, %s179, 3
        %s184 = smul.addr %s181, 4
        %s185 = sadd.s32 %s183, %s184
        %s186 = smul.addr %s185, 4
        %s187 = scalar_lea.vmem %s0, %s186
        %s188 = smul.u32 32, %s16
        %s189 = smul.u32 4, %s18
      $region28: #{_lambda_.55} parent=23 // pred_fallthru
        _
    $region24: #{_lambda_.55} parent=5 // pred_fallthru
      _
    %p190 = scmp.le.s32.totalorder 1, %s9
    %p191 = scmp.lt.s32.totalorder %s9, 3
    %p192 = pnand %p190, %p191
    %p193 = pneg %p192
    // Predicated region
    $region29: #{_lambda_.55} parent=5 // pred_check
      _
    $region30: #{_lambda_.55} parent=5 // pred_check_branch
      %195 = sbr.rel (%p192) target = $region32
    $region31: #{_lambda_.55} parent=5 // pred_region
      %s196 = ssub.s32 %s9, 1
      %s197 = smul.u32 32, %s19
      %s198 = smul.u32 4, %s21
      %p199 = scmp.lt.s32.totalorder %s197, 63
      %s200 = scalar_select %p199, %s197, 63
      %p201 = scmp.lt.s32.totalorder %s198, 3
      %s202 = scalar_select %p201, %s198, 3
      %s203 = smul.addr %s200, 4
      %s204 = sadd.s32 %s202, %s203
      %s205 = smul.addr %s204, 4
      %s206 = scalar_lea.vmem %s0, %s205
      %p207 = pneg %p56
      %p208 = pneg %p53
      %s209 = smul.u32 64, %s21
      %p210 = scmp.lt.s32.totalorder %s209, 63
      %s211 = scalar_select %p210, %s209, 63
      %p212 = scmp.lt.s32.totalorder %s20, 0
      %s213 = scalar_select %p212, %s20, 0
      %s214 = sadd.s32 %s213, %s211
      %s215 = smul.addr %s214, 4
      %s216 = scalar_lea.vmem %s1, %s215
      %p217 = pneg %p84
      %p218 = pneg %p81
      %p219 = scmp.lt.s32.totalorder %s20, 0
      %s220 = scalar_select %p219, %s20, 0
      %s221 = scalar_lea.vmem %s2, %s220
      %p222 = pneg %p110
      %p223 = pneg %p107
      %p224 = pneg %p138
      %p225 = pneg %p135
      %s226 = smul.u32 32, %s19
      %p227 = scmp.lt.s32.totalorder %s226, 63
      %s228 = scalar_select %p227, %s226, 63
      %p229 = scmp.lt.s32.totalorder %s20, 0
      %s230 = scalar_select %p229, %s20, 0
      %s231 = sadd.s32 %s230, %s228
      %s232 = smul.addr %s231, 8
      %s233 = scalar_lea.vmem %s3, %s232
      %s234 = smul.u32 32, %s19
      %s235 = smul.u32 4, %s21
      %p236 = scmp.lt.s32.totalorder %s234, 63
      %s237 = scalar_select %p236, %s234, 63
      %p238 = scmp.lt.s32.totalorder %s235, 3
      %s239 = scalar_select %p238, %s235, 3
      %s240 = smul.addr %s237, 4
      %s241 = sadd.s32 %s239, %s240
      %s242 = smul.addr %s241, 4
      %s243 = scalar_lea.vmem %s0, %s242
      %s244 = smul.u32 32, %s19
      %s245 = smul.u32 4, %s21
      %s246 = smul.u32 64, %s21
      %p247 = scmp.lt.s32.totalorder %s246, 63
      %s248 = scalar_select %p247, %s246, 63
      %p249 = scmp.lt.s32.totalorder %s20, 0
      %s250 = scalar_select %p249, %s20, 0
      %s251 = sadd.s32 %s250, %s248
      %s252 = smul.addr %s251, 4
      %s253 = scalar_lea.vmem %s1, %s252
      %s254 = smul.u32 64, %s21
      %p255 = scmp.lt.s32.totalorder %s20, 0
      %s256 = scalar_select %p255, %s20, 0
      %s257 = scalar_lea.vmem %s2, %s256
      %s258 = smul.u32 32, %s19
      %p259 = scmp.lt.s32.totalorder %s258, 63
      %s260 = scalar_select %p259, %s258, 63
      %p261 = scmp.lt.s32.totalorder %s20, 0
      %s262 = scalar_select %p261, %s20, 0
      %s263 = sadd.s32 %s262, %s260
      %s264 = smul.addr %s263, 8
      %s265 = scalar_lea.vmem %s3, %s264
      %s266 = smul.u32 32, %s19
      %p268 = scmp.eq.s32.totalorder %s21, 0
      // Predicated region
      $region33: #{_lambda_.55} parent=31 // pred_check
        %p269 = pneg %p268
      $region34: #{_lambda_.55} parent=31 // pred_check_branch
        %271 = sbr.rel (%p269) target = $region36
      $region35: #{_lambda_.55} parent=31 // pred_region
        %272 = vst [vmem:[#allocation2] sm:$0xff] 0.0
        %273 = vst [vmem:[#allocation2 + $0x8] sm:$0xff] 0.0
        %274 = vst [vmem:[#allocation2 + $0x10] sm:$0xff] 0.0
        %275 = vst [vmem:[#allocation2 + $0x18] sm:$0xff] 0.0
        %276 = vst [vmem:[#allocation2 + $0x20] sm:$0xff] 0.0
        %277 = vst [vmem:[#allocation2 + $0x28] sm:$0xff] 0.0
        %278 = vst [vmem:[#allocation2 + $0x30] sm:$0xff] 0.0
        %279 = vst [vmem:[#allocation2 + $0x38] sm:$0xff] 0.0
        %280 = vst [vmem:[#allocation2 + $0x40] sm:$0xff] 0.0
        %281 = vst [vmem:[#allocation2 + $0x48] sm:$0xff] 0.0
        %282 = vst [vmem:[#allocation2 + $0x50] sm:$0xff] 0.0
        %283 = vst [vmem:[#allocation2 + $0x58] sm:$0xff] 0.0
        %284 = vst [vmem:[#allocation2 + $0x60] sm:$0xff] 0.0
        %285 = vst [vmem:[#allocation2 + $0x68] sm:$0xff] 0.0
        %286 = vst [vmem:[#allocation2 + $0x70] sm:$0xff] 0.0
        %287 = vst [vmem:[#allocation2 + $0x78] sm:$0xff] 0.0
        %288 = vst [vmem:[#allocation2 + $0x80] sm:$0xff] 0.0
        %289 = vst [vmem:[#allocation2 + $0x88] sm:$0xff] 0.0
        %290 = vst [vmem:[#allocation2 + $0x90] sm:$0xff] 0.0
        %291 = vst [vmem:[#allocation2 + $0x98] sm:$0xff] 0.0
        %292 = vst [vmem:[#allocation2 + $0xa0] sm:$0xff] 0.0
        %293 = vst [vmem:[#allocation2 + $0xa8] sm:$0xff] 0.0
        %294 = vst [vmem:[#allocation2 + $0xb0] sm:$0xff] 0.0
        %295 = vst [vmem:[#allocation2 + $0xb8] sm:$0xff] 0.0
        %296 = vst [vmem:[#allocation2 + $0xc0] sm:$0xff] 0.0
        %297 = vst [vmem:[#allocation2 + $0xc8] sm:$0xff] 0.0
        %298 = vst [vmem:[#allocation2 + $0xd0] sm:$0xff] 0.0
        %299 = vst [vmem:[#allocation2 + $0xd8] sm:$0xff] 0.0
        %300 = vst [vmem:[#allocation2 + $0xe0] sm:$0xff] 0.0
        %301 = vst [vmem:[#allocation2 + $0xe8] sm:$0xff] 0.0
        %302 = vst [vmem:[#allocation2 + $0xf0] sm:$0xff] 0.0
        %303 = vst [vmem:[#allocation2 + $0xf8] sm:$0xff] 0.0
      $region36: #{_lambda_.55} parent=31 // pred_fallthru
        _
      %v304 = vld [vmem:[#allocation2] sm:$0xff]
      %v305 = vld [vmem:[#allocation2 + $0x8] sm:$0xff]
      %v306 = vld [vmem:[#allocation2 + $0x10] sm:$0xff]
      %v307 = vld [vmem:[#allocation2 + $0x18] sm:$0xff]
      %v308 = vld [vmem:[#allocation2 + $0x20] sm:$0xff]
      %v309 = vld [vmem:[#allocation2 + $0x28] sm:$0xff]
      %v310 = vld [vmem:[#allocation2 + $0x30] sm:$0xff]
      %v311 = vld [vmem:[#allocation2 + $0x38] sm:$0xff]
      %v312 = vld [vmem:[#allocation2 + $0x40] sm:$0xff]
      %v313 = vld [vmem:[#allocation2 + $0x48] sm:$0xff]
      %v314 = vld [vmem:[#allocation2 + $0x50] sm:$0xff]
      %v315 = vld [vmem:[#allocation2 + $0x58] sm:$0xff]
      %v316 = vld [vmem:[#allocation2 + $0x60] sm:$0xff]
      %v317 = vld [vmem:[#allocation2 + $0x68] sm:$0xff]
      %v318 = vld [vmem:[#allocation2 + $0x70] sm:$0xff]
      %v319 = vld [vmem:[#allocation2 + $0x78] sm:$0xff]
      %v320 = vld [vmem:[#allocation2 + $0x80] sm:$0xff]
      %v321 = vld [vmem:[#allocation2 + $0x88] sm:$0xff]
      %v322 = vld [vmem:[#allocation2 + $0x90] sm:$0xff]
      %v323 = vld [vmem:[#allocation2 + $0x98] sm:$0xff]
      %v324 = vld [vmem:[#allocation2 + $0xa0] sm:$0xff]
      %v325 = vld [vmem:[#allocation2 + $0xa8] sm:$0xff]
      %v326 = vld [vmem:[#allocation2 + $0xb0] sm:$0xff]
      %v327 = vld [vmem:[#allocation2 + $0xb8] sm:$0xff]
      %v328 = vld [vmem:[#allocation2 + $0xc0] sm:$0xff]
      %v329 = vld [vmem:[#allocation2 + $0xc8] sm:$0xff]
      %v330 = vld [vmem:[#allocation2 + $0xd0] sm:$0xff]
      %v331 = vld [vmem:[#allocation2 + $0xd8] sm:$0xff]
      %v332 = vld [vmem:[#allocation2 + $0xe0] sm:$0xff]
      %v333 = vld [vmem:[#allocation2 + $0xe8] sm:$0xff]
      %v334 = vld [vmem:[#allocation2 + $0xf0] sm:$0xff]
      %v335 = vld [vmem:[#allocation2 + $0xf8] sm:$0xff]
      %v336 = vld [vmem:[%s243] sm:$0xff]
      %v337 = vld [vmem:[%s243 + $0x8] sm:$0xff]
      %v338 = vld [vmem:[%s243 + $0x10] sm:$0xff]
      %v339 = vld [vmem:[%s243 + $0x18] sm:$0xff]
      %v340 = vld [vmem:[%s243 + $0x20] sm:$0xff]
      %v341 = vld [vmem:[%s243 + $0x28] sm:$0xff]
      %v342 = vld [vmem:[%s243 + $0x30] sm:$0xff]
      %v343 = vld [vmem:[%s243 + $0x38] sm:$0xff]
      %v344 = vld [vmem:[%s243 + $0x40] sm:$0xff]
      %v345 = vld [vmem:[%s243 + $0x48] sm:$0xff]
      %v346 = vld [vmem:[%s243 + $0x50] sm:$0xff]
      %v347 = vld [vmem:[%s243 + $0x58] sm:$0xff]
      %v348 = vld [vmem:[%s243 + $0x60] sm:$0xff]
      %v349 = vld [vmem:[%s243 + $0x68] sm:$0xff]
      %v350 = vld [vmem:[%s243 + $0x70] sm:$0xff]
      %v351 = vld [vmem:[%s243 + $0x78] sm:$0xff]
      %v352 = vld [vmem:[%s243 + $0x80] sm:$0xff]
      %v353 = vld [vmem:[%s243 + $0x88] sm:$0xff]
      %v354 = vld [vmem:[%s243 + $0x90] sm:$0xff]
      %v355 = vld [vmem:[%s243 + $0x98] sm:$0xff]
      %v356 = vld [vmem:[%s243 + $0xa0] sm:$0xff]
      %v357 = vld [vmem:[%s243 + $0xa8] sm:$0xff]
      %v358 = vld [vmem:[%s243 + $0xb0] sm:$0xff]
      %v359 = vld [vmem:[%s243 + $0xb8] sm:$0xff]
      %v360 = vld [vmem:[%s243 + $0xc0] sm:$0xff]
      %v361 = vld [vmem:[%s243 + $0xc8] sm:$0xff]
      %v362 = vld [vmem:[%s243 + $0xd0] sm:$0xff]
      %v363 = vld [vmem:[%s243 + $0xd8] sm:$0xff]
      %v364 = vld [vmem:[%s243 + $0xe0] sm:$0xff]
      %v365 = vld [vmem:[%s243 + $0xe8] sm:$0xff]
      %v366 = vld [vmem:[%s243 + $0xf0] sm:$0xff]
      %v367 = vld [vmem:[%s243 + $0xf8] sm:$0xff]
      %v368 = vld [vmem:[%s243 + $0x100] sm:$0xff]
      %v369 = vld [vmem:[%s243 + $0x108] sm:$0xff]
      %v370 = vld [vmem:[%s243 + $0x110] sm:$0xff]
      %v371 = vld [vmem:[%s243 + $0x118] sm:$0xff]
      %v372 = vld [vmem:[%s243 + $0x120] sm:$0xff]
      %v373 = vld [vmem:[%s243 + $0x128] sm:$0xff]
      %v374 = vld [vmem:[%s243 + $0x130] sm:$0xff]
      %v375 = vld [vmem:[%s243 + $0x138] sm:$0xff]
      %v376 = vld [vmem:[%s243 + $0x140] sm:$0xff]
      %v377 = vld [vmem:[%s243 + $0x148] sm:$0xff]
      %v378 = vld [vmem:[%s243 + $0x150] sm:$0xff]
      %v379 = vld [vmem:[%s243 + $0x158] sm:$0xff]
      %v380 = vld [vmem:[%s243 + $0x160] sm:$0xff]
      %v381 = vld [vmem:[%s243 + $0x168] sm:$0xff]
      %v382 = vld [vmem:[%s243 + $0x170] sm:$0xff]
      %v383 = vld [vmem:[%s243 + $0x178] sm:$0xff]
      %v384 = vld [vmem:[%s243 + $0x180] sm:$0xff]
      %v385 = vld [vmem:[%s243 + $0x188] sm:$0xff]
      %v386 = vld [vmem:[%s243 + $0x190] sm:$0xff]
      %v387 = vld [vmem:[%s243 + $0x198] sm:$0xff]
      %v388 = vld [vmem:[%s243 + $0x1a0] sm:$0xff]
      %v389 = vld [vmem:[%s243 + $0x1a8] sm:$0xff]
      %v390 = vld [vmem:[%s243 + $0x1b0] sm:$0xff]
      %v391 = vld [vmem:[%s243 + $0x1b8] sm:$0xff]
      %v392 = vld [vmem:[%s243 + $0x1c0] sm:$0xff]
      %v393 = vld [vmem:[%s243 + $0x1c8] sm:$0xff]
      %v394 = vld [vmem:[%s243 + $0x1d0] sm:$0xff]
      %v395 = vld [vmem:[%s243 + $0x1d8] sm:$0xff]
      %v396 = vld [vmem:[%s243 + $0x1e0] sm:$0xff]
      %v397 = vld [vmem:[%s243 + $0x1e8] sm:$0xff]
      %v398 = vld [vmem:[%s243 + $0x1f0] sm:$0xff]
      %v399 = vld [vmem:[%s243 + $0x1f8] sm:$0xff]
      %v400 = vld [vmem:[%s253] sm:$0xf]
      %v401 = vld [vmem:[%s253 + $0x4] sm:$0xf]
      %v402 = vld [vmem:[%s253 + $0x8] sm:$0xf]
      %v403 = vld [vmem:[%s253 + $0xc] sm:$0xf]
      %v404 = vld [vmem:[%s253 + $0x10] sm:$0xf]
      %v405 = vld [vmem:[%s253 + $0x14] sm:$0xf]
      %v406 = vld [vmem:[%s253 + $0x18] sm:$0xf]
      %v407 = vld [vmem:[%s253 + $0x1c] sm:$0xf]
      %v408 = vld [vmem:[%s253 + $0x20] sm:$0xf]
      %v409 = vld [vmem:[%s253 + $0x24] sm:$0xf]
      %v410 = vld [vmem:[%s253 + $0x28] sm:$0xf]
      %v411 = vld [vmem:[%s253 + $0x2c] sm:$0xf]
      %v412 = vld [vmem:[%s253 + $0x30] sm:$0xf]
      %v413 = vld [vmem:[%s253 + $0x34] sm:$0xf]
      %v414 = vld [vmem:[%s253 + $0x38] sm:$0xf]
      %v415 = vld [vmem:[%s253 + $0x3c] sm:$0xf]
      %v416 = vld [vmem:[%s253 + $0x40] sm:$0xf]
      %v417 = vld [vmem:[%s253 + $0x44] sm:$0xf]
      %v418 = vld [vmem:[%s253 + $0x48] sm:$0xf]
      %v419 = vld [vmem:[%s253 + $0x4c] sm:$0xf]
      %v420 = vld [vmem:[%s253 + $0x50] sm:$0xf]
      %v421 = vld [vmem:[%s253 + $0x54] sm:$0xf]
      %v422 = vld [vmem:[%s253 + $0x58] sm:$0xf]
      %v423 = vld [vmem:[%s253 + $0x5c] sm:$0xf]
      %v424 = vld [vmem:[%s253 + $0x60] sm:$0xf]
      %v425 = vld [vmem:[%s253 + $0x64] sm:$0xf]
      %v426 = vld [vmem:[%s253 + $0x68] sm:$0xf]
      %v427 = vld [vmem:[%s253 + $0x6c] sm:$0xf]
      %v428 = vld [vmem:[%s253 + $0x70] sm:$0xf]
      %v429 = vld [vmem:[%s253 + $0x74] sm:$0xf]
      %v430 = vld [vmem:[%s253 + $0x78] sm:$0xf]
      %v431 = vld [vmem:[%s253 + $0x7c] sm:$0xf]
      %v432 = vld [vmem:[%s253 + $0x80] sm:$0xf]
      %v433 = vld [vmem:[%s253 + $0x84] sm:$0xf]
      %v434 = vld [vmem:[%s253 + $0x88] sm:$0xf]
      %v435 = vld [vmem:[%s253 + $0x8c] sm:$0xf]
      %v436 = vld [vmem:[%s253 + $0x90] sm:$0xf]
      %v437 = vld [vmem:[%s253 + $0x94] sm:$0xf]
      %v438 = vld [vmem:[%s253 + $0x98] sm:$0xf]
      %v439 = vld [vmem:[%s253 + $0x9c] sm:$0xf]
      %v440 = vld [vmem:[%s253 + $0xa0] sm:$0xf]
      %v441 = vld [vmem:[%s253 + $0xa4] sm:$0xf]
      %v442 = vld [vmem:[%s253 + $0xa8] sm:$0xf]
      %v443 = vld [vmem:[%s253 + $0xac] sm:$0xf]
      %v444 = vld [vmem:[%s253 + $0xb0] sm:$0xf]
      %v445 = vld [vmem:[%s253 + $0xb4] sm:$0xf]
      %v446 = vld [vmem:[%s253 + $0xb8] sm:$0xf]
      %v447 = vld [vmem:[%s253 + $0xbc] sm:$0xf]
      %v448 = vld [vmem:[%s253 + $0xc0] sm:$0xf]
      %v449 = vld [vmem:[%s253 + $0xc4] sm:$0xf]
      %v450 = vld [vmem:[%s253 + $0xc8] sm:$0xf]
      %v451 = vld [vmem:[%s253 + $0xcc] sm:$0xf]
      %v452 = vld [vmem:[%s253 + $0xd0] sm:$0xf]
      %v453 = vld [vmem:[%s253 + $0xd4] sm:$0xf]
      %v454 = vld [vmem:[%s253 + $0xd8] sm:$0xf]
      %v455 = vld [vmem:[%s253 + $0xdc] sm:$0xf]
      %v456 = vld [vmem:[%s253 + $0xe0] sm:$0xf]
      %v457 = vld [vmem:[%s253 + $0xe4] sm:$0xf]
      %v458 = vld [vmem:[%s253 + $0xe8] sm:$0xf]
      %v459 = vld [vmem:[%s253 + $0xec] sm:$0xf]
      %v460 = vld [vmem:[%s253 + $0xf0] sm:$0xf]
      %v461 = vld [vmem:[%s253 + $0xf4] sm:$0xf]
      %v462 = vld [vmem:[%s253 + $0xf8] sm:$0xf]
      %v463 = vld [vmem:[%s253 + $0xfc] sm:$0xf]
      %v528 = vunpack.c.l.b16 %v336
      %v529 = vunpack.c.h.b16 %v336
      %v530 = vunpack.c.l.b16 %v337
      %v531 = vunpack.c.h.b16 %v337
      %v532 = vunpack.c.l.b16 %v338
      %v533 = vunpack.c.h.b16 %v338
      %v534 = vunpack.c.l.b16 %v339
      %v535 = vunpack.c.h.b16 %v339
      %v536 = vunpack.c.l.b16 %v340
      %v537 = vunpack.c.h.b16 %v340
      %v538 = vunpack.c.l.b16 %v341
      %v539 = vunpack.c.h.b16 %v341
      %v540 = vunpack.c.l.b16 %v342
      %v541 = vunpack.c.h.b16 %v342
      %v542 = vunpack.c.l.b16 %v343
      %v543 = vunpack.c.h.b16 %v343
      %v544 = vunpack.c.l.b16 %v344
      %v545 = vunpack.c.h.b16 %v344
      %v546 = vunpack.c.l.b16 %v345
      %v547 = vunpack.c.h.b16 %v345
      %v548 = vunpack.c.l.b16 %v346
      %v549 = vunpack.c.h.b16 %v346
      %v550 = vunpack.c.l.b16 %v347
      %v551 = vunpack.c.h.b16 %v347
      %v552 = vunpack.c.l.b16 %v348
      %v553 = vunpack.c.h.b16 %v348
      %v554 = vunpack.c.l.b16 %v349
      %v555 = vunpack.c.h.b16 %v349
      %v556 = vunpack.c.l.b16 %v350
      %v557 = vunpack.c.h.b16 %v350
      %v558 = vunpack.c.l.b16 %v351
      %v559 = vunpack.c.h.b16 %v351
      %v560 = vunpack.c.l.b16 %v352
      %v561 = vunpack.c.h.b16 %v352
      %v562 = vunpack.c.l.b16 %v353
      %v563 = vunpack.c.h.b16 %v353
      %v564 = vunpack.c.l.b16 %v354
      %v565 = vunpack.c.h.b16 %v354
      %v566 = vunpack.c.l.b16 %v355
      %v567 = vunpack.c.h.b16 %v355
      %v568 = vunpack.c.l.b16 %v356
      %v569 = vunpack.c.h.b16 %v356
      %v570 = vunpack.c.l.b16 %v357
      %v571 = vunpack.c.h.b16 %v357
      %v572 = vunpack.c.l.b16 %v358
      %v573 = vunpack.c.h.b16 %v358
      %v574 = vunpack.c.l.b16 %v359
      %v575 = vunpack.c.h.b16 %v359
      %v576 = vunpack.c.l.b16 %v360
      %v577 = vunpack.c.h.b16 %v360
      %v578 = vunpack.c.l.b16 %v361
      %v579 = vunpack.c.h.b16 %v361
      %v580 = vunpack.c.l.b16 %v362
      %v581 = vunpack.c.h.b16 %v362
      %v582 = vunpack.c.l.b16 %v363
      %v583 = vunpack.c.h.b16 %v363
      %v584 = vunpack.c.l.b16 %v364
      %v585 = vunpack.c.h.b16 %v364
      %v586 = vunpack.c.l.b16 %v365
      %v587 = vunpack.c.h.b16 %v365
      %v588 = vunpack.c.l.b16 %v366
      %v589 = vunpack.c.h.b16 %v366
      %v590 = vunpack.c.l.b16 %v367
      %v591 = vunpack.c.h.b16 %v367
      %v592 = vunpack.c.l.b16 %v368
      %v593 = vunpack.c.h.b16 %v368
      %v594 = vunpack.c.l.b16 %v369
      %v595 = vunpack.c.h.b16 %v369
      %v596 = vunpack.c.l.b16 %v370
      %v597 = vunpack.c.h.b16 %v370
      %v598 = vunpack.c.l.b16 %v371
      %v599 = vunpack.c.h.b16 %v371
      %v600 = vunpack.c.l.b16 %v372
      %v601 = vunpack.c.h.b16 %v372
      %v602 = vunpack.c.l.b16 %v373
      %v603 = vunpack.c.h.b16 %v373
      %v604 = vunpack.c.l.b16 %v374
      %v605 = vunpack.c.h.b16 %v374
      %v606 = vunpack.c.l.b16 %v375
      %v607 = vunpack.c.h.b16 %v375
      %v608 = vunpack.c.l.b16 %v376
      %v609 = vunpack.c.h.b16 %v376
      %v610 = vunpack.c.l.b16 %v377
      %v611 = vunpack.c.h.b16 %v377
      %v612 = vunpack.c.l.b16 %v378
      %v613 = vunpack.c.h.b16 %v378
      %v614 = vunpack.c.l.b16 %v379
      %v615 = vunpack.c.h.b16 %v379
      %v616 = vunpack.c.l.b16 %v380
      %v617 = vunpack.c.h.b16 %v380
      %v618 = vunpack.c.l.b16 %v381
      %v619 = vunpack.c.h.b16 %v381
      %v620 = vunpack.c.l.b16 %v382
      %v621 = vunpack.c.h.b16 %v382
      %v622 = vunpack.c.l.b16 %v383
      %v623 = vunpack.c.h.b16 %v383
      %v624 = vunpack.c.l.b16 %v384
      %v625 = vunpack.c.h.b16 %v384
      %v626 = vunpack.c.l.b16 %v385
      %v627 = vunpack.c.h.b16 %v385
      %v628 = vunpack.c.l.b16 %v386
      %v629 = vunpack.c.h.b16 %v386
      %v630 = vunpack.c.l.b16 %v387
      %v631 = vunpack.c.h.b16 %v387
      %v632 = vunpack.c.l.b16 %v388
      %v633 = vunpack.c.h.b16 %v388
      %v634 = vunpack.c.l.b16 %v389
      %v635 = vunpack.c.h.b16 %v389
      %v636 = vunpack.c.l.b16 %v390
      %v637 = vunpack.c.h.b16 %v390
      %v638 = vunpack.c.l.b16 %v391
      %v639 = vunpack.c.h.b16 %v391
      %v640 = vunpack.c.l.b16 %v392
      %v641 = vunpack.c.h.b16 %v392
      %v642 = vunpack.c.l.b16 %v393
      %v643 = vunpack.c.h.b16 %v393
      %v644 = vunpack.c.l.b16 %v394
      %v645 = vunpack.c.h.b16 %v394
      %v646 = vunpack.c.l.b16 %v395
      %v647 = vunpack.c.h.b16 %v395
      %v648 = vunpack.c.l.b16 %v396
      %v649 = vunpack.c.h.b16 %v396
      %v650 = vunpack.c.l.b16 %v397
      %v651 = vunpack.c.h.b16 %v397
      %v652 = vunpack.c.l.b16 %v398
      %v653 = vunpack.c.h.b16 %v398
      %v654 = vunpack.c.l.b16 %v399
      %v655 = vunpack.c.h.b16 %v399
      %v656 = vpack.c.b16 %v532, %v528
      %v657 = vpack.c.b16 %v533, %v529
      %v658 = vpack.c.b16 %v534, %v530
      %v659 = vpack.c.b16 %v535, %v531
      %v660 = vpack.c.b16 %v540, %v536
      %v661 = vpack.c.b16 %v541, %v537
      %v662 = vpack.c.b16 %v542, %v538
      %v663 = vpack.c.b16 %v543, %v539
      %v664 = vpack.c.b16 %v548, %v544
      %v665 = vpack.c.b16 %v549, %v545
      %v666 = vpack.c.b16 %v550, %v546
      %v667 = vpack.c.b16 %v551, %v547
      %v668 = vpack.c.b16 %v556, %v552
      %v669 = vpack.c.b16 %v557, %v553
      %v670 = vpack.c.b16 %v558, %v554
      %v671 = vpack.c.b16 %v559, %v555
      %v672 = vpack.c.b16 %v564, %v560
      %v673 = vpack.c.b16 %v565, %v561
      %v674 = vpack.c.b16 %v566, %v562
      %v675 = vpack.c.b16 %v567, %v563
      %v676 = vpack.c.b16 %v572, %v568
      %v677 = vpack.c.b16 %v573, %v569
      %v678 = vpack.c.b16 %v574, %v570
      %v679 = vpack.c.b16 %v575, %v571
      %v680 = vpack.c.b16 %v580, %v576
      %v681 = vpack.c.b16 %v581, %v577
      %v682 = vpack.c.b16 %v582, %v578
      %v683 = vpack.c.b16 %v583, %v579
      %v684 = vpack.c.b16 %v588, %v584
      %v685 = vpack.c.b16 %v589, %v585
      %v686 = vpack.c.b16 %v590, %v586
      %v687 = vpack.c.b16 %v591, %v587
      %v688 = vpack.c.b16 %v596, %v592
      %v689 = vpack.c.b16 %v597, %v593
      %v690 = vpack.c.b16 %v598, %v594
      %v691 = vpack.c.b16 %v599, %v595
      %v692 = vpack.c.b16 %v604, %v600
      %v693 = vpack.c.b16 %v605, %v601
      %v694 = vpack.c.b16 %v606, %v602
      %v695 = vpack.c.b16 %v607, %v603
      %v696 = vpack.c.b16 %v612, %v608
      %v697 = vpack.c.b16 %v613, %v609
      %v698 = vpack.c.b16 %v614, %v610
      %v699 = vpack.c.b16 %v615, %v611
      %v700 = vpack.c.b16 %v620, %v616
      %v701 = vpack.c.b16 %v621, %v617
      %v702 = vpack.c.b16 %v622, %v618
      %v703 = vpack.c.b16 %v623, %v619
      %v704 = vpack.c.b16 %v628, %v624
      %v705 = vpack.c.b16 %v629, %v625
      %v706 = vpack.c.b16 %v630, %v626
      %v707 = vpack.c.b16 %v631, %v627
      %v708 = vpack.c.b16 %v636, %v632
      %v709 = vpack.c.b16 %v637, %v633
      %v710 = vpack.c.b16 %v638, %v634
      %v711 = vpack.c.b16 %v639, %v635
      %v712 = vpack.c.b16 %v644, %v640
      %v713 = vpack.c.b16 %v645, %v641
      %v714 = vpack.c.b16 %v646, %v642
      %v715 = vpack.c.b16 %v647, %v643
      %v716 = vpack.c.b16 %v652, %v648
      %v717 = vpack.c.b16 %v653, %v649
      %v718 = vpack.c.b16 %v654, %v650
      %v719 = vpack.c.b16 %v655, %v651
      %v848 = vunpack.c.l.b16 %v400
      %v849 = vunpack.c.l.b16 %v401
      %v850 = vunpack.c.l.b16 %v402
      %v851 = vunpack.c.l.b16 %v403
      %v852 = vunpack.c.l.b16 %v404
      %v853 = vunpack.c.l.b16 %v405
      %v854 = vunpack.c.l.b16 %v406
      %v855 = vunpack.c.l.b16 %v407
      %v856 = vunpack.c.l.b16 %v408
      %v857 = vunpack.c.l.b16 %v409
      %v858 = vunpack.c.l.b16 %v410
      %v859 = vunpack.c.l.b16 %v411
      %v860 = vunpack.c.l.b16 %v412
      %v861 = vunpack.c.l.b16 %v413
      %v862 = vunpack.c.l.b16 %v414
      %v863 = vunpack.c.l.b16 %v415
      %v864 = vunpack.c.l.b16 %v416
      %v865 = vunpack.c.l.b16 %v417
      %v866 = vunpack.c.l.b16 %v418
      %v867 = vunpack.c.l.b16 %v419
      %v868 = vunpack.c.l.b16 %v420
      %v869 = vunpack.c.l.b16 %v421
      %v870 = vunpack.c.l.b16 %v422
      %v871 = vunpack.c.l.b16 %v423
      %v872 = vunpack.c.l.b16 %v424
      %v873 = vunpack.c.l.b16 %v425
      %v874 = vunpack.c.l.b16 %v426
      %v875 = vunpack.c.l.b16 %v427
      %v876 = vunpack.c.l.b16 %v428
      %v877 = vunpack.c.l.b16 %v429
      %v878 = vunpack.c.l.b16 %v430
      %v879 = vunpack.c.l.b16 %v431
      %v880 = vunpack.c.l.b16 %v432
      %v881 = vunpack.c.l.b16 %v433
      %v882 = vunpack.c.l.b16 %v434
      %v883 = vunpack.c.l.b16 %v435
      %v884 = vunpack.c.l.b16 %v436
      %v885 = vunpack.c.l.b16 %v437
      %v886 = vunpack.c.l.b16 %v438
      %v887 = vunpack.c.l.b16 %v439
      %v888 = vunpack.c.l.b16 %v440
      %v889 = vunpack.c.l.b16 %v441
      %v890 = vunpack.c.l.b16 %v442
      %v891 = vunpack.c.l.b16 %v443
      %v892 = vunpack.c.l.b16 %v444
      %v893 = vunpack.c.l.b16 %v445
      %v894 = vunpack.c.l.b16 %v446
      %v895 = vunpack.c.l.b16 %v447
      %v896 = vunpack.c.l.b16 %v448
      %v897 = vunpack.c.l.b16 %v449
      %v898 = vunpack.c.l.b16 %v450
      %v899 = vunpack.c.l.b16 %v451
      %v900 = vunpack.c.l.b16 %v452
      %v901 = vunpack.c.l.b16 %v453
      %v902 = vunpack.c.l.b16 %v454
      %v903 = vunpack.c.l.b16 %v455
      %v904 = vunpack.c.l.b16 %v456
      %v905 = vunpack.c.l.b16 %v457
      %v906 = vunpack.c.l.b16 %v458
      %v907 = vunpack.c.l.b16 %v459
      %v908 = vunpack.c.l.b16 %v460
      %v909 = vunpack.c.l.b16 %v461
      %v910 = vunpack.c.l.b16 %v462
      %v911 = vunpack.c.l.b16 %v463
      %v912 = vpack.c.b16 %v849, %v848
      %v913 = vpack.c.b16 %v851, %v850
      %v914 = vpack.c.b16 %v853, %v852
      %v915 = vpack.c.b16 %v855, %v854
      %v916 = vpack.c.b16 %v857, %v856
      %v917 = vpack.c.b16 %v859, %v858
      %v918 = vpack.c.b16 %v861, %v860
      %v919 = vpack.c.b16 %v863, %v862
      %v920 = vpack.c.b16 %v865, %v864
      %v921 = vpack.c.b16 %v867, %v866
      %v922 = vpack.c.b16 %v869, %v868
      %v923 = vpack.c.b16 %v871, %v870
      %v924 = vpack.c.b16 %v873, %v872
      %v925 = vpack.c.b16 %v875, %v874
      %v926 = vpack.c.b16 %v877, %v876
      %v927 = vpack.c.b16 %v879, %v878
      %v928 = vpack.c.b16 %v881, %v880
      %v929 = vpack.c.b16 %v883, %v882
      %v930 = vpack.c.b16 %v885, %v884
      %v931 = vpack.c.b16 %v887, %v886
      %v932 = vpack.c.b16 %v889, %v888
      %v933 = vpack.c.b16 %v891, %v890
      %v934 = vpack.c.b16 %v893, %v892
      %v935 = vpack.c.b16 %v895, %v894
      %v936 = vpack.c.b16 %v897, %v896
      %v937 = vpack.c.b16 %v899, %v898
      %v938 = vpack.c.b16 %v901, %v900
      %v939 = vpack.c.b16 %v903, %v902
      %v940 = vpack.c.b16 %v905, %v904
      %v941 = vpack.c.b16 %v907, %v906
      %v942 = vpack.c.b16 %v909, %v908
      %v943 = vpack.c.b16 %v911, %v910
      %976 = vmatprep.subr.bf16.mxu0 0
      %977 = vmatpush1.bf16.msra.mxu0 %v919
      %978 = vmatprep.subr.bf16.mxu0 0
      %979 = vmatpush1.bf16.msra.mxu0 %v918
      %980 = vmatprep.subr.bf16.mxu0 0
      %981 = vmatpush1.bf16.msra.mxu0 %v917
      %982 = vmatprep.subr.bf16.mxu0 0
      %983 = vmatpush1.bf16.msra.mxu0 %v916
      %984 = vmatprep.subr.bf16.mxu0 0
      %985 = vmatpush1.bf16.msra.mxu0 %v915
      %986 = vmatprep.subr.bf16.mxu0 0
      %987 = vmatpush1.bf16.msra.mxu0 %v914
      %988 = vmatprep.subr.bf16.mxu0 0
      %989 = vmatpush1.bf16.msra.mxu0 %v913
      %990 = vmatprep.subr.bf16.mxu0 0
      %991 = vmatpush1.bf16.msra.mxu0 %v912
      %992 = vmatprep.subr.bf16.mxu0 0
      %993 = vmatpush2.bf16.msra.mxu0 %v927
      %994 = vmatprep.subr.bf16.mxu0 0
      %995 = vmatpush2.bf16.msra.mxu0 %v926
      %996 = vmatprep.subr.bf16.mxu0 0
      %997 = vmatpush2.bf16.msra.mxu0 %v925
      %998 = vmatprep.subr.bf16.mxu0 0
      %999 = vmatpush2.bf16.msra.mxu0 %v924
      %1000 = vmatprep.subr.bf16.mxu0 0
      %1001 = vmatpush2.bf16.msra.mxu0 %v923
      %1002 = vmatprep.subr.bf16.mxu0 0
      %1003 = vmatpush2.bf16.msra.mxu0 %v922
      %1004 = vmatprep.subr.bf16.mxu0 0
      %1005 = vmatpush2.bf16.msra.mxu0 %v921
      %1006 = vmatprep.subr.bf16.mxu0 0
      %1007 = vmatpush2.bf16.msra.mxu0 %v920
      %1008 = vmatprep.mubr.bf16.mxu0 %v657
      %1009 = vmatmul.mubr.bf16.gmra.mxu0 %v656
      %v1010 = vpop.f32.mrf.mxu0
      %v1011 = vadd.f32 0.0, %v1010
      %v1012 = vpop.f32.mrf.mxu0
      %v1013 = vpop.f32.mrf.mxu0
      %v1014 = vadd.f32 0.0, %v1013
      %v1015 = vpop.f32.mrf.mxu0
      %1016 = vmatprep.mubr.bf16.mxu0 %v661
      %1017 = vmatmul.mubr.bf16.gmra.mxu0 %v660
      %v1018 = vpop.f32.mrf.mxu0
      %v1019 = vadd.f32 0.0, %v1018
      %v1020 = vpop.f32.mrf.mxu0
      %v1021 = vpop.f32.mrf.mxu0
      %v1022 = vadd.f32 0.0, %v1021
      %v1023 = vpop.f32.mrf.mxu0
      %1024 = vmatprep.mubr.bf16.mxu0 %v665
      %1025 = vmatmul.mubr.bf16.gmra.mxu0 %v664
      %v1026 = vpop.f32.mrf.mxu0
      %v1027 = vadd.f32 0.0, %v1026
      %v1028 = vpop.f32.mrf.mxu0
      %v1029 = vpop.f32.mrf.mxu0
      %v1030 = vadd.f32 0.0, %v1029
      %v1031 = vpop.f32.mrf.mxu0
      %1032 = vmatprep.mubr.bf16.mxu0 %v669
      %1033 = vmatmul.mubr.bf16.gmra.mxu0 %v668
      %v1034 = vpop.f32.mrf.mxu0
      %v1035 = vadd.f32 0.0, %v1034
      %v1036 = vpop.f32.mrf.mxu0
      %v1037 = vpop.f32.mrf.mxu0
      %v1038 = vadd.f32 0.0, %v1037
      %v1039 = vpop.f32.mrf.mxu0
      %1040 = vmatprep.mubr.bf16.mxu0 %v673
      %1041 = vmatmul.mubr.bf16.gmra.mxu0 %v672
      %v1042 = vpop.f32.mrf.mxu0
      %v1043 = vadd.f32 0.0, %v1042
      %v1044 = vpop.f32.mrf.mxu0
      %v1045 = vpop.f32.mrf.mxu0
      %v1046 = vadd.f32 0.0, %v1045
      %v1047 = vpop.f32.mrf.mxu0
      %1048 = vmatprep.mubr.bf16.mxu0 %v677
      %1049 = vmatmul.mubr.bf16.gmra.mxu0 %v676
      %v1050 = vpop.f32.mrf.mxu0
      %v1051 = vadd.f32 0.0, %v1050
      %v1052 = vpop.f32.mrf.mxu0
      %v1053 = vpop.f32.mrf.mxu0
      %v1054 = vadd.f32 0.0, %v1053
      %v1055 = vpop.f32.mrf.mxu0
      %1056 = vmatprep.mubr.bf16.mxu0 %v681
      %1057 = vmatmul.mubr.bf16.gmra.mxu0 %v680
      %v1058 = vpop.f32.mrf.mxu0
      %v1059 = vadd.f32 0.0, %v1058
      %v1060 = vpop.f32.mrf.mxu0
      %v1061 = vpop.f32.mrf.mxu0
      %v1062 = vadd.f32 0.0, %v1061
      %v1063 = vpop.f32.mrf.mxu0
      %1064 = vmatprep.mubr.bf16.mxu0 %v685
      %1065 = vmatmul.mubr.bf16.gmra.mxu0 %v684
      %v1066 = vpop.f32.mrf.mxu0
      %v1067 = vadd.f32 0.0, %v1066
      %v1068 = vpop.f32.mrf.mxu0
      %v1069 = vpop.f32.mrf.mxu0
      %v1070 = vadd.f32 0.0, %v1069
      %v1071 = vpop.f32.mrf.mxu0
      %1072 = vmatprep.mubr.bf16.mxu0 %v689
      %1073 = vmatmul.mubr.bf16.gmra.mxu0 %v688
      %v1074 = vpop.f32.mrf.mxu0
      %v1075 = vadd.f32 0.0, %v1074
      %v1076 = vpop.f32.mrf.mxu0
      %v1077 = vpop.f32.mrf.mxu0
      %v1078 = vadd.f32 0.0, %v1077
      %v1079 = vpop.f32.mrf.mxu0
      %1080 = vmatprep.mubr.bf16.mxu0 %v693
      %1081 = vmatmul.mubr.bf16.gmra.mxu0 %v692
      %v1082 = vpop.f32.mrf.mxu0
      %v1083 = vadd.f32 0.0, %v1082
      %v1084 = vpop.f32.mrf.mxu0
      %v1085 = vpop.f32.mrf.mxu0
      %v1086 = vadd.f32 0.0, %v1085
      %v1087 = vpop.f32.mrf.mxu0
      %1088 = vmatprep.mubr.bf16.mxu0 %v697
      %1089 = vmatmul.mubr.bf16.gmra.mxu0 %v696
      %v1090 = vpop.f32.mrf.mxu0
      %v1091 = vadd.f32 0.0, %v1090
      %v1092 = vpop.f32.mrf.mxu0
      %v1093 = vpop.f32.mrf.mxu0
      %v1094 = vadd.f32 0.0, %v1093
      %v1095 = vpop.f32.mrf.mxu0
      %1096 = vmatprep.mubr.bf16.mxu0 %v701
      %1097 = vmatmul.mubr.bf16.gmra.mxu0 %v700
      %v1098 = vpop.f32.mrf.mxu0
      %v1099 = vadd.f32 0.0, %v1098
      %v1100 = vpop.f32.mrf.mxu0
      %v1101 = vpop.f32.mrf.mxu0
      %v1102 = vadd.f32 0.0, %v1101
      %v1103 = vpop.f32.mrf.mxu0
      %1104 = vmatprep.mubr.bf16.mxu0 %v705
      %1105 = vmatmul.mubr.bf16.gmra.mxu0 %v704
      %v1106 = vpop.f32.mrf.mxu0
      %v1107 = vadd.f32 0.0, %v1106
      %v1108 = vpop.f32.mrf.mxu0
      %v1109 = vpop.f32.mrf.mxu0
      %v1110 = vadd.f32 0.0, %v1109
      %v1111 = vpop.f32.mrf.mxu0
      %1112 = vmatprep.mubr.bf16.mxu0 %v709
      %1113 = vmatmul.mubr.bf16.gmra.mxu0 %v708
      %v1114 = vpop.f32.mrf.mxu0
      %v1115 = vadd.f32 0.0, %v1114
      %v1116 = vpop.f32.mrf.mxu0
      %v1117 = vpop.f32.mrf.mxu0
      %v1118 = vadd.f32 0.0, %v1117
      %v1119 = vpop.f32.mrf.mxu0
      %1120 = vmatprep.mubr.bf16.mxu0 %v713
      %1121 = vmatmul.mubr.bf16.gmra.mxu0 %v712
      %v1122 = vpop.f32.mrf.mxu0
      %v1123 = vadd.f32 0.0, %v1122
      %v1124 = vpop.f32.mrf.mxu0
      %v1125 = vpop.f32.mrf.mxu0
      %v1126 = vadd.f32 0.0, %v1125
      %v1127 = vpop.f32.mrf.mxu0
      %1128 = vmatprep.mubr.bf16.mxu0 %v717
      %1129 = vmatmul.mubr.bf16.gmra.mxu0 %v716
      %v1130 = vpop.f32.mrf.mxu0
      %v1131 = vadd.f32 0.0, %v1130
      %v1132 = vpop.f32.mrf.mxu0
      %v1133 = vpop.f32.mrf.mxu0
      %v1134 = vadd.f32 0.0, %v1133
      %v1135 = vpop.f32.mrf.mxu0
      %1136 = vdwg.mxu0
      %1137 = vmatprep.subr.bf16.mxu0 0
      %1138 = vmatpush1.bf16.msra.mxu0 %v935
      %1139 = vmatprep.subr.bf16.mxu0 0
      %1140 = vmatpush1.bf16.msra.mxu0 %v934
      %1141 = vmatprep.subr.bf16.mxu0 0
      %1142 = vmatpush1.bf16.msra.mxu0 %v933
      %1143 = vmatprep.subr.bf16.mxu0 0
      %1144 = vmatpush1.bf16.msra.mxu0 %v932
      %1145 = vmatprep.subr.bf16.mxu0 0
      %1146 = vmatpush1.bf16.msra.mxu0 %v931
      %1147 = vmatprep.subr.bf16.mxu0 0
      %1148 = vmatpush1.bf16.msra.mxu0 %v930
      %1149 = vmatprep.subr.bf16.mxu0 0
      %1150 = vmatpush1.bf16.msra.mxu0 %v929
      %1151 = vmatprep.subr.bf16.mxu0 0
      %1152 = vmatpush1.bf16.msra.mxu0 %v928
      %1153 = vmatprep.subr.bf16.mxu0 0
      %1154 = vmatpush2.bf16.msra.mxu0 %v943
      %1155 = vmatprep.subr.bf16.mxu0 0
      %1156 = vmatpush2.bf16.msra.mxu0 %v942
      %1157 = vmatprep.subr.bf16.mxu0 0
      %1158 = vmatpush2.bf16.msra.mxu0 %v941
      %1159 = vmatprep.subr.bf16.mxu0 0
      %1160 = vmatpush2.bf16.msra.mxu0 %v940
      %1161 = vmatprep.subr.bf16.mxu0 0
      %1162 = vmatpush2.bf16.msra.mxu0 %v939
      %1163 = vmatprep.subr.bf16.mxu0 0
      %1164 = vmatpush2.bf16.msra.mxu0 %v938
      %1165 = vmatprep.subr.bf16.mxu0 0
      %1166 = vmatpush2.bf16.msra.mxu0 %v937
      %1167 = vmatprep.subr.bf16.mxu0 0
      %1168 = vmatpush2.bf16.msra.mxu0 %v936
      %1169 = vmatprep.mubr.bf16.mxu0 %v659
      %1170 = vmatmul.mubr.bf16.gmra.mxu0 %v658
      %v1171 = vpop.f32.mrf.mxu0
      %v1172 = vadd.f32 %v1011, %v1171
      %v1173 = vpop.f32.mrf.mxu0
      %v1174 = vpop.f32.mrf.mxu0
      %v1175 = vadd.f32 %v1014, %v1174
      %v1176 = vpop.f32.mrf.mxu0
      %1177 = vmatprep.mubr.bf16.mxu0 %v663
      %1178 = vmatmul.mubr.bf16.gmra.mxu0 %v662
      %v1179 = vpop.f32.mrf.mxu0
      %v1180 = vadd.f32 %v1019, %v1179
      %v1181 = vpop.f32.mrf.mxu0
      %v1182 = vpop.f32.mrf.mxu0
      %v1183 = vadd.f32 %v1022, %v1182
      %v1184 = vpop.f32.mrf.mxu0
      %1185 = vmatprep.mubr.bf16.mxu0 %v667
      %1186 = vmatmul.mubr.bf16.gmra.mxu0 %v666
      %v1187 = vpop.f32.mrf.mxu0
      %v1188 = vadd.f32 %v1027, %v1187
      %v1189 = vpop.f32.mrf.mxu0
      %v1190 = vpop.f32.mrf.mxu0
      %v1191 = vadd.f32 %v1030, %v1190
      %v1192 = vpop.f32.mrf.mxu0
      %1193 = vmatprep.mubr.bf16.mxu0 %v671
      %1194 = vmatmul.mubr.bf16.gmra.mxu0 %v670
      %v1195 = vpop.f32.mrf.mxu0
      %v1196 = vadd.f32 %v1035, %v1195
      %v1197 = vpop.f32.mrf.mxu0
      %v1198 = vpop.f32.mrf.mxu0
      %v1199 = vadd.f32 %v1038, %v1198
      %v1200 = vpop.f32.mrf.mxu0
      %1201 = vmatprep.mubr.bf16.mxu0 %v675
      %1202 = vmatmul.mubr.bf16.gmra.mxu0 %v674
      %v1203 = vpop.f32.mrf.mxu0
      %v1204 = vadd.f32 %v1043, %v1203
      %v1205 = vpop.f32.mrf.mxu0
      %v1206 = vpop.f32.mrf.mxu0
      %v1207 = vadd.f32 %v1046, %v1206
      %v1208 = vpop.f32.mrf.mxu0
      %1209 = vmatprep.mubr.bf16.mxu0 %v679
      %1210 = vmatmul.mubr.bf16.gmra.mxu0 %v678
      %v1211 = vpop.f32.mrf.mxu0
      %v1212 = vadd.f32 %v1051, %v1211
      %v1213 = vpop.f32.mrf.mxu0
      %v1214 = vpop.f32.mrf.mxu0
      %v1215 = vadd.f32 %v1054, %v1214
      %v1216 = vpop.f32.mrf.mxu0
      %1217 = vmatprep.mubr.bf16.mxu0 %v683
      %1218 = vmatmul.mubr.bf16.gmra.mxu0 %v682
      %v1219 = vpop.f32.mrf.mxu0
      %v1220 = vadd.f32 %v1059, %v1219
      %v1221 = vpop.f32.mrf.mxu0
      %v1222 = vpop.f32.mrf.mxu0
      %v1223 = vadd.f32 %v1062, %v1222
      %v1224 = vpop.f32.mrf.mxu0
      %1225 = vmatprep.mubr.bf16.mxu0 %v687
      %1226 = vmatmul.mubr.bf16.gmra.mxu0 %v686
      %v1227 = vpop.f32.mrf.mxu0
      %v1228 = vadd.f32 %v1067, %v1227
      %v1229 = vpop.f32.mrf.mxu0
      %v1230 = vpop.f32.mrf.mxu0
      %v1231 = vadd.f32 %v1070, %v1230
      %v1232 = vpop.f32.mrf.mxu0
      %1233 = vmatprep.mubr.bf16.mxu0 %v691
      %1234 = vmatmul.mubr.bf16.gmra.mxu0 %v690
      %v1235 = vpop.f32.mrf.mxu0
      %v1236 = vadd.f32 %v1075, %v1235
      %v1237 = vpop.f32.mrf.mxu0
      %v1238 = vpop.f32.mrf.mxu0
      %v1239 = vadd.f32 %v1078, %v1238
      %v1240 = vpop.f32.mrf.mxu0
      %1241 = vmatprep.mubr.bf16.mxu0 %v695
      %1242 = vmatmul.mubr.bf16.gmra.mxu0 %v694
      %v1243 = vpop.f32.mrf.mxu0
      %v1244 = vadd.f32 %v1083, %v1243
      %v1245 = vpop.f32.mrf.mxu0
      %v1246 = vpop.f32.mrf.mxu0
      %v1247 = vadd.f32 %v1086, %v1246
      %v1248 = vpop.f32.mrf.mxu0
      %1249 = vmatprep.mubr.bf16.mxu0 %v699
      %1250 = vmatmul.mubr.bf16.gmra.mxu0 %v698
      %v1251 = vpop.f32.mrf.mxu0
      %v1252 = vadd.f32 %v1091, %v1251
      %v1253 = vpop.f32.mrf.mxu0
      %v1254 = vpop.f32.mrf.mxu0
      %v1255 = vadd.f32 %v1094, %v1254
      %v1256 = vpop.f32.mrf.mxu0
      %1257 = vmatprep.mubr.bf16.mxu0 %v703
      %1258 = vmatmul.mubr.bf16.gmra.mxu0 %v702
      %v1259 = vpop.f32.mrf.mxu0
      %v1260 = vadd.f32 %v1099, %v1259
      %v1261 = vpop.f32.mrf.mxu0
      %v1262 = vpop.f32.mrf.mxu0
      %v1263 = vadd.f32 %v1102, %v1262
      %v1264 = vpop.f32.mrf.mxu0
      %1265 = vmatprep.mubr.bf16.mxu0 %v707
      %1266 = vmatmul.mubr.bf16.gmra.mxu0 %v706
      %v1267 = vpop.f32.mrf.mxu0
      %v1268 = vadd.f32 %v1107, %v1267
      %v1269 = vpop.f32.mrf.mxu0
      %v1270 = vpop.f32.mrf.mxu0
      %v1271 = vadd.f32 %v1110, %v1270
      %v1272 = vpop.f32.mrf.mxu0
      %1273 = vmatprep.mubr.bf16.mxu0 %v711
      %1274 = vmatmul.mubr.bf16.gmra.mxu0 %v710
      %v1275 = vpop.f32.mrf.mxu0
      %v1276 = vadd.f32 %v1115, %v1275
      %v1277 = vpop.f32.mrf.mxu0
      %v1278 = vpop.f32.mrf.mxu0
      %v1279 = vadd.f32 %v1118, %v1278
      %v1280 = vpop.f32.mrf.mxu0
      %1281 = vmatprep.mubr.bf16.mxu0 %v715
      %1282 = vmatmul.mubr.bf16.gmra.mxu0 %v714
      %v1283 = vpop.f32.mrf.mxu0
      %v1284 = vadd.f32 %v1123, %v1283
      %v1285 = vpop.f32.mrf.mxu0
      %v1286 = vpop.f32.mrf.mxu0
      %v1287 = vadd.f32 %v1126, %v1286
      %v1288 = vpop.f32.mrf.mxu0
      %1289 = vmatprep.mubr.bf16.mxu0 %v719
      %1290 = vmatmul.mubr.bf16.gmra.mxu0 %v718
      %v1291 = vpop.f32.mrf.mxu0
      %v1292 = vadd.f32 %v1131, %v1291
      %v1293 = vpop.f32.mrf.mxu0
      %v1294 = vpop.f32.mrf.mxu0
      %v1295 = vadd.f32 %v1134, %v1294
      %v1296 = vpop.f32.mrf.mxu0
      %1297 = vdwg.mxu0
      %v1298 = vadd.f32 %v304, %v1172
      %v1299 = vadd.f32 %v305, %v1175
      %v1300 = vadd.f32 %v306, %v1180
      %v1301 = vadd.f32 %v307, %v1183
      %v1302 = vadd.f32 %v308, %v1188
      %v1303 = vadd.f32 %v309, %v1191
      %v1304 = vadd.f32 %v310, %v1196
      %v1305 = vadd.f32 %v311, %v1199
      %v1306 = vadd.f32 %v312, %v1204
      %v1307 = vadd.f32 %v313, %v1207
      %v1308 = vadd.f32 %v314, %v1212
      %v1309 = vadd.f32 %v315, %v1215
      %v1310 = vadd.f32 %v316, %v1220
      %v1311 = vadd.f32 %v317, %v1223
      %v1312 = vadd.f32 %v318, %v1228
      %v1313 = vadd.f32 %v319, %v1231
      %v1314 = vadd.f32 %v320, %v1236
      %v1315 = vadd.f32 %v321, %v1239
      %v1316 = vadd.f32 %v322, %v1244
      %v1317 = vadd.f32 %v323, %v1247
      %v1318 = vadd.f32 %v324, %v1252
      %v1319 = vadd.f32 %v325, %v1255
      %v1320 = vadd.f32 %v326, %v1260
      %v1321 = vadd.f32 %v327, %v1263
      %v1322 = vadd.f32 %v328, %v1268
      %v1323 = vadd.f32 %v329, %v1271
      %v1324 = vadd.f32 %v330, %v1276
      %v1325 = vadd.f32 %v331, %v1279
      %v1326 = vadd.f32 %v332, %v1284
      %v1327 = vadd.f32 %v333, %v1287
      %v1328 = vadd.f32 %v334, %v1292
      %v1329 = vadd.f32 %v335, %v1295
      %1330 = vst [vmem:[#allocation2] sm:$0xff] %v1298
      %1331 = vst [vmem:[#allocation2 + $0x8] sm:$0xff] %v1299
      %1332 = vst [vmem:[#allocation2 + $0x10] sm:$0xff] %v1300
      %1333 = vst [vmem:[#allocation2 + $0x18] sm:$0xff] %v1301
      %1334 = vst [vmem:[#allocation2 + $0x20] sm:$0xff] %v1302
      %1335 = vst [vmem:[#allocation2 + $0x28] sm:$0xff] %v1303
      %1336 = vst [vmem:[#allocation2 + $0x30] sm:$0xff] %v1304
      %1337 = vst [vmem:[#allocation2 + $0x38] sm:$0xff] %v1305
      %1338 = vst [vmem:[#allocation2 + $0x40] sm:$0xff] %v1306
      %1339 = vst [vmem:[#allocation2 + $0x48] sm:$0xff] %v1307
      %1340 = vst [vmem:[#allocation2 + $0x50] sm:$0xff] %v1308
      %1341 = vst [vmem:[#allocation2 + $0x58] sm:$0xff] %v1309
      %1342 = vst [vmem:[#allocation2 + $0x60] sm:$0xff] %v1310
      %1343 = vst [vmem:[#allocation2 + $0x68] sm:$0xff] %v1311
      %1344 = vst [vmem:[#allocation2 + $0x70] sm:$0xff] %v1312
      %1345 = vst [vmem:[#allocation2 + $0x78] sm:$0xff] %v1313
      %1346 = vst [vmem:[#allocation2 + $0x80] sm:$0xff] %v1314
      %1347 = vst [vmem:[#allocation2 + $0x88] sm:$0xff] %v1315
      %1348 = vst [vmem:[#allocation2 + $0x90] sm:$0xff] %v1316
      %1349 = vst [vmem:[#allocation2 + $0x98] sm:$0xff] %v1317
      %1350 = vst [vmem:[#allocation2 + $0xa0] sm:$0xff] %v1318
      %1351 = vst [vmem:[#allocation2 + $0xa8] sm:$0xff] %v1319
      %1352 = vst [vmem:[#allocation2 + $0xb0] sm:$0xff] %v1320
      %1353 = vst [vmem:[#allocation2 + $0xb8] sm:$0xff] %v1321
      %1354 = vst [vmem:[#allocation2 + $0xc0] sm:$0xff] %v1322
      %1355 = vst [vmem:[#allocation2 + $0xc8] sm:$0xff] %v1323
      %1356 = vst [vmem:[#allocation2 + $0xd0] sm:$0xff] %v1324
      %1357 = vst [vmem:[#allocation2 + $0xd8] sm:$0xff] %v1325
      %1358 = vst [vmem:[#allocation2 + $0xe0] sm:$0xff] %v1326
      %1359 = vst [vmem:[#allocation2 + $0xe8] sm:$0xff] %v1327
      %1360 = vst [vmem:[#allocation2 + $0xf0] sm:$0xff] %v1328
      %1361 = vst [vmem:[#allocation2 + $0xf8] sm:$0xff] %v1329
      // Predicated region
      $region37: #{_lambda_.55} parent=31 // pred_check
        %p1362 = pneg %p268
      $region38: #{_lambda_.55} parent=31 // pred_check_branch
        %1364 = sbr.rel (%p1362) target = $region40
      $region39: #{_lambda_.55} parent=31 // pred_region
        %v1365 = vld [vmem:[#allocation2] sm:$0xff]
        %v1366 = vld [vmem:[#allocation2 + $0x8] sm:$0xff]
        %v1367 = vld [vmem:[#allocation2 + $0x10] sm:$0xff]
        %v1368 = vld [vmem:[#allocation2 + $0x18] sm:$0xff]
        %v1369 = vld [vmem:[#allocation2 + $0x20] sm:$0xff]
        %v1370 = vld [vmem:[#allocation2 + $0x28] sm:$0xff]
        %v1371 = vld [vmem:[#allocation2 + $0x30] sm:$0xff]
        %v1372 = vld [vmem:[#allocation2 + $0x38] sm:$0xff]
        %v1373 = vld [vmem:[#allocation2 + $0x40] sm:$0xff]
        %v1374 = vld [vmem:[#allocation2 + $0x48] sm:$0xff]
        %v1375 = vld [vmem:[#allocation2 + $0x50] sm:$0xff]
        %v1376 = vld [vmem:[#allocation2 + $0x58] sm:$0xff]
        %v1377 = vld [vmem:[#allocation2 + $0x60] sm:$0xff]
        %v1378 = vld [vmem:[#allocation2 + $0x68] sm:$0xff]
        %v1379 = vld [vmem:[#allocation2 + $0x70] sm:$0xff]
        %v1380 = vld [vmem:[#allocation2 + $0x78] sm:$0xff]
        %v1381 = vld [vmem:[#allocation2 + $0x80] sm:$0xff]
        %v1382 = vld [vmem:[#allocation2 + $0x88] sm:$0xff]
        %v1383 = vld [vmem:[#allocation2 + $0x90] sm:$0xff]
        %v1384 = vld [vmem:[#allocation2 + $0x98] sm:$0xff]
        %v1385 = vld [vmem:[#allocation2 + $0xa0] sm:$0xff]
        %v1386 = vld [vmem:[#allocation2 + $0xa8] sm:$0xff]
        %v1387 = vld [vmem:[#allocation2 + $0xb0] sm:$0xff]
        %v1388 = vld [vmem:[#allocation2 + $0xb8] sm:$0xff]
        %v1389 = vld [vmem:[#allocation2 + $0xc0] sm:$0xff]
        %v1390 = vld [vmem:[#allocation2 + $0xc8] sm:$0xff]
        %v1391 = vld [vmem:[#allocation2 + $0xd0] sm:$0xff]
        %v1392 = vld [vmem:[#allocation2 + $0xd8] sm:$0xff]
        %v1393 = vld [vmem:[#allocation2 + $0xe0] sm:$0xff]
        %v1394 = vld [vmem:[#allocation2 + $0xe8] sm:$0xff]
        %v1395 = vld [vmem:[#allocation2 + $0xf0] sm:$0xff]
        %v1396 = vld [vmem:[#allocation2 + $0xf8] sm:$0xff]
        %v1397 = vld [vmem:[%s257] sm:$0x1]
        %v1399 = vlaneseq
        %v1400 = vshrl.u32 %v1399, 7
        %v1401 = vsub.s32 0, %v1400
        %v1402 = vrot.slane %v1397, %v1401
        %v1404 = vadd.f32 %v1365, %v1402
        %v1405 = vadd.f32 %v1366, %v1402
        %v1406 = vadd.f32 %v1367, %v1402
        %v1407 = vadd.f32 %v1368, %v1402
        %v1408 = vadd.f32 %v1369, %v1402
        %v1409 = vadd.f32 %v1370, %v1402
        %v1410 = vadd.f32 %v1371, %v1402
        %v1411 = vadd.f32 %v1372, %v1402
        %v1412 = vadd.f32 %v1373, %v1402
        %v1413 = vadd.f32 %v1374, %v1402
        %v1414 = vadd.f32 %v1375, %v1402
        %v1415 = vadd.f32 %v1376, %v1402
        %v1416 = vadd.f32 %v1377, %v1402
        %v1417 = vadd.f32 %v1378, %v1402
        %v1418 = vadd.f32 %v1379, %v1402
        %v1419 = vadd.f32 %v1380, %v1402
        %v1420 = vadd.f32 %v1381, %v1402
        %v1421 = vadd.f32 %v1382, %v1402
        %v1422 = vadd.f32 %v1383, %v1402
        %v1423 = vadd.f32 %v1384, %v1402
        %v1424 = vadd.f32 %v1385, %v1402
        %v1425 = vadd.f32 %v1386, %v1402
        %v1426 = vadd.f32 %v1387, %v1402
        %v1427 = vadd.f32 %v1388, %v1402
        %v1428 = vadd.f32 %v1389, %v1402
        %v1429 = vadd.f32 %v1390, %v1402
        %v1430 = vadd.f32 %v1391, %v1402
        %v1431 = vadd.f32 %v1392, %v1402
        %v1432 = vadd.f32 %v1393, %v1402
        %v1433 = vadd.f32 %v1394, %v1402
        %v1434 = vadd.f32 %v1395, %v1402
        %v1435 = vadd.f32 %v1396, %v1402
        %v1436 = vtanh.pop %v1404
        %v1437 = vtanh.pop %v1405
        %v1438 = vtanh.pop %v1406
        %v1439 = vtanh.pop %v1407
        %v1440 = vtanh.pop %v1408
        %v1441 = vtanh.pop %v1409
        %v1442 = vtanh.pop %v1410
        %v1443 = vtanh.pop %v1411
        %v1444 = vtanh.pop %v1412
        %v1445 = vtanh.pop %v1413
        %v1446 = vtanh.pop %v1414
        %v1447 = vtanh.pop %v1415
        %v1448 = vtanh.pop %v1416
        %v1449 = vtanh.pop %v1417
        %v1450 = vtanh.pop %v1418
        %v1451 = vtanh.pop %v1419
        %v1452 = vtanh.pop %v1420
        %v1453 = vtanh.pop %v1421
        %v1454 = vtanh.pop %v1422
        %v1455 = vtanh.pop %v1423
        %v1456 = vtanh.pop %v1424
        %v1457 = vtanh.pop %v1425
        %v1458 = vtanh.pop %v1426
        %v1459 = vtanh.pop %v1427
        %v1460 = vtanh.pop %v1428
        %v1461 = vtanh.pop %v1429
        %v1462 = vtanh.pop %v1430
        %v1463 = vtanh.pop %v1431
        %v1464 = vtanh.pop %v1432
        %v1465 = vtanh.pop %v1433
        %v1466 = vtanh.pop %v1434
        %v1467 = vtanh.pop %v1435
        %1468 = vst [vmem:[%s265] sm:$0xff] %v1436
        %1469 = vst [vmem:[%s265 + $0x8] sm:$0xff] %v1437
        %1470 = vst [vmem:[%s265 + $0x10] sm:$0xff] %v1438
        %1471 = vst [vmem:[%s265 + $0x18] sm:$0xff] %v1439
        %1472 = vst [vmem:[%s265 + $0x20] sm:$0xff] %v1440
        %1473 = vst [vmem:[%s265 + $0x28] sm:$0xff] %v1441
        %1474 = vst [vmem:[%s265 + $0x30] sm:$0xff] %v1442
        %1475 = vst [vmem:[%s265 + $0x38] sm:$0xff] %v1443
        %1476 = vst [vmem:[%s265 + $0x40] sm:$0xff] %v1444
        %1477 = vst [vmem:[%s265 + $0x48] sm:$0xff] %v1445
        %1478 = vst [vmem:[%s265 + $0x50] sm:$0xff] %v1446
        %1479 = vst [vmem:[%s265 + $0x58] sm:$0xff] %v1447
        %1480 = vst [vmem:[%s265 + $0x60] sm:$0xff] %v1448
        %1481 = vst [vmem:[%s265 + $0x68] sm:$0xff] %v1449
        %1482 = vst [vmem:[%s265 + $0x70] sm:$0xff] %v1450
        %1483 = vst [vmem:[%s265 + $0x78] sm:$0xff] %v1451
        %1484 = vst [vmem:[%s265 + $0x80] sm:$0xff] %v1452
        %1485 = vst [vmem:[%s265 + $0x88] sm:$0xff] %v1453
        %1486 = vst [vmem:[%s265 + $0x90] sm:$0xff] %v1454
        %1487 = vst [vmem:[%s265 + $0x98] sm:$0xff] %v1455
        %1488 = vst [vmem:[%s265 + $0xa0] sm:$0xff] %v1456
        %1489 = vst [vmem:[%s265 + $0xa8] sm:$0xff] %v1457
        %1490 = vst [vmem:[%s265 + $0xb0] sm:$0xff] %v1458
        %1491 = vst [vmem:[%s265 + $0xb8] sm:$0xff] %v1459
        %1492 = vst [vmem:[%s265 + $0xc0] sm:$0xff] %v1460
        %1493 = vst [vmem:[%s265 + $0xc8] sm:$0xff] %v1461
        %1494 = vst [vmem:[%s265 + $0xd0] sm:$0xff] %v1462
        %1495 = vst [vmem:[%s265 + $0xd8] sm:$0xff] %v1463
        %1496 = vst [vmem:[%s265 + $0xe0] sm:$0xff] %v1464
        %1497 = vst [vmem:[%s265 + $0xe8] sm:$0xff] %v1465
        %1498 = vst [vmem:[%s265 + $0xf0] sm:$0xff] %v1466
        %1499 = vst [vmem:[%s265 + $0xf8] sm:$0xff] %v1467
      $region40: #{_lambda_.55} parent=31 // pred_fallthru
        _
      %s1500 = smul.u32 32, %s19
      %p1501 = scmp.lt.s32.totalorder %s1500, 63
      %s1502 = scalar_select %p1501, %s1500, 63
      %p1503 = scmp.lt.s32.totalorder %s20, 0
      %s1504 = scalar_select %p1503, %s20, 0
      %s1505 = sadd.s32 %s1504, %s1502
      %s1506 = smul.addr %s1505, 8
      %s1507 = scalar_lea.vmem %s3, %s1506
      // Predicated region
      $region41: #{_lambda_.55} parent=31 // pred_check
        %p1508 = pneg %p135
      $region42: #{_lambda_.55} parent=31 // pred_check_branch
        %1510 = sbr.rel (%p1508) target = $region44
      $region43: #{_lambda_.55} parent=31 // pred_region
        %s1511 = smul.u32 32, %s19
      $region44: #{_lambda_.55} parent=31 // pred_fallthru
        _
    $region32: #{_lambda_.55} parent=5 // pred_fallthru
      _
    %p1512 = scmp.le.s32.totalorder 2, %s9
    // Predicated region
    $region45: #{_lambda_.55} parent=5 // pred_check
      %p1513 = pneg %p1512
    $region46: #{_lambda_.55} parent=5 // pred_check_branch
      %1515 = sbr.rel (%p1513) target = $region48
    $region47: #{_lambda_.55} parent=5 // pred_region
      %s1516 = ssub.s32 %s9, 2
      // Predicated region
      $region49: #{_lambda_.55} parent=47 // pred_check
        %p1517 = pneg %p141
      $region50: #{_lambda_.55} parent=47 // pred_check_branch
        %1519 = sbr.rel (%p1517) target = $region52
      $region51: #{_lambda_.55} parent=47 // pred_region
        %s1520 = smul.u32 32, %s22
        %p1521 = scmp.lt.s32.totalorder %s1520, 63
        %s1522 = scalar_select %p1521, %s1520, 63
        %p1523 = scmp.lt.s32.totalorder %s23, 0
        %s1524 = scalar_select %p1523, %s23, 0
        %s1525 = sadd.s32 %s1524, %s1522
        %s1526 = smul.addr %s1525, 8
        %s1527 = scalar_lea.vmem %s3, %s1526
      $region52: #{_lambda_.55} parent=47 // pred_fallthru
        _
    $region48: #{_lambda_.55} parent=5 // pred_fallthru
      _
  $region6: #{_lambda_.55} parent=0 // loop_footer
    %s13 = sadd.s32 1, %s9
  $region7: #{_lambda_.55} parent=0 // loop_footer_branch
    %8 = sbr.rel target = $region3
  $region8: #{_lambda_.55} parent=0 // loop_exit
    _

</llo_original>
